<compile_context>
chip_gen: v7x
topology: tpu7x:2x2x1
jax: 0.10.0
libtpu: 0.0.40
codegen_flags: <defaults>
</compile_context>

<pallas_src>
import functools

import jax
import jax.numpy as jnp
import numpy as np
from jax.experimental import pallas as pl
from jax.experimental.pallas import tpu as pltpu

EPS = 1e-5


# --------------------------------------------------------------------------- #
# Kernel 1: per-channel batch statistics -> fused affine (scale, shift) for bn1
# --------------------------------------------------------------------------- #
def _stats_kernel(x_ref, g_ref, b_ref, scale_ref, shift_ref, s_ref, q_ref, *, inv_m):
    @pl.when(pl.program_id(0) == 0)
    def _init():
        s_ref[...] = jnp.zeros_like(s_ref)
        q_ref[...] = jnp.zeros_like(q_ref)

    x = x_ref[...]                                   # (TM, C) f32
    s_ref[...] += jnp.sum(x, axis=0, keepdims=True)
    q_ref[...] += jnp.sum(x * x, axis=0, keepdims=True)

    @pl.when(pl.program_id(0) == pl.num_programs(0) - 1)
    def _finalize():
        mean = s_ref[...] * inv_m
        # TODO(synk): E[x^2]-mean^2 can cancel for large-mean channels; a shifted
        # or Welford accumulation would be safer for extreme activations.
        var = q_ref[...] * inv_m - mean * mean       # biased variance (PyTorch norm)
        scl = g_ref[...] * jax.lax.rsqrt(var + EPS)
        scale_ref[...] = scl
        shift_ref[...] = b_ref[...] - mean * scl


def _channel_stats_affine(x2d, gamma, beta):
    """x2d: (M, C) f32. Returns per-channel (scale, shift), each (1, C) f32."""
    M, C = x2d.shape
    tm_cap = max(1024, (2 * 1024 * 1024) // (4 * C))     # keep each tile <= ~2 MiB
    tm_cap = (tm_cap // 8) * 8
    TM = M if M <= tm_cap else tm_cap
    Mp = -(-M // TM) * TM
    if Mp != M:
        x2d = jnp.pad(x2d, ((0, Mp - M), (0, 0)))        # zero rows: do not bias sums
    kern = functools.partial(_stats_kernel, inv_m=1.0 / M)
    scale, shift = pl.pallas_call(
        kern,
        out_shape=(jax.ShapeDtypeStruct((1, C), jnp.float32),
                   jax.ShapeDtypeStruct((1, C), jnp.float32)),
        grid=(Mp // TM,),
        in_specs=[pl.BlockSpec((TM, C), lambda i: (i, 0)),
                  pl.BlockSpec((1, C), lambda i: (0, 0)),
                  pl.BlockSpec((1, C), lambda i: (0, 0))],
        out_specs=(pl.BlockSpec((1, C), lambda i: (0, 0)),
                   pl.BlockSpec((1, C), lambda i: (0, 0))),
        scratch_shapes=[pltpu.VMEM((1, C), jnp.float32),
                        pltpu.VMEM((1, C), jnp.float32)],
        compiler_params=pltpu.CompilerParams(dimension_semantics=("arbitrary",)),
    )(x2d,
      gamma.reshape(1, C).astype(jnp.float32),
      beta.reshape(1, C).astype(jnp.float32))
    return scale, shift


# --------------------------------------------------------------------------- #
# Kernel 2: fused BN-affine + ReLU + 3x3 conv (pad=1, stride s) as ONE matmul
#           [+ 1x1 downsample shortcut] [+ residual add] [+ bn2 stats epilogue]
# --------------------------------------------------------------------------- #
def _make_conv_kernel(*, s, H, W, Ho, Wo, C, Co, bt, with_ds, with_res, emit_stats):
    nph = s * s
    Mo = Ho * Wo

    def kernel(*refs):
        i = 0
        if s > 1:
            ph = refs[i:i + nph]; i += nph
            mask_ref = refs[i]; i += 1
        else:
            x_ref = refs[i]; i += 1
        sc_ref = refs[i]; i += 1
        sh_ref = refs[i]; i += 1
        w_ref = refs[i]; i += 1
        if with_ds:
            wds_ref = refs[i]; i += 1
        if with_res:
            res_ref = refs[i]; i += 1
        out_ref = refs[i]; i += 1
        if with_ds:
            scut_ref = refs[i]; i += 1
        if emit_stats:
            sum_ref = refs[i]; i += 1
            sq_ref = refs[i]; i += 1
        if s == 1:
            pad_ref = refs[i]; i += 1

        scale = sc_ref[...].reshape(1, 1, 1, C)
        shift = sh_ref[...].reshape(1, 1, 1, C)

        windows = []
        if s > 1:
            # BN-affine + ReLU once per phase, zero the conv-pad positions with the
            # precomputed grid-invariant mask, cast to bf16 exactly once.
            acts = []
            for p in range(nph):
                a = jnp.maximum(ph[p][...] * scale + shift, 0.0) * mask_ref[p]
                acts.append(a.astype(jnp.bfloat16))
            for dh in range(3):
                for dw in range(3):
                    a = acts[(dh % s) * s + (dw % s)]
                    oh, ow = dh // s, dw // s
                    windows.append(a[:, oh:oh + Ho, ow:ow + Wo, :])
        else:
            # stride 1: handle the +1 halo with a zero-initialized VMEM scratch
            # (no wrapper-side pad copy through HBM).
            a = jnp.maximum(x_ref[...] * scale + shift, 0.0).astype(jnp.bfloat16)
            pad_ref[...] = jnp.zeros_like(pad_ref)
            pad_ref[:, 1:H + 1, 1:W + 1, :] = a
            for dh in range(3):
                for dw in range(3):
                    windows.append(pad_ref[:, dh:dh + Ho, dw:dw + Wo, :])

        # im2col slab built once in VMEM -> a single MXU matmul with K = 9*C.
        slab = jnp.concatenate(windows, axis=-1).reshape(bt * Mo, 9 * C)
        acc = jnp.dot(slab, w_ref[...], preferred_element_type=jnp.float32)

        if emit_stats:
            # fused bn2 statistics epilogue (on the pre-residual conv output)
            sum_ref[...] = jnp.sum(acc, axis=0, keepdims=True).reshape(1, 1, Co)
            sq_ref[...] = jnp.sum(acc * acc, axis=0, keepdims=True).reshape(1, 1, Co)

        if with_ds:
            # 1x1 stride-s downsample of relu(bn1(x)) == the centre tap window.
            ctr = windows[4].reshape(bt * Mo, C)
            cds = wds_ref.shape[-1]
            scut_ref[...] = jnp.dot(ctr, wds_ref[...],
                                    preferred_element_type=jnp.float32
                                    ).reshape(bt, Mo, cds)

        if with_res:
            acc = acc + res_ref[...].reshape(bt * Mo, Co)

        out_ref[...] = acc.reshape(bt, Mo, Co)

    return kernel


def _fused_bnrelu_conv3x3(x_nhwc, scale, shift, w_oihw, *, stride,
                          w_ds_oihw=None, residual=None, emit_stats=False):
    N, H, W, C = x_nhwc.shape
    s = int(stride)
    Ho = (H - 1) // s + 1
    Wo = (W - 1) // s + 1
    Mo = Ho * Wo
    Co = w_oihw.shape[0]
    with_ds = w_ds_oihw is not None
    with_res = residual is not None

    # taps-major weight slab (9*C, Co); row order matches the window concat order.
    w_slab = jnp.transpose(w_oihw, (2, 3, 1, 0)).reshape(9 * C, Co).astype(jnp.bfloat16)

    # Batch tile: more rows per MXU matmul while keeping >=2 grid steps (megacore)
    # and a bounded per-step VMEM footprint.
    bt = 1
    while (N % (bt * 2) == 0 and N // (bt * 2) >= 2 and bt * Mo < 256
           and bt * 2 * H * W * C * 4 < (4 << 20)):
        bt *= 2
    G = N // bt

    args, in_specs = [], []
    Hh = Wh = 0
    if s > 1:
        Hp = -((-(H + 2)) // s) * s
        Wp = -((-(W + 2)) // s) * s
        Hh, Wh = Hp // s, Wp // s
        xpad = jnp.pad(x_nhwc, ((0, 0), (1, Hp - H - 1), (1, Wp - W - 1), (0, 0)))
        for pi in range(s):
            for pj in range(s):
                args.append(xpad[:, pi::s, pj::s, :])
                in_specs.append(pl.BlockSpec((bt, Hh, Wh, C), lambda n: (n, 0, 0, 0)))
        # Grid-invariant pad-validity masks (1 inside the image, 0 in the halo),
        # precomputed at trace time and passed as a constant input.
        mk = np.zeros((s * s, Hh, Wh, 1), np.float32)
        rr = np.arange(Hh)[:, None]
        cc = np.arange(Wh)[None, :]
        for pi in range(s):
            for pj in range(s):
                v = ((s * rr + pi >= 1) & (s * rr + pi <= H)
                     & (s * cc + pj >= 1) & (s * cc + pj <= W))
                mk[pi * s + pj, :, :, 0] = v.astype(np.float32)
        args.append(jnp.asarray(mk))
        in_specs.append(pl.BlockSpec((s * s, Hh, Wh, 1), lambda n: (0, 0, 0, 0)))
    else:
        args.append(x_nhwc)
        in_specs.append(pl.BlockSpec((bt, H, W, C), lambda n: (n, 0, 0, 0)))

    args += [jnp.reshape(scale, (1, C)).astype(jnp.float32),
             jnp.reshape(shift, (1, C)).astype(jnp.float32),
             w_slab]
    in_specs += [pl.BlockSpec((1, C), lambda n: (0, 0)),
                 pl.BlockSpec((1, C), lambda n: (0, 0)),
                 pl.BlockSpec((9 * C, Co), lambda n: (0, 0))]

    Cds = 0
    if with_ds:
        Cds = w_ds_oihw.shape[0]
        wds = jnp.transpose(w_ds_oihw.reshape(Cds, C), (1, 0)).astype(jnp.bfloat16)
        args.append(wds)
        in_specs.append(pl.BlockSpec((C, Cds), lambda n: (0, 0)))
    if with_res:
        args.append(jnp.reshape(residual, (N, Mo, Co)).astype(jnp.float32))
        in_specs.append(pl.BlockSpec((bt, Mo, Co), lambda n: (n, 0, 0)))

    out_shapes = [jax.ShapeDtypeStruct((N, Mo, Co), jnp.float32)]
    out_specs = [pl.BlockSpec((bt, Mo, Co), lambda n: (n, 0, 0))]
    if with_ds:
        out_shapes.append(jax.ShapeDtypeStruct((N, Mo, Cds), jnp.float32))
        out_specs.append(pl.BlockSpec((bt, Mo, Cds), lambda n: (n, 0, 0)))
    if emit_stats:
        out_shapes += [jax.ShapeDtypeStruct((G, 1, Co), jnp.float32)] * 2
        out_specs += [pl.BlockSpec((1, 1, Co), lambda n: (n, 0, 0))] * 2

    scratch = []
    if s == 1:
        scratch.append(pltpu.VMEM((bt, H + 2, W + 2, C), jnp.bfloat16))

    kernel = _make_conv_kernel(s=s, H=H, W=W, Ho=Ho, Wo=Wo, C=C, Co=Co, bt=bt,
                               with_ds=with_ds, with_res=with_res,
                               emit_stats=emit_stats)

    # Explicit VMEM budget (v7x safe: physical 64 MiB, scoped default 32 MiB).
    in_elems = (s * s * bt * Hh * Wh * C + s * s * Hh * Wh) if s > 1 else bt * H * W * C
    est = (2 * in_elems * 4                       # double-buffered input blocks (f32)
           + 2 * bt * Mo * (Co + Cds) * 4         # double-buffered output blocks
           + 3 * bt * Mo * 9 * C * 2              # bf16 windows + slab temporaries
           + 2 * bt * Mo * (Co + Cds) * 4         # f32 accumulators
           + bt * (H + 2) * (W + 2) * C * 2)      # pad scratch (stride 1)
    vmem_limit = int(min(56 << 20, max(16 << 20, 4 * est)))

    outs = pl.pallas_call(
        kernel,
        out_shape=tuple(out_shapes),
        grid=(G,),
        in_specs=in_specs,
        out_specs=tuple(out_specs),
        scratch_shapes=scratch,
        compiler_params=pltpu.CompilerParams(
            dimension_semantics=("parallel",),
            vmem_limit_bytes=vmem_limit),
    )(*args)
    return outs


# ------------------------------ forward pass -------------------------------- #
def wide_basic_forward(x_nchw, params, stride):
    N, Cin, H, W = x_nchw.shape
    x = jnp.transpose(x_nchw, (0, 2, 3, 1)).astype(jnp.float32)      # NHWC

    # bn1 batch statistics -> per-channel affine (scale, shift)
    scale1, shift1 = _channel_stats_affine(x.reshape(N * H * W, Cin),
                                           params["bn1_gamma"], params["bn1_beta"])

    s = int(stride)
    Ho = (H - 1) // s + 1
    Wo = (W - 1) // s + 1
    Cmid = params["w1"].shape[0]
    Co = params["w2"].shape[0]
    with_ds = params["w_ds"] is not None

    # conv1: bn1-affine + relu + 3x3(stride) [+ 1x1 downsample] + bn2-stats epilogue
    outs1 = _fused_bnrelu_conv3x3(
        x, scale1, shift1, params["w1"], stride=s,
        w_ds_oihw=params["w_ds"] if with_ds else None, emit_stats=True)
    if with_ds:
        h, shortcut, sums, sqs = outs1             # h:(N,Mo,Cmid) shortcut:(N,Mo,Co)
    else:
        h, sums, sqs = outs1
        shortcut = x.reshape(N, H * W, Cin)        # stride == 1 and Cin == Co here

    # bn2 (track_running_stats=False): finalize batch stats (tiny plain-JAX reduce).
    m2 = float(N * Ho * Wo)
    mean2 = jnp.sum(sums, axis=(0, 1)) / m2
    var2 = jnp.sum(sqs, axis=(0, 1)) / m2 - mean2 * mean2
    scale2 = params["bn2_gamma"].astype(jnp.float32) * jax.lax.rsqrt(var2 + EPS)
    shift2 = params["bn2_beta"].astype(jnp.float32) - mean2 * scale2

    # conv2: bn2-affine + relu + 3x3(stride 1) + residual add
    h_nhwc = h.reshape(N, Ho, Wo, Cmid)
    outs2 = _fused_bnrelu_conv3x3(h_nhwc, scale2, shift2, params["w2"],
                                  stride=1, residual=shortcut)
    y = outs2[0].reshape(N, Ho, Wo, Co)
    return jnp.transpose(y, (0, 3, 1, 2))          # NCHW


# -------------------------- pure-JAX reference ------------------------------ #
def _ref_bn(x, g, b):
    m = jnp.mean(x, axis=(0, 2, 3), keepdims=True)
    v = jnp.mean((x - m) ** 2, axis=(0, 2, 3), keepdims=True)
    return (x - m) * jax.lax.rsqrt(v + EPS) * g.reshape(1, -1, 1, 1) + b.reshape(1, -1, 1, 1)


def ref_forward(x, params, stride):
    dn = ("NCHW", "OIHW", "NCHW")
    out = jax.nn.relu(_ref_bn(x, params["bn1_gamma"], params["bn1_beta"]))
    if params["w_ds"] is not None:
        shortcut = jax.lax.conv_general_dilated(out, params["w_ds"], (stride, stride),
                                                "VALID", dimension_numbers=dn)
    else:
        shortcut = x
    h = jax.lax.conv_general_dilated(out, params["w1"], (stride, stride),
                                     ((1, 1), (1, 1)), dimension_numbers=dn)
    h = jax.nn.relu(_ref_bn(h, params["bn2_gamma"], params["bn2_beta"]))
    h = jax.lax.conv_general_dilated(h, params["w2"], (1, 1),
                                     ((1, 1), (1, 1)), dimension_numbers=dn)
    return h + shortcut


# --------------------------------- main ------------------------------------- #
if __name__ == "__main__":
    # wide_basic(in_planes=4, planes=8, stride=2, widen_factor=1, partition_num_sites=1)
    in_planes, planes, stride = 4, 8, 2
    cmid = planes  # int(planes * widen_factor / partition_num_sites)

    key = jax.random.PRNGKey(0)
    k = jax.random.split(key, 8)
    params = {
        "bn1_gamma": 1.0 + 0.1 * jax.random.normal(k[0], (in_planes,), jnp.float32),
        "bn1_beta": 0.1 * jax.random.normal(k[1], (in_planes,), jnp.float32),
        "w1": 0.1 * jax.random.normal(k[2], (cmid, in_planes, 3, 3), jnp.float32),
        "bn2_gamma": 1.0 + 0.1 * jax.random.normal(k[3], (cmid,), jnp.float32),
        "bn2_beta": 0.1 * jax.random.normal(k[4], (cmid,), jnp.float32),
        "w2": 0.1 * jax.random.normal(k[5], (planes, cmid, 3, 3), jnp.float32),
        # downsample present because stride != 1 (and in_planes != planes)
        "w_ds": 0.1 * jax.random.normal(k[6], (planes, in_planes, 1, 1), jnp.float32),
    }

    x = jax.random.normal(k[7], (2, in_planes, 16, 16), jnp.float32)  # NCHW

    fwd = jax.jit(lambda xx, pp: wide_basic_forward(xx, pp, stride))
    ref_fn = jax.jit(lambda xx, pp: ref_forward(xx, pp, stride))

    out = jax.block_until_ready(fwd(x, params))
    ref = jax.block_until_ready(ref_fn(x, params))

    assert out.shape == (2, planes, 8, 8), out.shape
    np.testing.assert_allclose(np.asarray(out), np.asarray(ref), rtol=2e-2, atol=2e-2)
    print("KERNEL_OK")
</pallas_src>

<mosaic_0001>
module attributes {stable_mosaic.version = 11 : i64} {
  func.func @_stats_kernel(%arg0: i32, %arg1: memref<512x4xf32, #tpu.memory_space<vmem>>, %arg2: memref<1x4xf32, #tpu.memory_space<vmem>>, %arg3: memref<1x4xf32, #tpu.memory_space<vmem>>, %arg4: memref<1x4xf32, #tpu.memory_space<vmem>>, %arg5: memref<1x4xf32, #tpu.memory_space<vmem>>, %arg6: memref<1x4xf32, #tpu.memory_space<vmem>>, %arg7: memref<1x4xf32, #tpu.memory_space<vmem>>) attributes {dimension_semantics = [#tpu.dimension_semantics<arbitrary>], iteration_bounds = array<i64: 1>, scalar_prefetch = 0 : i64, scratch_operands = 2 : i64, tpu.core_type = #tpu.core_type<tc>, window_params = [{transform_indices = @transform_0, window_bounds = array<i64: 512, 4>}, {pipeline_mode = #tpu.pipeline_mode<synchronous>, transform_indices = @transform_1, window_bounds = array<i64: 1, 4>}, {pipeline_mode = #tpu.pipeline_mode<synchronous>, transform_indices = @transform_2, window_bounds = array<i64: 1, 4>}, {pipeline_mode = #tpu.pipeline_mode<synchronous>, transform_indices = @transform_3, window_bounds = array<i64: 1, 4>}, {pipeline_mode = #tpu.pipeline_mode<synchronous>, transform_indices = @transform_4, window_bounds = array<i64: 1, 4>}]} {
    %c0_i32 = arith.constant 0 : i32
    %0 = arith.cmpi eq, %arg0, %c0_i32 : i32
    %1 = arith.extui %0 : i1 to i32
    %c0_i32_0 = arith.constant 0 : i32
    %2 = arith.cmpi ne, %1, %c0_i32_0 : i32
    scf.if %2 {
      %cst_13 = arith.constant 0.000000e+00 : f32
      %18 = vector.broadcast %cst_13 : f32 to vector<1x4xf32>
      %c0_14 = arith.constant 0 : index
      %c0_15 = arith.constant 0 : index
      %19 = vector.load %arg6[%c0_14, %c0_15] : memref<1x4xf32, #tpu.memory_space<vmem>>, vector<1x4xf32>
      tpu.vector_store %arg6[%c0_14, %c0_15], %18 {strides = array<i32>} : memref<1x4xf32, #tpu.memory_space<vmem>>, vector<1x4xf32>,
      %cst_16 = arith.constant 0.000000e+00 : f32
      %20 = vector.broadcast %cst_16 : f32 to vector<1x4xf32>
      %c0_17 = arith.constant 0 : index
      %c0_18 = arith.constant 0 : index
      %21 = vector.load %arg7[%c0_17, %c0_18] : memref<1x4xf32, #tpu.memory_space<vmem>>, vector<1x4xf32>
      tpu.vector_store %arg7[%c0_17, %c0_18], %20 {strides = array<i32>} : memref<1x4xf32, #tpu.memory_space<vmem>>, vector<1x4xf32>,
    } else {
    }
    %c0 = arith.constant 0 : index
    %c0_1 = arith.constant 0 : index
    %3 = vector.load %arg1[%c0, %c0_1] : memref<512x4xf32, #tpu.memory_space<vmem>>, vector<512x4xf32>
    %c0_2 = arith.constant 0 : index
    %c0_3 = arith.constant 0 : index
    %4 = vector.load %arg6[%c0_2, %c0_3] : memref<1x4xf32, #tpu.memory_space<vmem>>, vector<1x4xf32>
    %cst = arith.constant dense<0.000000e+00> : vector<4xf32>
    %5 = vector.multi_reduction <add>, %3, %cst [0] : vector<512x4xf32> to vector<4xf32>
    %6 = vector.shape_cast %5 : vector<4xf32> to vector<1x4xf32>
    %7 = arith.addf %4, %6 : vector<1x4xf32>
    %c0_4 = arith.constant 0 : index
    %c0_5 = arith.constant 0 : index
    %8 = vector.load %arg6[%c0_4, %c0_5] : memref<1x4xf32, #tpu.memory_space<vmem>>, vector<1x4xf32>
    tpu.vector_store %arg6[%c0_4, %c0_5], %7 {strides = array<i32>} : memref<1x4xf32, #tpu.memory_space<vmem>>, vector<1x4xf32>,
    %c0_6 = arith.constant 0 : index
    %c0_7 = arith.constant 0 : index
    %9 = vector.load %arg7[%c0_6, %c0_7] : memref<1x4xf32, #tpu.memory_space<vmem>>, vector<1x4xf32>
    %10 = arith.mulf %3, %3 : vector<512x4xf32>
    %cst_8 = arith.constant dense<0.000000e+00> : vector<4xf32>
    %11 = vector.multi_reduction <add>, %10, %cst_8 [0] : vector<512x4xf32> to vector<4xf32>
    %12 = vector.shape_cast %11 : vector<4xf32> to vector<1x4xf32>
    %13 = arith.addf %9, %12 : vector<1x4xf32>
    %c0_9 = arith.constant 0 : index
    %c0_10 = arith.constant 0 : index
    %14 = vector.load %arg7[%c0_9, %c0_10] : memref<1x4xf32, #tpu.memory_space<vmem>>, vector<1x4xf32>
    tpu.vector_store %arg7[%c0_9, %c0_10], %13 {strides = array<i32>} : memref<1x4xf32, #tpu.memory_space<vmem>>, vector<1x4xf32>,
    %c0_i32_11 = arith.constant 0 : i32
    %15 = arith.cmpi eq, %arg0, %c0_i32_11 : i32
    %16 = arith.extui %15 : i1 to i32
    %c0_i32_12 = arith.constant 0 : i32
    %17 = arith.cmpi ne, %16, %c0_i32_12 : i32
    scf.if %17 {
      %c0_13 = arith.constant 0 : index
      %c0_14 = arith.constant 0 : index
      %18 = vector.load %arg6[%c0_13, %c0_14] : memref<1x4xf32, #tpu.memory_space<vmem>>, vector<1x4xf32>
      %cst_15 = arith.constant 0.001953125 : f32
      %19 = vector.broadcast %cst_15 : f32 to vector<1x4xf32>
      %20 = arith.mulf %18, %19 : vector<1x4xf32>
      %c0_16 = arith.constant 0 : index
      %c0_17 = arith.constant 0 : index
      %21 = vector.load %arg7[%c0_16, %c0_17] : memref<1x4xf32, #tpu.memory_space<vmem>>, vector<1x4xf32>
      %cst_18 = arith.constant 0.001953125 : f32
      %22 = vector.broadcast %cst_18 : f32 to vector<1x4xf32>
      %23 = arith.mulf %21, %22 : vector<1x4xf32>
      %24 = arith.mulf %20, %20 : vector<1x4xf32>
      %25 = arith.subf %23, %24 : vector<1x4xf32>
      %c0_19 = arith.constant 0 : index
      %c0_20 = arith.constant 0 : index
      %26 = vector.load %arg2[%c0_19, %c0_20] : memref<1x4xf32, #tpu.memory_space<vmem>>, vector<1x4xf32>
      %cst_21 = arith.constant 9.99999974E-6 : f32
      %27 = vector.broadcast %cst_21 : f32 to vector<1x4xf32>
      %28 = arith.addf %25, %27 : vector<1x4xf32>
      %29 = math.rsqrt %28 : vector<1x4xf32>
      %30 = arith.mulf %26, %29 : vector<1x4xf32>
      %c0_22 = arith.constant 0 : index
      %c0_23 = arith.constant 0 : index
      %31 = vector.load %arg4[%c0_22, %c0_23] : memref<1x4xf32, #tpu.memory_space<vmem>>, vector<1x4xf32>
      tpu.vector_store %arg4[%c0_22, %c0_23], %30 {strides = array<i32>} : memref<1x4xf32, #tpu.memory_space<vmem>>, vector<1x4xf32>,
      %c0_24 = arith.constant 0 : index
      %c0_25 = arith.constant 0 : index
      %32 = vector.load %arg3[%c0_24, %c0_25] : memref<1x4xf32, #tpu.memory_space<vmem>>, vector<1x4xf32>
      %33 = arith.mulf %20, %30 : vector<1x4xf32>
      %34 = arith.subf %32, %33 : vector<1x4xf32>
      %c0_26 = arith.constant 0 : index
      %c0_27 = arith.constant 0 : index
      %35 = vector.load %arg5[%c0_26, %c0_27] : memref<1x4xf32, #tpu.memory_space<vmem>>, vector<1x4xf32>
      tpu.vector_store %arg5[%c0_26, %c0_27], %34 {strides = array<i32>} : memref<1x4xf32, #tpu.memory_space<vmem>>, vector<1x4xf32>,
    } else {
    }
    return
  }
  func.func @transform_0(%arg0: i32) -> (i32, i32) {
    %c0_i32 = arith.constant 0 : i32
    %c0_i32_0 = arith.constant 0 : i32
    return %arg0, %c0_i32 : i32, i32
  }
  func.func @transform_1(%arg0: i32) -> (i32, i32) {
    %c0_i32 = arith.constant 0 : i32
    %c0_i32_0 = arith.constant 0 : i32
    %c0_i32_1 = arith.constant 0 : i32
    return %c0_i32, %c0_i32_0 : i32, i32
  }
  func.func @transform_2(%arg0: i32) -> (i32, i32) {
    %c0_i32 = arith.constant 0 : i32
    %c0_i32_0 = arith.constant 0 : i32
    %c0_i32_1 = arith.constant 0 : i32
    return %c0_i32, %c0_i32_0 : i32, i32
  }
  func.func @transform_3(%arg0: i32) -> (i32, i32) {
    %c0_i32 = arith.constant 0 : i32
    %c0_i32_0 = arith.constant 0 : i32
    %c0_i32_1 = arith.constant 0 : i32
    return %c0_i32, %c0_i32_0 : i32, i32
  }
  func.func @transform_4(%arg0: i32) -> (i32, i32) {
    %c0_i32 = arith.constant 0 : i32
    %c0_i32_0 = arith.constant 0 : i32
    %c0_i32_1 = arith.constant 0 : i32
    return %c0_i32, %c0_i32_0 : i32, i32
  }
}

module attributes {stable_mosaic.version = 11 : i64} {
  func.func @kernel(%arg0: i32, %arg1: memref<1x9x9x4xf32, #tpu.memory_space<vmem>>, %arg2: memref<1x9x9x4xf32, #tpu.memory_space<vmem>>, %arg3: memref<1x9x9x4xf32, #tpu.memory_space<vmem>>, %arg4: memref<1x9x9x4xf32, #tpu.memory_space<vmem>>, %arg5: memref<4x9x9x1xf32, #tpu.memory_space<vmem>>, %arg6: memref<1x4xf32, #tpu.memory_space<vmem>>, %arg7: memref<1x4xf32, #tpu.memory_space<vmem>>, %arg8: memref<36x8xbf16, #tpu.memory_space<vmem>>, %arg9: memref<4x8xbf16, #tpu.memory_space<vmem>>, %arg10: memref<1x64x8xf32, #tpu.memory_space<vmem>>, %arg11: memref<1x64x8xf32, #tpu.memory_space<vmem>>, %arg12: memref<1x1x8xf32, #tpu.memory_space<vmem>>, %arg13: memref<1x1x8xf32, #tpu.memory_space<vmem>>) attributes {dimension_semantics = [#tpu.dimension_semantics<parallel>], iteration_bounds = array<i64: 2>, scalar_prefetch = 0 : i64, scratch_operands = 0 : i64, tpu.core_type = #tpu.core_type<tc>, window_params = [{transform_indices = @transform_0, window_bounds = array<i64: 1, 9, 9, 4>}, {transform_indices = @transform_1, window_bounds = array<i64: 1, 9, 9, 4>}, {transform_indices = @transform_2, window_bounds = array<i64: 1, 9, 9, 4>}, {transform_indices = @transform_3, window_bounds = array<i64: 1, 9, 9, 4>}, {pipeline_mode = #tpu.pipeline_mode<synchronous>, transform_indices = @transform_4, window_bounds = array<i64: 4, 9, 9, 1>}, {pipeline_mode = #tpu.pipeline_mode<synchronous>, transform_indices = @transform_5, window_bounds = array<i64: 1, 4>}, {pipeline_mode = #tpu.pipeline_mode<synchronous>, transform_indices = @transform_6, window_bounds = array<i64: 1, 4>}, {pipeline_mode = #tpu.pipeline_mode<synchronous>, transform_indices = @transform_7, window_bounds = array<i64: 36, 8>}, {pipeline_mode = #tpu.pipeline_mode<synchronous>, transform_indices = @transform_8, window_bounds = array<i64: 4, 8>}, {transform_indices = @transform_9, window_bounds = array<i64: 1, 64, 8>}, {transform_indices = @transform_10, window_bounds = array<i64: 1, 64, 8>}, {transform_indices = @transform_11, window_bounds = array<i64: 1, 1, 8>}, {transform_indices = @transform_12, window_bounds = array<i64: 1, 1, 8>}]} {
    %c0 = arith.constant 0 : index
    %c0_0 = arith.constant 0 : index
    %0 = vector.load %arg6[%c0, %c0_0] : memref<1x4xf32, #tpu.memory_space<vmem>>, vector<1x4xf32>
    %1 = vector.shape_cast %0 : vector<1x4xf32> to vector<1x1x1x4xf32>
    %c0_1 = arith.constant 0 : index
    %c0_2 = arith.constant 0 : index
    %2 = vector.load %arg7[%c0_1, %c0_2] : memref<1x4xf32, #tpu.memory_space<vmem>>, vector<1x4xf32>
    %3 = vector.shape_cast %2 : vector<1x4xf32> to vector<1x1x1x4xf32>
    %c0_3 = arith.constant 0 : index
    %c0_4 = arith.constant 0 : index
    %c0_5 = arith.constant 0 : index
    %c0_6 = arith.constant 0 : index
    %4 = vector.load %arg1[%c0_3, %c0_4, %c0_5, %c0_6] : memref<1x9x9x4xf32, #tpu.memory_space<vmem>>, vector<1x9x9x4xf32>
    %5 = vector.broadcast %1 : vector<1x1x1x4xf32> to vector<1x9x9x4xf32>
    %6 = arith.mulf %4, %5 : vector<1x9x9x4xf32>
    %7 = vector.broadcast %3 : vector<1x1x1x4xf32> to vector<1x9x9x4xf32>
    %8 = arith.addf %6, %7 : vector<1x9x9x4xf32>
    %cst = arith.constant 0.000000e+00 : f32
    %9 = vector.broadcast %cst : f32 to vector<1x9x9x4xf32>
    %10 = arith.maximumf %8, %9 : vector<1x9x9x4xf32>
    %c0_7 = arith.constant 0 : index
    %c0_8 = arith.constant 0 : index
    %c0_9 = arith.constant 0 : index
    %c0_10 = arith.constant 0 : index
    %11 = vector.load %arg5[%c0_7, %c0_8, %c0_9, %c0_10] : memref<4x9x9x1xf32, #tpu.memory_space<vmem>>, vector<1x9x9x1xf32>
    %12 = vector.shape_cast %11 : vector<1x9x9x1xf32> to vector<9x9x1xf32>
    %13 = vector.shape_cast %12 : vector<9x9x1xf32> to vector<1x9x9x1xf32>
    %14 = vector.broadcast %13 : vector<1x9x9x1xf32> to vector<1x9x9x4xf32>
    %15 = arith.mulf %10, %14 : vector<1x9x9x4xf32>
    %16 = arith.truncf %15 : vector<1x9x9x4xf32> to vector<1x9x9x4xbf16>
    %c0_11 = arith.constant 0 : index
    %c0_12 = arith.constant 0 : index
    %c0_13 = arith.constant 0 : index
    %c0_14 = arith.constant 0 : index
    %17 = vector.load %arg2[%c0_11, %c0_12, %c0_13, %c0_14] : memref<1x9x9x4xf32, #tpu.memory_space<vmem>>, vector<1x9x9x4xf32>
    %18 = vector.broadcast %1 : vector<1x1x1x4xf32> to vector<1x9x9x4xf32>
    %19 = arith.mulf %17, %18 : vector<1x9x9x4xf32>
    %20 = vector.broadcast %3 : vector<1x1x1x4xf32> to vector<1x9x9x4xf32>
    %21 = arith.addf %19, %20 : vector<1x9x9x4xf32>
    %cst_15 = arith.constant 0.000000e+00 : f32
    %22 = vector.broadcast %cst_15 : f32 to vector<1x9x9x4xf32>
    %23 = arith.maximumf %21, %22 : vector<1x9x9x4xf32>
    %c1 = arith.constant 1 : index
    %c0_16 = arith.constant 0 : index
    %c0_17 = arith.constant 0 : index
    %c0_18 = arith.constant 0 : index
    %24 = vector.load %arg5[%c1, %c0_16, %c0_17, %c0_18] : memref<4x9x9x1xf32, #tpu.memory_space<vmem>>, vector<1x9x9x1xf32>
    %25 = vector.shape_cast %24 : vector<1x9x9x1xf32> to vector<9x9x1xf32>
    %26 = vector.shape_cast %25 : vector<9x9x1xf32> to vector<1x9x9x1xf32>
    %27 = vector.broadcast %26 : vector<1x9x9x1xf32> to vector<1x9x9x4xf32>
    %28 = arith.mulf %23, %27 : vector<1x9x9x4xf32>
    %29 = arith.truncf %28 : vector<1x9x9x4xf32> to vector<1x9x9x4xbf16>
    %c0_19 = arith.constant 0 : index
    %c0_20 = arith.constant 0 : index
    %c0_21 = arith.constant 0 : index
    %c0_22 = arith.constant 0 : index
    %30 = vector.load %arg3[%c0_19, %c0_20, %c0_21, %c0_22] : memref<1x9x9x4xf32, #tpu.memory_space<vmem>>, vector<1x9x9x4xf32>
    %31 = vector.broadcast %1 : vector<1x1x1x4xf32> to vector<1x9x9x4xf32>
    %32 = arith.mulf %30, %31 : vector<1x9x9x4xf32>
    %33 = vector.broadcast %3 : vector<1x1x1x4xf32> to vector<1x9x9x4xf32>
    %34 = arith.addf %32, %33 : vector<1x9x9x4xf32>
    %cst_23 = arith.constant 0.000000e+00 : f32
    %35 = vector.broadcast %cst_23 : f32 to vector<1x9x9x4xf32>
    %36 = arith.maximumf %34, %35 : vector<1x9x9x4xf32>
    %c2 = arith.constant 2 : index
    %c0_24 = arith.constant 0 : index
    %c0_25 = arith.constant 0 : index
    %c0_26 = arith.constant 0 : index
    %37 = vector.load %arg5[%c2, %c0_24, %c0_25, %c0_26] : memref<4x9x9x1xf32, #tpu.memory_space<vmem>>, vector<1x9x9x1xf32>
    %38 = vector.shape_cast %37 : vector<1x9x9x1xf32> to vector<9x9x1xf32>
    %39 = vector.shape_cast %38 : vector<9x9x1xf32> to vector<1x9x9x1xf32>
    %40 = vector.broadcast %39 : vector<1x9x9x1xf32> to vector<1x9x9x4xf32>
    %41 = arith.mulf %36, %40 : vector<1x9x9x4xf32>
    %42 = arith.truncf %41 : vector<1x9x9x4xf32> to vector<1x9x9x4xbf16>
    %c0_27 = arith.constant 0 : index
    %c0_28 = arith.constant 0 : index
    %c0_29 = arith.constant 0 : index
    %c0_30 = arith.constant 0 : index
    %43 = vector.load %arg4[%c0_27, %c0_28, %c0_29, %c0_30] : memref<1x9x9x4xf32, #tpu.memory_space<vmem>>, vector<1x9x9x4xf32>
    %44 = vector.broadcast %1 : vector<1x1x1x4xf32> to vector<1x9x9x4xf32>
    %45 = arith.mulf %43, %44 : vector<1x9x9x4xf32>
    %46 = vector.broadcast %3 : vector<1x1x1x4xf32> to vector<1x9x9x4xf32>
    %47 = arith.addf %45, %46 : vector<1x9x9x4xf32>
    %cst_31 = arith.constant 0.000000e+00 : f32
    %48 = vector.broadcast %cst_31 : f32 to vector<1x9x9x4xf32>
    %49 = arith.maximumf %47, %48 : vector<1x9x9x4xf32>
    %c3 = arith.constant 3 : index
    %c0_32 = arith.constant 0 : index
    %c0_33 = arith.constant 0 : index
    %c0_34 = arith.constant 0 : index
    %50 = vector.load %arg5[%c3, %c0_32, %c0_33, %c0_34] : memref<4x9x9x1xf32, #tpu.memory_space<vmem>>, vector<1x9x9x1xf32>
    %51 = vector.shape_cast %50 : vector<1x9x9x1xf32> to vector<9x9x1xf32>
    %52 = vector.shape_cast %51 : vector<9x9x1xf32> to vector<1x9x9x1xf32>
    %53 = vector.broadcast %52 : vector<1x9x9x1xf32> to vector<1x9x9x4xf32>
    %54 = arith.mulf %49, %53 : vector<1x9x9x4xf32>
    %55 = arith.truncf %54 : vector<1x9x9x4xf32> to vector<1x9x9x4xbf16>
    %56 = vector.extract_strided_slice %16 {offsets = [0, 0, 0, 0], sizes = [1, 8, 8, 4], strides = [1, 1, 1, 1]} : vector<1x9x9x4xbf16> to vector<1x8x8x4xbf16>
    %57 = vector.extract_strided_slice %29 {offsets = [0, 0, 0, 0], sizes = [1, 8, 8, 4], strides = [1, 1, 1, 1]} : vector<1x9x9x4xbf16> to vector<1x8x8x4xbf16>
    %58 = vector.extract_strided_slice %16 {offsets = [0, 0, 1, 0], sizes = [1, 8, 8, 4], strides = [1, 1, 1, 1]} : vector<1x9x9x4xbf16> to vector<1x8x8x4xbf16>
    %59 = vector.extract_strided_slice %42 {offsets = [0, 0, 0, 0], sizes = [1, 8, 8, 4], strides = [1, 1, 1, 1]} : vector<1x9x9x4xbf16> to vector<1x8x8x4xbf16>
    %60 = vector.extract_strided_slice %55 {offsets = [0, 0, 0, 0], sizes = [1, 8, 8, 4], strides = [1, 1, 1, 1]} : vector<1x9x9x4xbf16> to vector<1x8x8x4xbf16>
    %61 = vector.extract_strided_slice %42 {offsets = [0, 0, 1, 0], sizes = [1, 8, 8, 4], strides = [1, 1, 1, 1]} : vector<1x9x9x4xbf16> to vector<1x8x8x4xbf16>
    %62 = vector.extract_strided_slice %16 {offsets = [0, 1, 0, 0], sizes = [1, 8, 8, 4], strides = [1, 1, 1, 1]} : vector<1x9x9x4xbf16> to vector<1x8x8x4xbf16>
    %63 = vector.extract_strided_slice %29 {offsets = [0, 1, 0, 0], sizes = [1, 8, 8, 4], strides = [1, 1, 1, 1]} : vector<1x9x9x4xbf16> to vector<1x8x8x4xbf16>
    %64 = vector.extract_strided_slice %16 {offsets = [0, 1, 1, 0], sizes = [1, 8, 8, 4], strides = [1, 1, 1, 1]} : vector<1x9x9x4xbf16> to vector<1x8x8x4xbf16>
    %65 = tpu.concatenate %56, %57, %58, %59, %60, %61, %62, %63, %64 in 3 : vector<1x8x8x4xbf16>, vector<1x8x8x4xbf16>, vector<1x8x8x4xbf16>, vector<1x8x8x4xbf16>, vector<1x8x8x4xbf16>, vector<1x8x8x4xbf16>, vector<1x8x8x4xbf16>, vector<1x8x8x4xbf16>, vector<1x8x8x4xbf16> -> vector<1x8x8x36xbf16>
    %66 = vector.shape_cast %65 : vector<1x8x8x36xbf16> to vector<64x36xbf16>
    %c0_35 = arith.constant 0 : index
    %c0_36 = arith.constant 0 : index
    %67 = vector.load %arg8[%c0_35, %c0_36] : memref<36x8xbf16, #tpu.memory_space<vmem>>, vector<36x8xbf16>
    %cst_37 = arith.constant dense<0.000000e+00> : vector<64x8xf32>
    %68 = tpu.matmul %66, %67, %cst_37 {dimension_numbers = #tpu.dot_dimension_numbers<[1], [0], [0], [1], [0, 0, 1, 1], [], []>} : vector<64x36xbf16>, vector<36x8xbf16>, vector<64x8xf32> -> vector<64x8xf32>
    %cst_38 = arith.constant dense<0.000000e+00> : vector<8xf32>
    %69 = vector.multi_reduction <add>, %68, %cst_38 [0] : vector<64x8xf32> to vector<8xf32>
    %70 = vector.shape_cast %69 : vector<8xf32> to vector<1x8xf32>
    %71 = vector.shape_cast %70 : vector<1x8xf32> to vector<1x1x8xf32>
    %c0_39 = arith.constant 0 : index
    %c0_40 = arith.constant 0 : index
    %c0_41 = arith.constant 0 : index
    %72 = vector.load %arg12[%c0_39, %c0_40, %c0_41] : memref<1x1x8xf32, #tpu.memory_space<vmem>>, vector<1x1x8xf32>
    tpu.vector_store %arg12[%c0_39, %c0_40, %c0_41], %71 {strides = array<i32>} : memref<1x1x8xf32, #tpu.memory_space<vmem>>, vector<1x1x8xf32>,
    %73 = arith.mulf %68, %68 : vector<64x8xf32>
    %cst_42 = arith.constant dense<0.000000e+00> : vector<8xf32>
    %74 = vector.multi_reduction <add>, %73, %cst_42 [0] : vector<64x8xf32> to vector<8xf32>
    %75 = vector.shape_cast %74 : vector<8xf32> to vector<1x8xf32>
    %76 = vector.shape_cast %75 : vector<1x8xf32> to vector<1x1x8xf32>
    %c0_43 = arith.constant 0 : index
    %c0_44 = arith.constant 0 : index
    %c0_45 = arith.constant 0 : index
    %77 = vector.load %arg13[%c0_43, %c0_44, %c0_45] : memref<1x1x8xf32, #tpu.memory_space<vmem>>, vector<1x1x8xf32>
    tpu.vector_store %arg13[%c0_43, %c0_44, %c0_45], %76 {strides = array<i32>} : memref<1x1x8xf32, #tpu.memory_space<vmem>>, vector<1x1x8xf32>,
    %78 = vector.shape_cast %60 : vector<1x8x8x4xbf16> to vector<64x4xbf16>
    %c0_46 = arith.constant 0 : index
    %c0_47 = arith.constant 0 : index
    %79 = vector.load %arg9[%c0_46, %c0_47] : memref<4x8xbf16, #tpu.memory_space<vmem>>, vector<4x8xbf16>
    %cst_48 = arith.constant dense<0.000000e+00> : vector<64x8xf32>
    %80 = tpu.matmul %78, %79, %cst_48 {dimension_numbers = #tpu.dot_dimension_numbers<[1], [0], [0], [1], [0, 0, 1, 1], [], []>} : vector<64x4xbf16>, vector<4x8xbf16>, vector<64x8xf32> -> vector<64x8xf32>
    %81 = vector.shape_cast %80 : vector<64x8xf32> to vector<1x64x8xf32>
    %c0_49 = arith.constant 0 : index
    %c0_50 = arith.constant 0 : index
    %c0_51 = arith.constant 0 : index
    %82 = vector.load %arg11[%c0_49, %c0_50, %c0_51] : memref<1x64x8xf32, #tpu.memory_space<vmem>>, vector<1x64x8xf32>
    tpu.vector_store %arg11[%c0_49, %c0_50, %c0_51], %81 {strides = array<i32>} : memref<1x64x8xf32, #tpu.memory_space<vmem>>, vector<1x64x8xf32>,
    %83 = vector.shape_cast %68 : vector<64x8xf32> to vector<1x64x8xf32>
    %c0_52 = arith.constant 0 : index
    %c0_53 = arith.constant 0 : index
    %c0_54 = arith.constant 0 : index
    %84 = vector.load %arg10[%c0_52, %c0_53, %c0_54] : memref<1x64x8xf32, #tpu.memory_space<vmem>>, vector<1x64x8xf32>
    tpu.vector_store %arg10[%c0_52, %c0_53, %c0_54], %83 {strides = array<i32>} : memref<1x64x8xf32, #tpu.memory_space<vmem>>, vector<1x64x8xf32>,
    return
  }
  func.func @transform_0(%arg0: i32) -> (i32, i32, i32, i32) {
    %c0_i32 = arith.constant 0 : i32
    %c0_i32_0 = arith.constant 0 : i32
    %c0_i32_1 = arith.constant 0 : i32
    %c0_i32_2 = arith.constant 0 : i32
    return %arg0, %c0_i32, %c0_i32_0, %c0_i32_1 : i32, i32, i32, i32
  }
  func.func @transform_1(%arg0: i32) -> (i32, i32, i32, i32) {
    %c0_i32 = arith.constant 0 : i32
    %c0_i32_0 = arith.constant 0 : i32
    %c0_i32_1 = arith.constant 0 : i32
    %c0_i32_2 = arith.constant 0 : i32
    return %arg0, %c0_i32, %c0_i32_0, %c0_i32_1 : i32, i32, i32, i32
  }
  func.func @transform_2(%arg0: i32) -> (i32, i32, i32, i32) {
    %c0_i32 = arith.constant 0 : i32
    %c0_i32_0 = arith.constant 0 : i32
    %c0_i32_1 = arith.constant 0 : i32
    %c0_i32_2 = arith.constant 0 : i32
    return %arg0, %c0_i32, %c0_i32_0, %c0_i32_1 : i32, i32, i32, i32
  }
  func.func @transform_3(%arg0: i32) -> (i32, i32, i32, i32) {
    %c0_i32 = arith.constant 0 : i32
    %c0_i32_0 = arith.constant 0 : i32
    %c0_i32_1 = arith.constant 0 : i32
    %c0_i32_2 = arith.constant 0 : i32
    return %arg0, %c0_i32, %c0_i32_0, %c0_i32_1 : i32, i32, i32, i32
  }
  func.func @transform_4(%arg0: i32) -> (i32, i32, i32, i32) {
    %c0_i32 = arith.constant 0 : i32
    %c0_i32_0 = arith.constant 0 : i32
    %c0_i32_1 = arith.constant 0 : i32
    %c0_i32_2 = arith.constant 0 : i32
    %c0_i32_3 = arith.constant 0 : i32
    return %c0_i32, %c0_i32_0, %c0_i32_1, %c0_i32_2 : i32, i32, i32, i32
  }
  func.func @transform_5(%arg0: i32) -> (i32, i32) {
    %c0_i32 = arith.constant 0 : i32
    %c0_i32_0 = arith.constant 0 : i32
    %c0_i32_1 = arith.constant 0 : i32
    return %c0_i32, %c0_i32_0 : i32, i32
  }
  func.func @transform_6(%arg0: i32) -> (i32, i32) {
    %c0_i32 = arith.constant 0 : i32
    %c0_i32_0 = arith.constant 0 : i32
    %c0_i32_1 = arith.constant 0 : i32
    return %c0_i32, %c0_i32_0 : i32, i32
  }
  func.func @transform_7(%arg0: i32) -> (i32, i32) {
    %c0_i32 = arith.constant 0 : i32
    %c0_i32_0 = arith.constant 0 : i32
    %c0_i32_1 = arith.constant 0 : i32
    return %c0_i32, %c0_i32_0 : i32, i32
  }
  func.func @transform_8(%arg0: i32) -> (i32, i32) {
    %c0_i32 = arith.constant 0 : i32
    %c0_i32_0 = arith.constant 0 : i32
    %c0_i32_1 = arith.constant 0 : i32
    return %c0_i32, %c0_i32_0 : i32, i32
  }
  func.func @transform_9(%arg0: i32) -> (i32, i32, i32) {
    %c0_i32 = arith.constant 0 : i32
    %c0_i32_0 = arith.constant 0 : i32
    %c0_i32_1 = arith.constant 0 : i32
    return %arg0, %c0_i32, %c0_i32_0 : i32, i32, i32
  }
  func.func @transform_10(%arg0: i32) -> (i32, i32, i32) {
    %c0_i32 = arith.constant 0 : i32
    %c0_i32_0 = arith.constant 0 : i32
    %c0_i32_1 = arith.constant 0 : i32
    return %arg0, %c0_i32, %c0_i32_0 : i32, i32, i32
  }
  func.func @transform_11(%arg0: i32) -> (i32, i32, i32) {
    %c0_i32 = arith.constant 0 : i32
    %c0_i32_0 = arith.constant 0 : i32
    %c0_i32_1 = arith.constant 0 : i32
    return %arg0, %c0_i32, %c0_i32_0 : i32, i32, i32
  }
  func.func @transform_12(%arg0: i32) -> (i32, i32, i32) {
    %c0_i32 = arith.constant 0 : i32
    %c0_i32_0 = arith.constant 0 : i32
    %c0_i32_1 = arith.constant 0 : i32
    return %arg0, %c0_i32, %c0_i32_0 : i32, i32, i32
  }
}

module attributes {stable_mosaic.version = 11 : i64} {
  func.func @kernel(%arg0: i32, %arg1: memref<1x8x8x8xf32, #tpu.memory_space<vmem>>, %arg2: memref<1x8xf32, #tpu.memory_space<vmem>>, %arg3: memref<1x8xf32, #tpu.memory_space<vmem>>, %arg4: memref<72x8xbf16, #tpu.memory_space<vmem>>, %arg5: memref<1x64x8xf32, #tpu.memory_space<vmem>>, %arg6: memref<1x64x8xf32, #tpu.memory_space<vmem>>, %arg7: memref<1x10x10x8xbf16, #tpu.memory_space<vmem>>) attributes {dimension_semantics = [#tpu.dimension_semantics<parallel>], iteration_bounds = array<i64: 2>, scalar_prefetch = 0 : i64, scratch_operands = 1 : i64, tpu.core_type = #tpu.core_type<tc>, window_params = [{transform_indices = @transform_0, window_bounds = array<i64: 1, 8, 8, 8>}, {pipeline_mode = #tpu.pipeline_mode<synchronous>, transform_indices = @transform_1, window_bounds = array<i64: 1, 8>}, {pipeline_mode = #tpu.pipeline_mode<synchronous>, transform_indices = @transform_2, window_bounds = array<i64: 1, 8>}, {pipeline_mode = #tpu.pipeline_mode<synchronous>, transform_indices = @transform_3, window_bounds = array<i64: 72, 8>}, {transform_indices = @transform_4, window_bounds = array<i64: 1, 64, 8>}, {transform_indices = @transform_5, window_bounds = array<i64: 1, 64, 8>}]} {
    %c0 = arith.constant 0 : index
    %c0_0 = arith.constant 0 : index
    %0 = vector.load %arg2[%c0, %c0_0] : memref<1x8xf32, #tpu.memory_space<vmem>>, vector<1x8xf32>
    %1 = vector.shape_cast %0 : vector<1x8xf32> to vector<1x1x1x8xf32>
    %c0_1 = arith.constant 0 : index
    %c0_2 = arith.constant 0 : index
    %2 = vector.load %arg3[%c0_1, %c0_2] : memref<1x8xf32, #tpu.memory_space<vmem>>, vector<1x8xf32>
    %3 = vector.shape_cast %2 : vector<1x8xf32> to vector<1x1x1x8xf32>
    %c0_3 = arith.constant 0 : index
    %c0_4 = arith.constant 0 : index
    %c0_5 = arith.constant 0 : index
    %c0_6 = arith.constant 0 : index
    %4 = vector.load %arg1[%c0_3, %c0_4, %c0_5, %c0_6] : memref<1x8x8x8xf32, #tpu.memory_space<vmem>>, vector<1x8x8x8xf32>
    %5 = vector.broadcast %1 : vector<1x1x1x8xf32> to vector<1x8x8x8xf32>
    %6 = arith.mulf %4, %5 : vector<1x8x8x8xf32>
    %7 = vector.broadcast %3 : vector<1x1x1x8xf32> to vector<1x8x8x8xf32>
    %8 = arith.addf %6, %7 : vector<1x8x8x8xf32>
    %cst = arith.constant 0.000000e+00 : f32
    %9 = vector.broadcast %cst : f32 to vector<1x8x8x8xf32>
    %10 = arith.maximumf %8, %9 : vector<1x8x8x8xf32>
    %11 = arith.truncf %10 : vector<1x8x8x8xf32> to vector<1x8x8x8xbf16>
    %cst_7 = arith.constant 0.000000e+00 : bf16
    %12 = vector.broadcast %cst_7 : bf16 to vector<1x10x10x8xbf16>
    %c0_8 = arith.constant 0 : index
    %c0_9 = arith.constant 0 : index
    %c0_10 = arith.constant 0 : index
    %c0_11 = arith.constant 0 : index
    %13 = vector.load %arg7[%c0_8, %c0_9, %c0_10, %c0_11] : memref<1x10x10x8xbf16, #tpu.memory_space<vmem>>, vector<1x10x10x8xbf16>
    tpu.vector_store %arg7[%c0_8, %c0_9, %c0_10, %c0_11], %12 {strides = array<i32>} : memref<1x10x10x8xbf16, #tpu.memory_space<vmem>>, vector<1x10x10x8xbf16>,
    %c0_12 = arith.constant 0 : index
    %c1 = arith.constant 1 : index
    %c1_13 = arith.constant 1 : index
    %c0_14 = arith.constant 0 : index
    %14 = vector.load %arg7[%c0_12, %c1, %c1_13, %c0_14] : memref<1x10x10x8xbf16, #tpu.memory_space<vmem>>, vector<1x8x8x8xbf16>
    tpu.vector_store %arg7[%c0_12, %c1, %c1_13, %c0_14], %11 {strides = array<i32>} : memref<1x10x10x8xbf16, #tpu.memory_space<vmem>>, vector<1x8x8x8xbf16>,
    %c0_15 = arith.constant 0 : index
    %c0_16 = arith.constant 0 : index
    %c0_17 = arith.constant 0 : index
    %c0_18 = arith.constant 0 : index
    %15 = vector.load %arg7[%c0_15, %c0_16, %c0_17, %c0_18] : memref<1x10x10x8xbf16, #tpu.memory_space<vmem>>, vector<1x8x8x8xbf16>
    %c0_19 = arith.constant 0 : index
    %c0_20 = arith.constant 0 : index
    %c1_21 = arith.constant 1 : index
    %c0_22 = arith.constant 0 : index
    %16 = vector.load %arg7[%c0_19, %c0_20, %c1_21, %c0_22] : memref<1x10x10x8xbf16, #tpu.memory_space<vmem>>, vector<1x8x8x8xbf16>
    %c0_23 = arith.constant 0 : index
    %c0_24 = arith.constant 0 : index
    %c2 = arith.constant 2 : index
    %c0_25 = arith.constant 0 : index
    %17 = vector.load %arg7[%c0_23, %c0_24, %c2, %c0_25] : memref<1x10x10x8xbf16, #tpu.memory_space<vmem>>, vector<1x8x8x8xbf16>
    %c0_26 = arith.constant 0 : index
    %c1_27 = arith.constant 1 : index
    %c0_28 = arith.constant 0 : index
    %c0_29 = arith.constant 0 : index
    %18 = vector.load %arg7[%c0_26, %c1_27, %c0_28, %c0_29] : memref<1x10x10x8xbf16, #tpu.memory_space<vmem>>, vector<1x8x8x8xbf16>
    %c0_30 = arith.constant 0 : index
    %c1_31 = arith.constant 1 : index
    %c1_32 = arith.constant 1 : index
    %c0_33 = arith.constant 0 : index
    %19 = vector.load %arg7[%c0_30, %c1_31, %c1_32, %c0_33] : memref<1x10x10x8xbf16, #tpu.memory_space<vmem>>, vector<1x8x8x8xbf16>
    %c0_34 = arith.constant 0 : index
    %c1_35 = arith.constant 1 : index
    %c2_36 = arith.constant 2 : index
    %c0_37 = arith.constant 0 : index
    %20 = vector.load %arg7[%c0_34, %c1_35, %c2_36, %c0_37] : memref<1x10x10x8xbf16, #tpu.memory_space<vmem>>, vector<1x8x8x8xbf16>
    %c0_38 = arith.constant 0 : index
    %c2_39 = arith.constant 2 : index
    %c0_40 = arith.constant 0 : index
    %c0_41 = arith.constant 0 : index
    %21 = vector.load %arg7[%c0_38, %c2_39, %c0_40, %c0_41] : memref<1x10x10x8xbf16, #tpu.memory_space<vmem>>, vector<1x8x8x8xbf16>
    %c0_42 = arith.constant 0 : index
    %c2_43 = arith.constant 2 : index
    %c1_44 = arith.constant 1 : index
    %c0_45 = arith.constant 0 : index
    %22 = vector.load %arg7[%c0_42, %c2_43, %c1_44, %c0_45] : memref<1x10x10x8xbf16, #tpu.memory_space<vmem>>, vector<1x8x8x8xbf16>
    %c0_46 = arith.constant 0 : index
    %c2_47 = arith.constant 2 : index
    %c2_48 = arith.constant 2 : index
    %c0_49 = arith.constant 0 : index
    %23 = vector.load %arg7[%c0_46, %c2_47, %c2_48, %c0_49] : memref<1x10x10x8xbf16, #tpu.memory_space<vmem>>, vector<1x8x8x8xbf16>
    %24 = tpu.concatenate %15, %16, %17, %18, %19, %20, %21, %22, %23 in 3 : vector<1x8x8x8xbf16>, vector<1x8x8x8xbf16>, vector<1x8x8x8xbf16>, vector<1x8x8x8xbf16>, vector<1x8x8x8xbf16>, vector<1x8x8x8xbf16>, vector<1x8x8x8xbf16>, vector<1x8x8x8xbf16>, vector<1x8x8x8xbf16> -> vector<1x8x8x72xbf16>
    %25 = vector.shape_cast %24 : vector<1x8x8x72xbf16> to vector<64x72xbf16>
    %c0_50 = arith.constant 0 : index
    %c0_51 = arith.constant 0 : index
    %26 = vector.load %arg4[%c0_50, %c0_51] : memref<72x8xbf16, #tpu.memory_space<vmem>>, vector<72x8xbf16>
    %cst_52 = arith.constant dense<0.000000e+00> : vector<64x8xf32>
    %27 = tpu.matmul %25, %26, %cst_52 {dimension_numbers = #tpu.dot_dimension_numbers<[1], [0], [0], [1], [0, 0, 1, 1], [], []>} : vector<64x72xbf16>, vector<72x8xbf16>, vector<64x8xf32> -> vector<64x8xf32>
    %c0_53 = arith.constant 0 : index
    %c0_54 = arith.constant 0 : index
    %c0_55 = arith.constant 0 : index
    %28 = vector.load %arg5[%c0_53, %c0_54, %c0_55] : memref<1x64x8xf32, #tpu.memory_space<vmem>>, vector<1x64x8xf32>
    %29 = vector.shape_cast %28 : vector<1x64x8xf32> to vector<64x8xf32>
    %30 = arith.addf %27, %29 : vector<64x8xf32>
    %31 = vector.shape_cast %30 : vector<64x8xf32> to vector<1x64x8xf32>
    %c0_56 = arith.constant 0 : index
    %c0_57 = arith.constant 0 : index
    %c0_58 = arith.constant 0 : index
    %32 = vector.load %arg6[%c0_56, %c0_57, %c0_58] : memref<1x64x8xf32, #tpu.memory_space<vmem>>, vector<1x64x8xf32>
    tpu.vector_store %arg6[%c0_56, %c0_57, %c0_58], %31 {strides = array<i32>} : memref<1x64x8xf32, #tpu.memory_space<vmem>>, vector<1x64x8xf32>,
    return
  }
  func.func @transform_0(%arg0: i32) -> (i32, i32, i32, i32) {
    %c0_i32 = arith.constant 0 : i32
    %c0_i32_0 = arith.constant 0 : i32
    %c0_i32_1 = arith.constant 0 : i32
    %c0_i32_2 = arith.constant 0 : i32
    return %arg0, %c0_i32, %c0_i32_0, %c0_i32_1 : i32, i32, i32, i32
  }
  func.func @transform_1(%arg0: i32) -> (i32, i32) {
    %c0_i32 = arith.constant 0 : i32
    %c0_i32_0 = arith.constant 0 : i32
    %c0_i32_1 = arith.constant 0 : i32
    return %c0_i32, %c0_i32_0 : i32, i32
  }
  func.func @transform_2(%arg0: i32) -> (i32, i32) {
    %c0_i32 = arith.constant 0 : i32
    %c0_i32_0 = arith.constant 0 : i32
    %c0_i32_1 = arith.constant 0 : i32
    return %c0_i32, %c0_i32_0 : i32, i32
  }
  func.func @transform_3(%arg0: i32) -> (i32, i32) {
    %c0_i32 = arith.constant 0 : i32
    %c0_i32_0 = arith.constant 0 : i32
    %c0_i32_1 = arith.constant 0 : i32
    return %c0_i32, %c0_i32_0 : i32, i32
  }
  func.func @transform_4(%arg0: i32) -> (i32, i32, i32) {
    %c0_i32 = arith.constant 0 : i32
    %c0_i32_0 = arith.constant 0 : i32
    %c0_i32_1 = arith.constant 0 : i32
    return %arg0, %c0_i32, %c0_i32_0 : i32, i32, i32
  }
  func.func @transform_5(%arg0: i32) -> (i32, i32, i32) {
    %c0_i32 = arith.constant 0 : i32
    %c0_i32_0 = arith.constant 0 : i32
    %c0_i32_1 = arith.constant 0 : i32
    return %arg0, %c0_i32, %c0_i32_0 : i32, i32, i32
  }
}

</mosaic_0001>

<llo_original>
// kernel: _lambda_.3
$region0: #{_lambda_.3}
  #allocation0 [shape = 'u32[]', space=smem, size = 0x4, offset = 0x4, fixed_abs, tag = 'smem constant byte address 0x4 - core index']
  #allocation1 [shape = 'u32[144,128]{1,0:T(1,128)}', space=vmem, size = 0x12000, scoped, tag = 'internal scratch']
  #allocation2 [shape = 'f32[1,4]{1,0:T(1,128)}', space=vmem, size = 0x200, scoped, tag = 'scratch operand']
  #allocation3 [shape = 'f32[1,4]{1,0:T(1,128)}', space=vmem, size = 0x200, scoped, tag = 'scratch operand']
  %s0 = inlined_call_operand.vmem [shape: f32[512,4], index: 0, kind: input, shape index: {}]
  %s1 = inlined_call_operand.vmem [shape: f32[1,4], index: 1, kind: input, shape index: {}]
  %s2 = inlined_call_operand.vmem [shape: f32[1,4], index: 2, kind: input, shape index: {}]
  %s3 = inlined_call_operand.vmem [shape: f32[1,4], index: 3, kind: output, shape index: {0}]
  %s4 = inlined_call_operand.vmem [shape: f32[1,4], index: 4, kind: output, shape index: {1}]
  %5 = xla_tuple %s3, %s4
  %s6 = sld [smem:[#allocation0]]
  $region38: #{_lambda_.3} parent=0
    _
  %s8 = ssub.s32 1, %s6
  %s9 = scalar_select 0, %s8, %s6
  // Predicated region
  $region2: #{_lambda_.3} parent=0 // pred_check
    _
  $region3: #{_lambda_.3} parent=0 // pred_check_branch
    %11 = sbr.rel (0) target = $region5
  $region4: #{_lambda_.3} parent=0 // pred_region
    _
  $region5: #{_lambda_.3} parent=0 // pred_fallthru
    _
  // Predicated region
  $region6: #{_lambda_.3} parent=0 // pred_check
    _
  $region7: #{_lambda_.3} parent=0 // pred_check_branch
    %13 = sbr.rel (0) target = $region9
  $region8: #{_lambda_.3} parent=0 // pred_region
    _
  $region9: #{_lambda_.3} parent=0 // pred_fallthru
    _
  // Predicated region
  $region10: #{_lambda_.3} parent=0 // pred_check
    _
  $region11: #{_lambda_.3} parent=0 // pred_check_branch
    %15 = sbr.rel (0) target = $region13
  $region12: #{_lambda_.3} parent=0 // pred_region
    _
  $region13: #{_lambda_.3} parent=0 // pred_fallthru
    _
  %p16 = scmp.eq.s32.totalorder 0, 0
  // Predicated region
  $region14: #{_lambda_.3} parent=0 // pred_check
    %p17 = pneg %p16
  $region15: #{_lambda_.3} parent=0 // pred_check_branch
    %19 = sbr.rel (%p17) target = $region17
  $region16: #{_lambda_.3} parent=0 // pred_region
    %vm20 = vcmask 24576
    %21 = vst.msk [vmem:[#allocation2] sm:$0x1] %vm20, 0.0
    %22 = vst.msk [vmem:[#allocation3] sm:$0x1] %vm20, 0.0
  $region17: #{_lambda_.3} parent=0 // pred_fallthru
    _
  %v23 = vld [vmem:[%s0] sm:$0xff]
  %v24 = vld [vmem:[%s0 + $0x8] sm:$0xff]
  %v25 = vld [vmem:[%s0 + $0x10] sm:$0xff]
  %v26 = vld [vmem:[%s0 + $0x18] sm:$0xff]
  %v27 = vld [vmem:[%s0 + $0x20] sm:$0xff]
  %v28 = vld [vmem:[%s0 + $0x28] sm:$0xff]
  %v29 = vld [vmem:[%s0 + $0x30] sm:$0xff]
  %v30 = vld [vmem:[%s0 + $0x38] sm:$0xff]
  %v31 = vld [vmem:[%s0 + $0x40] sm:$0xff]
  %v32 = vld [vmem:[%s0 + $0x48] sm:$0xff]
  %v33 = vld [vmem:[%s0 + $0x50] sm:$0xff]
  %v34 = vld [vmem:[%s0 + $0x58] sm:$0xff]
  %v35 = vld [vmem:[%s0 + $0x60] sm:$0xff]
  %v36 = vld [vmem:[%s0 + $0x68] sm:$0xff]
  %v37 = vld [vmem:[%s0 + $0x70] sm:$0xff]
  %v38 = vld [vmem:[%s0 + $0x78] sm:$0xff]
  %v39 = vld [vmem:[%s0 + $0x80] sm:$0xff]
  %v40 = vld [vmem:[%s0 + $0x88] sm:$0xff]
  %v41 = vld [vmem:[%s0 + $0x90] sm:$0xff]
  %v42 = vld [vmem:[%s0 + $0x98] sm:$0xff]
  %v43 = vld [vmem:[%s0 + $0xa0] sm:$0xff]
  %v44 = vld [vmem:[%s0 + $0xa8] sm:$0xff]
  %v45 = vld [vmem:[%s0 + $0xb0] sm:$0xff]
  %v46 = vld [vmem:[%s0 + $0xb8] sm:$0xff]
  %v47 = vld [vmem:[%s0 + $0xc0] sm:$0xff]
  %v48 = vld [vmem:[%s0 + $0xc8] sm:$0xff]
  %v49 = vld [vmem:[%s0 + $0xd0] sm:$0xff]
  %v50 = vld [vmem:[%s0 + $0xd8] sm:$0xff]
  %v51 = vld [vmem:[%s0 + $0xe0] sm:$0xff]
  %v52 = vld [vmem:[%s0 + $0xe8] sm:$0xff]
  %v53 = vld [vmem:[%s0 + $0xf0] sm:$0xff]
  %v54 = vld [vmem:[%s0 + $0xf8] sm:$0xff]
  %v55 = vld [vmem:[%s0 + $0x100] sm:$0xff]
  %v56 = vld [vmem:[%s0 + $0x108] sm:$0xff]
  %v57 = vld [vmem:[%s0 + $0x110] sm:$0xff]
  %v58 = vld [vmem:[%s0 + $0x118] sm:$0xff]
  %v59 = vld [vmem:[%s0 + $0x120] sm:$0xff]
  %v60 = vld [vmem:[%s0 + $0x128] sm:$0xff]
  %v61 = vld [vmem:[%s0 + $0x130] sm:$0xff]
  %v62 = vld [vmem:[%s0 + $0x138] sm:$0xff]
  %v63 = vld [vmem:[%s0 + $0x140] sm:$0xff]
  %v64 = vld [vmem:[%s0 + $0x148] sm:$0xff]
  %v65 = vld [vmem:[%s0 + $0x150] sm:$0xff]
  %v66 = vld [vmem:[%s0 + $0x158] sm:$0xff]
  %v67 = vld [vmem:[%s0 + $0x160] sm:$0xff]
  %v68 = vld [vmem:[%s0 + $0x168] sm:$0xff]
  %v69 = vld [vmem:[%s0 + $0x170] sm:$0xff]
  %v70 = vld [vmem:[%s0 + $0x178] sm:$0xff]
  %v71 = vld [vmem:[%s0 + $0x180] sm:$0xff]
  %v72 = vld [vmem:[%s0 + $0x188] sm:$0xff]
  %v73 = vld [vmem:[%s0 + $0x190] sm:$0xff]
  %v74 = vld [vmem:[%s0 + $0x198] sm:$0xff]
  %v75 = vld [vmem:[%s0 + $0x1a0] sm:$0xff]
  %v76 = vld [vmem:[%s0 + $0x1a8] sm:$0xff]
  %v77 = vld [vmem:[%s0 + $0x1b0] sm:$0xff]
  %v78 = vld [vmem:[%s0 + $0x1b8] sm:$0xff]
  %v79 = vld [vmem:[%s0 + $0x1c0] sm:$0xff]
  %v80 = vld [vmem:[%s0 + $0x1c8] sm:$0xff]
  %v81 = vld [vmem:[%s0 + $0x1d0] sm:$0xff]
  %v82 = vld [vmem:[%s0 + $0x1d8] sm:$0xff]
  %v83 = vld [vmem:[%s0 + $0x1e0] sm:$0xff]
  %v84 = vld [vmem:[%s0 + $0x1e8] sm:$0xff]
  %v85 = vld [vmem:[%s0 + $0x1f0] sm:$0xff]
  %v86 = vld [vmem:[%s0 + $0x1f8] sm:$0xff]
  %v87 = vld [vmem:[#allocation2] sm:$0x1]
  %vm88 = vcmask 31744
  %v89 = vsel %vm88, %v23, 0.0
  %v90 = vsel %vm88, %v24, 0.0
  %v91 = vadd.f32 %v89, %v90
  %v92 = vsel %vm88, %v25, 0.0
  %v93 = vadd.f32 %v91, %v92
  %v94 = vsel %vm88, %v26, 0.0
  %v95 = vadd.f32 %v93, %v94
  %v96 = vsel %vm88, %v27, 0.0
  %v97 = vadd.f32 %v95, %v96
  %v98 = vsel %vm88, %v28, 0.0
  %v99 = vadd.f32 %v97, %v98
  %v100 = vsel %vm88, %v29, 0.0
  %v101 = vadd.f32 %v99, %v100
  %v102 = vsel %vm88, %v30, 0.0
  %v103 = vadd.f32 %v101, %v102
  %v104 = vsel %vm88, %v31, 0.0
  %v105 = vadd.f32 %v103, %v104
  %v106 = vsel %vm88, %v32, 0.0
  %v107 = vadd.f32 %v105, %v106
  %v108 = vsel %vm88, %v33, 0.0
  %v109 = vadd.f32 %v107, %v108
  %v110 = vsel %vm88, %v34, 0.0
  %v111 = vadd.f32 %v109, %v110
  %v112 = vsel %vm88, %v35, 0.0
  %v113 = vadd.f32 %v111, %v112
  %v114 = vsel %vm88, %v36, 0.0
  %v115 = vadd.f32 %v113, %v114
  %v116 = vsel %vm88, %v37, 0.0
  %v117 = vadd.f32 %v115, %v116
  %v118 = vsel %vm88, %v38, 0.0
  %v119 = vadd.f32 %v117, %v118
  %v120 = vsel %vm88, %v39, 0.0
  %v121 = vadd.f32 %v119, %v120
  %v122 = vsel %vm88, %v40, 0.0
  %v123 = vadd.f32 %v121, %v122
  %v124 = vsel %vm88, %v41, 0.0
  %v125 = vadd.f32 %v123, %v124
  %v126 = vsel %vm88, %v42, 0.0
  %v127 = vadd.f32 %v125, %v126
  %v128 = vsel %vm88, %v43, 0.0
  %v129 = vadd.f32 %v127, %v128
  %v130 = vsel %vm88, %v44, 0.0
  %v131 = vadd.f32 %v129, %v130
  %v132 = vsel %vm88, %v45, 0.0
  %v133 = vadd.f32 %v131, %v132
  %v134 = vsel %vm88, %v46, 0.0
  %v135 = vadd.f32 %v133, %v134
  %v136 = vsel %vm88, %v47, 0.0
  %v137 = vadd.f32 %v135, %v136
  %v138 = vsel %vm88, %v48, 0.0
  %v139 = vadd.f32 %v137, %v138
  %v140 = vsel %vm88, %v49, 0.0
  %v141 = vadd.f32 %v139, %v140
  %v142 = vsel %vm88, %v50, 0.0
  %v143 = vadd.f32 %v141, %v142
  %v144 = vsel %vm88, %v51, 0.0
  %v145 = vadd.f32 %v143, %v144
  %v146 = vsel %vm88, %v52, 0.0
  %v147 = vadd.f32 %v145, %v146
  %v148 = vsel %vm88, %v53, 0.0
  %v149 = vadd.f32 %v147, %v148
  %v150 = vsel %vm88, %v54, 0.0
  %v151 = vadd.f32 %v149, %v150
  %v152 = vsel %vm88, %v55, 0.0
  %v153 = vadd.f32 %v151, %v152
  %v154 = vsel %vm88, %v56, 0.0
  %v155 = vadd.f32 %v153, %v154
  %v156 = vsel %vm88, %v57, 0.0
  %v157 = vadd.f32 %v155, %v156
  %v158 = vsel %vm88, %v58, 0.0
  %v159 = vadd.f32 %v157, %v158
  %v160 = vsel %vm88, %v59, 0.0
  %v161 = vadd.f32 %v159, %v160
  %v162 = vsel %vm88, %v60, 0.0
  %v163 = vadd.f32 %v161, %v162
  %v164 = vsel %vm88, %v61, 0.0
  %v165 = vadd.f32 %v163, %v164
  %v166 = vsel %vm88, %v62, 0.0
  %v167 = vadd.f32 %v165, %v166
  %v168 = vsel %vm88, %v63, 0.0
  %v169 = vadd.f32 %v167, %v168
  %v170 = vsel %vm88, %v64, 0.0
  %v171 = vadd.f32 %v169, %v170
  %v172 = vsel %vm88, %v65, 0.0
  %v173 = vadd.f32 %v171, %v172
  %v174 = vsel %vm88, %v66, 0.0
  %v175 = vadd.f32 %v173, %v174
  %v176 = vsel %vm88, %v67, 0.0
  %v177 = vadd.f32 %v175, %v176
  %v178 = vsel %vm88, %v68, 0.0
  %v179 = vadd.f32 %v177, %v178
  %v180 = vsel %vm88, %v69, 0.0
  %v181 = vadd.f32 %v179, %v180
  %v182 = vsel %vm88, %v70, 0.0
  %v183 = vadd.f32 %v181, %v182
  %v184 = vsel %vm88, %v71, 0.0
  %v185 = vadd.f32 %v183, %v184
  %v186 = vsel %vm88, %v72, 0.0
  %v187 = vadd.f32 %v185, %v186
  %v188 = vsel %vm88, %v73, 0.0
  %v189 = vadd.f32 %v187, %v188
  %v190 = vsel %vm88, %v74, 0.0
  %v191 = vadd.f32 %v189, %v190
  %v192 = vsel %vm88, %v75, 0.0
  %v193 = vadd.f32 %v191, %v192
  %v194 = vsel %vm88, %v76, 0.0
  %v195 = vadd.f32 %v193, %v194
  %v196 = vsel %vm88, %v77, 0.0
  %v197 = vadd.f32 %v195, %v196
  %v198 = vsel %vm88, %v78, 0.0
  %v199 = vadd.f32 %v197, %v198
  %v200 = vsel %vm88, %v79, 0.0
  %v201 = vadd.f32 %v199, %v200
  %v202 = vsel %vm88, %v80, 0.0
  %v203 = vadd.f32 %v201, %v202
  %v204 = vsel %vm88, %v81, 0.0
  %v205 = vadd.f32 %v203, %v204
  %v206 = vsel %vm88, %v82, 0.0
  %v207 = vadd.f32 %v205, %v206
  %v208 = vsel %vm88, %v83, 0.0
  %v209 = vadd.f32 %v207, %v208
  %v210 = vsel %vm88, %v84, 0.0
  %v211 = vadd.f32 %v209, %v210
  %v212 = vsel %vm88, %v85, 0.0
  %v213 = vadd.f32 %v211, %v212
  %v214 = vsel %vm88, %v86, 0.0
  %v215 = vadd.f32 %v213, %v214
  %v216 = vrot.slane %v215, 4
  %v217 = vadd.f32 %v215, %v216
  %v218 = vrot.slane %v217, 2
  %v219 = vadd.f32 %v217, %v218
  %v220 = vrot.slane %v219, 1
  %v221 = vadd.f32 %v219, %v220
  %v222 = vadd.f32 %v87, %v221
  %vm223 = vcmask 24576
  %224 = vst.msk [vmem:[#allocation2] sm:$0x1] %vm223, %v222
  %v225 = vld [vmem:[#allocation3] sm:$0x1]
  %v226 = vmul.f32 %v23, %v23
  %v227 = vmul.f32 %v24, %v24
  %v228 = vmul.f32 %v25, %v25
  %v229 = vmul.f32 %v26, %v26
  %v230 = vmul.f32 %v27, %v27
  %v231 = vmul.f32 %v28, %v28
  %v232 = vmul.f32 %v29, %v29
  %v233 = vmul.f32 %v30, %v30
  %v234 = vmul.f32 %v31, %v31
  %v235 = vmul.f32 %v32, %v32
  %v236 = vmul.f32 %v33, %v33
  %v237 = vmul.f32 %v34, %v34
  %v238 = vmul.f32 %v35, %v35
  %v239 = vmul.f32 %v36, %v36
  %v240 = vmul.f32 %v37, %v37
  %v241 = vmul.f32 %v38, %v38
  %v242 = vmul.f32 %v39, %v39
  %v243 = vmul.f32 %v40, %v40
  %v244 = vmul.f32 %v41, %v41
  %v245 = vmul.f32 %v42, %v42
  %v246 = vmul.f32 %v43, %v43
  %v247 = vmul.f32 %v44, %v44
  %v248 = vmul.f32 %v45, %v45
  %v249 = vmul.f32 %v46, %v46
  %v250 = vmul.f32 %v47, %v47
  %v251 = vmul.f32 %v48, %v48
  %v252 = vmul.f32 %v49, %v49
  %v253 = vmul.f32 %v50, %v50
  %v254 = vmul.f32 %v51, %v51
  %v255 = vmul.f32 %v52, %v52
  %v256 = vmul.f32 %v53, %v53
  %v257 = vmul.f32 %v54, %v54
  %v258 = vmul.f32 %v55, %v55
  %v259 = vmul.f32 %v56, %v56
  %v260 = vmul.f32 %v57, %v57
  %v261 = vmul.f32 %v58, %v58
  %v262 = vmul.f32 %v59, %v59
  %v263 = vmul.f32 %v60, %v60
  %v264 = vmul.f32 %v61, %v61
  %v265 = vmul.f32 %v62, %v62
  %v266 = vmul.f32 %v63, %v63
  %v267 = vmul.f32 %v64, %v64
  %v268 = vmul.f32 %v65, %v65
  %v269 = vmul.f32 %v66, %v66
  %v270 = vmul.f32 %v67, %v67
  %v271 = vmul.f32 %v68, %v68
  %v272 = vmul.f32 %v69, %v69
  %v273 = vmul.f32 %v70, %v70
  %v274 = vmul.f32 %v71, %v71
  %v275 = vmul.f32 %v72, %v72
  %v276 = vmul.f32 %v73, %v73
  %v277 = vmul.f32 %v74, %v74
  %v278 = vmul.f32 %v75, %v75
  %v279 = vmul.f32 %v76, %v76
  %v280 = vmul.f32 %v77, %v77
  %v281 = vmul.f32 %v78, %v78
  %v282 = vmul.f32 %v79, %v79
  %v283 = vmul.f32 %v80, %v80
  %v284 = vmul.f32 %v81, %v81
  %v285 = vmul.f32 %v82, %v82
  %v286 = vmul.f32 %v83, %v83
  %v287 = vmul.f32 %v84, %v84
  %v288 = vmul.f32 %v85, %v85
  %v289 = vmul.f32 %v86, %v86
  %v290 = vsel %vm88, %v226, 0.0
  %v291 = vsel %vm88, %v227, 0.0
  %v292 = vadd.f32 %v290, %v291
  %v293 = vsel %vm88, %v228, 0.0
  %v294 = vadd.f32 %v292, %v293
  %v295 = vsel %vm88, %v229, 0.0
  %v296 = vadd.f32 %v294, %v295
  %v297 = vsel %vm88, %v230, 0.0
  %v298 = vadd.f32 %v296, %v297
  %v299 = vsel %vm88, %v231, 0.0
  %v300 = vadd.f32 %v298, %v299
  %v301 = vsel %vm88, %v232, 0.0
  %v302 = vadd.f32 %v300, %v301
  %v303 = vsel %vm88, %v233, 0.0
  %v304 = vadd.f32 %v302, %v303
  %v305 = vsel %vm88, %v234, 0.0
  %v306 = vadd.f32 %v304, %v305
  %v307 = vsel %vm88, %v235, 0.0
  %v308 = vadd.f32 %v306, %v307
  %v309 = vsel %vm88, %v236, 0.0
  %v310 = vadd.f32 %v308, %v309
  %v311 = vsel %vm88, %v237, 0.0
  %v312 = vadd.f32 %v310, %v311
  %v313 = vsel %vm88, %v238, 0.0
  %v314 = vadd.f32 %v312, %v313
  %v315 = vsel %vm88, %v239, 0.0
  %v316 = vadd.f32 %v314, %v315
  %v317 = vsel %vm88, %v240, 0.0
  %v318 = vadd.f32 %v316, %v317
  %v319 = vsel %vm88, %v241, 0.0
  %v320 = vadd.f32 %v318, %v319
  %v321 = vsel %vm88, %v242, 0.0
  %v322 = vadd.f32 %v320, %v321
  %v323 = vsel %vm88, %v243, 0.0
  %v324 = vadd.f32 %v322, %v323
  %v325 = vsel %vm88, %v244, 0.0
  %v326 = vadd.f32 %v324, %v325
  %v327 = vsel %vm88, %v245, 0.0
  %v328 = vadd.f32 %v326, %v327
  %v329 = vsel %vm88, %v246, 0.0
  %v330 = vadd.f32 %v328, %v329
  %v331 = vsel %vm88, %v247, 0.0
  %v332 = vadd.f32 %v330, %v331
  %v333 = vsel %vm88, %v248, 0.0
  %v334 = vadd.f32 %v332, %v333
  %v335 = vsel %vm88, %v249, 0.0
  %v336 = vadd.f32 %v334, %v335
  %v337 = vsel %vm88, %v250, 0.0
  %v338 = vadd.f32 %v336, %v337
  %v339 = vsel %vm88, %v251, 0.0
  %v340 = vadd.f32 %v338, %v339
  %v341 = vsel %vm88, %v252, 0.0
  %v342 = vadd.f32 %v340, %v341
  %v343 = vsel %vm88, %v253, 0.0
  %v344 = vadd.f32 %v342, %v343
  %v345 = vsel %vm88, %v254, 0.0
  %v346 = vadd.f32 %v344, %v345
  %v347 = vsel %vm88, %v255, 0.0
  %v348 = vadd.f32 %v346, %v347
  %v349 = vsel %vm88, %v256, 0.0
  %v350 = vadd.f32 %v348, %v349
  %v351 = vsel %vm88, %v257, 0.0
  %v352 = vadd.f32 %v350, %v351
  %v353 = vsel %vm88, %v258, 0.0
  %v354 = vadd.f32 %v352, %v353
  %v355 = vsel %vm88, %v259, 0.0
  %v356 = vadd.f32 %v354, %v355
  %v357 = vsel %vm88, %v260, 0.0
  %v358 = vadd.f32 %v356, %v357
  %v359 = vsel %vm88, %v261, 0.0
  %v360 = vadd.f32 %v358, %v359
  %v361 = vsel %vm88, %v262, 0.0
  %v362 = vadd.f32 %v360, %v361
  %v363 = vsel %vm88, %v263, 0.0
  %v364 = vadd.f32 %v362, %v363
  %v365 = vsel %vm88, %v264, 0.0
  %v366 = vadd.f32 %v364, %v365
  %v367 = vsel %vm88, %v265, 0.0
  %v368 = vadd.f32 %v366, %v367
  %v369 = vsel %vm88, %v266, 0.0
  %v370 = vadd.f32 %v368, %v369
  %v371 = vsel %vm88, %v267, 0.0
  %v372 = vadd.f32 %v370, %v371
  %v373 = vsel %vm88, %v268, 0.0
  %v374 = vadd.f32 %v372, %v373
  %v375 = vsel %vm88, %v269, 0.0
  %v376 = vadd.f32 %v374, %v375
  %v377 = vsel %vm88, %v270, 0.0
  %v378 = vadd.f32 %v376, %v377
  %v379 = vsel %vm88, %v271, 0.0
  %v380 = vadd.f32 %v378, %v379
  %v381 = vsel %vm88, %v272, 0.0
  %v382 = vadd.f32 %v380, %v381
  %v383 = vsel %vm88, %v273, 0.0
  %v384 = vadd.f32 %v382, %v383
  %v385 = vsel %vm88, %v274, 0.0
  %v386 = vadd.f32 %v384, %v385
  %v387 = vsel %vm88, %v275, 0.0
  %v388 = vadd.f32 %v386, %v387
  %v389 = vsel %vm88, %v276, 0.0
  %v390 = vadd.f32 %v388, %v389
  %v391 = vsel %vm88, %v277, 0.0
  %v392 = vadd.f32 %v390, %v391
  %v393 = vsel %vm88, %v278, 0.0
  %v394 = vadd.f32 %v392, %v393
  %v395 = vsel %vm88, %v279, 0.0
  %v396 = vadd.f32 %v394, %v395
  %v397 = vsel %vm88, %v280, 0.0
  %v398 = vadd.f32 %v396, %v397
  %v399 = vsel %vm88, %v281, 0.0
  %v400 = vadd.f32 %v398, %v399
  %v401 = vsel %vm88, %v282, 0.0
  %v402 = vadd.f32 %v400, %v401
  %v403 = vsel %vm88, %v283, 0.0
  %v404 = vadd.f32 %v402, %v403
  %v405 = vsel %vm88, %v284, 0.0
  %v406 = vadd.f32 %v404, %v405
  %v407 = vsel %vm88, %v285, 0.0
  %v408 = vadd.f32 %v406, %v407
  %v409 = vsel %vm88, %v286, 0.0
  %v410 = vadd.f32 %v408, %v409
  %v411 = vsel %vm88, %v287, 0.0
  %v412 = vadd.f32 %v410, %v411
  %v413 = vsel %vm88, %v288, 0.0
  %v414 = vadd.f32 %v412, %v413
  %v415 = vsel %vm88, %v289, 0.0
  %v416 = vadd.f32 %v414, %v415
  %v417 = vrot.slane %v416, 4
  %v418 = vadd.f32 %v416, %v417
  %v419 = vrot.slane %v418, 2
  %v420 = vadd.f32 %v418, %v419
  %v421 = vrot.slane %v420, 1
  %v422 = vadd.f32 %v420, %v421
  %v423 = vadd.f32 %v225, %v422
  %424 = vst.msk [vmem:[#allocation3] sm:$0x1] %vm223, %v423
  // Predicated region
  $region18: #{_lambda_.3} parent=0 // pred_check
    %p425 = pneg %p16
  $region19: #{_lambda_.3} parent=0 // pred_check_branch
    %427 = sbr.rel (%p425) target = $region21
  $region20: #{_lambda_.3} parent=0 // pred_region
    %v428 = vld [vmem:[#allocation2] sm:$0x1]
    %v429 = vmul.f32 %v428, 0.001953125
    %v430 = vld [vmem:[#allocation3] sm:$0x1]
    %v431 = vmul.f32 %v430, 0.001953125
    %v432 = vmul.f32 %v429, %v429
    %v433 = vsub.f32 %v431, %v432
    %v434 = vld [vmem:[%s1] sm:$0x1]
    %v435 = vadd.f32 %v433, 1e-05
    %v436 = vrsqrt.pop %v435
    %v437 = vmul.f32 %v434, %v436
    %438 = vst.msk [vmem:[%s3] sm:$0x1] %vm223, %v437
    %v439 = vld [vmem:[%s2] sm:$0x1]
    %v440 = vmul.f32 %v429, %v437
    %v441 = vsub.f32 %v439, %v440
    %442 = vst.msk [vmem:[%s4] sm:$0x1] %vm223, %v441
  $region21: #{_lambda_.3} parent=0 // pred_fallthru
    _
  // Predicated region
  $region22: #{_lambda_.3} parent=0 // pred_check
    _
  $region23: #{_lambda_.3} parent=0 // pred_check_branch
    %444 = sbr.rel (0) target = $region25
  $region24: #{_lambda_.3} parent=0 // pred_region
    _
  $region25: #{_lambda_.3} parent=0 // pred_fallthru
    _
  // Predicated region
  $region26: #{_lambda_.3} parent=0 // pred_check
    _
  $region27: #{_lambda_.3} parent=0 // pred_check_branch
    %446 = sbr.rel (0) target = $region29
  $region28: #{_lambda_.3} parent=0 // pred_region
    _
  $region29: #{_lambda_.3} parent=0 // pred_fallthru
    _
  // Predicated region
  $region30: #{_lambda_.3} parent=0 // pred_check
    _
  $region31: #{_lambda_.3} parent=0 // pred_check_branch
    %448 = sbr.rel (0) target = $region33
  $region32: #{_lambda_.3} parent=0 // pred_region
    _
  $region33: #{_lambda_.3} parent=0 // pred_fallthru
    _
  // Predicated region
  $region34: #{_lambda_.3} parent=0 // pred_check
    _
  $region35: #{_lambda_.3} parent=0 // pred_check_branch
    %450 = sbr.rel (0) target = $region37
  $region36: #{_lambda_.3} parent=0 // pred_region
    _
  $region37: #{_lambda_.3} parent=0 // pred_fallthru
    _

// kernel: _lambda_.4
$region0: #{_lambda_.4}
  #allocation0 [shape = 'u32[]', space=smem, size = 0x4, offset = 0x4, fixed_abs, tag = 'smem constant byte address 0x4 - core index']
  #allocation1 [shape = 'u32[144,128]{1,0:T(1,128)}', space=vmem, size = 0x12000, scoped, tag = 'internal scratch']
  %s0 = inlined_call_operand.vmem [shape: f32[2,9,9,4], index: 0, kind: input, shape index: {}]
  %s1 = inlined_call_operand.vmem [shape: f32[2,9,9,4], index: 1, kind: input, shape index: {}]
  %s2 = inlined_call_operand.vmem [shape: f32[2,9,9,4], index: 2, kind: input, shape index: {}]
  %s3 = inlined_call_operand.vmem [shape: f32[2,9,9,4], index: 3, kind: input, shape index: {}]
  %s4 = inlined_call_operand.vmem [shape: f32[4,9,9,1], index: 4, kind: input, shape index: {}]
  %s5 = inlined_call_operand.vmem [shape: f32[1,4], index: 5, kind: input, shape index: {}]
  %s6 = inlined_call_operand.vmem [shape: f32[1,4], index: 6, kind: input, shape index: {}]
  %s7 = inlined_call_operand.vmem [shape: bf16[36,8], index: 7, kind: input, shape index: {}]
  %s8 = inlined_call_operand.vmem [shape: bf16[4,8], index: 8, kind: input, shape index: {}]
  %s9 = inlined_call_operand.vmem [shape: f32[2,64,8], index: 9, kind: output, shape index: {0}]
  %s10 = inlined_call_operand.vmem [shape: f32[2,64,8], index: 10, kind: output, shape index: {1}]
  %s11 = inlined_call_operand.vmem [shape: f32[2,1,8], index: 11, kind: output, shape index: {2}]
  %s12 = inlined_call_operand.vmem [shape: f32[2,1,8], index: 12, kind: output, shape index: {3}]
  %13 = xla_tuple %s9, %s10, %s11, %s12
  %s14 = sld [smem:[#allocation0]]
  $region93: #{_lambda_.4} parent=0
    _
  %s16 = ssub.s32 1, %s14
  %s17 = scalar_select 0, %s16, %s14
  loop: start=0, step=1, limit=4
  $region2: #{_lambda_.4} parent=0 // loop_pre_header
    _
  $region3: #{_lambda_.4} parent=0 // loop_header
    %s19 = sphi 0, %s23
    %p20 = scmp.ge.s32.totalorder %s19, 4
    %s29 = sphi 0, %s31
    %s32 = sphi 0, %s29
    %s33 = sphi 0, %s32
    %s49 = sphi 0, %s33
    %s55 = sphi 0, %s57
    %s58 = sphi 0, %s55
    %s59 = sphi 0, %s58
    %s75 = sphi 0, %s59
    %s81 = sphi 0, %s83
    %s84 = sphi 0, %s81
    %s85 = sphi 0, %s84
    %s101 = sphi 0, %s85
    %s107 = sphi 0, %s109
    %s110 = sphi 0, %s107
    %s111 = sphi 0, %s110
    %s127 = sphi 0, %s111
    %s131 = sphi 0, %s131
    %s133 = sphi 0, %s131
    %s134 = sphi 0, %s133
    %s148 = sphi 0, %s134
    %s152 = sphi 0, %s152
    %s154 = sphi 0, %s152
    %s155 = sphi 0, %s154
    %s169 = sphi 0, %s155
    %s173 = sphi 0, %s173
    %s175 = sphi 0, %s173
    %s176 = sphi 0, %s175
    %s190 = sphi 0, %s176
    %s194 = sphi 0, %s194
    %s196 = sphi 0, %s194
    %s197 = sphi 0, %s196
    %s211 = sphi 0, %s197
    %s215 = sphi 0, %s215
    %s217 = sphi 0, %s215
    %s218 = sphi 0, %s217
    %s232 = sphi 0, %s218
    %s238 = sphi 0, %s240
    %s241 = sphi 0, %s238
    %s242 = sphi 0, %s241
    %s258 = sphi 0, %s242
    %s264 = sphi 0, %s266
    %s267 = sphi 0, %s264
    %s268 = sphi 0, %s267
    %s284 = sphi 0, %s268
    %s290 = sphi 0, %s292
    %s293 = sphi 0, %s290
    %s294 = sphi 0, %s293
    %s310 = sphi 0, %s294
    %s316 = sphi 0, %s318
    %s319 = sphi 0, %s316
    %s320 = sphi 0, %s319
    %s336 = sphi 0, %s320
  $region4: #{_lambda_.4} parent=0 // loop_header_branch
    %22 = sbr.rel (%p20) target = $region8
  $region5: #{_lambda_.4} parent=0 // loop_body
    %s24 = ssub.s32 %s19, 1
    %s25 = ssub.s32 %s19, 2
    %s26 = sadd.s32 %s19, 1
    %s27 = ssub.s32 %s19, %s26
    %p28 = scmp.eq.s32.totalorder %s27, 0
    %s30 = sadd.s32 %s29, 1
    %s31 = scalar_select %p28, %s29, %s30
    %p34 = pneg %p28
    %p35 = scmp.eq.s32.totalorder %s19, 1
    %p36 = por %p34, %p35
    %p37 = scmp.ne.s32.totalorder %s29, %s32
    %p38 = scmp.eq.s32.totalorder %s19, 0
    %p39 = por %p37, %p38
    %p40 = scmp.ne.s32.totalorder %s29, %s32
    %p41 = scmp.eq.s32.totalorder %s24, 1
    %p42 = por %p40, %p41
    %p43 = scmp.ne.s32.totalorder %s32, %s33
    %p44 = scmp.eq.s32.totalorder %s24, 0
    %p45 = por %p43, %p44
    %p46 = scmp.ne.s32.totalorder %s32, %s33
    %p47 = scmp.eq.s32.totalorder %s25, 1
    %p48 = por %p46, %p47
    %p50 = scmp.ne.s32.totalorder %s33, %s49
    %p51 = scmp.eq.s32.totalorder %s25, 0
    %p52 = por %p50, %p51
    %s53 = ssub.s32 %s19, %s26
    %p54 = scmp.eq.s32.totalorder %s53, 0
    %s56 = sadd.s32 %s55, 1
    %s57 = scalar_select %p54, %s55, %s56
    %p60 = pneg %p54
    %p61 = scmp.eq.s32.totalorder %s19, 1
    %p62 = por %p60, %p61
    %p63 = scmp.ne.s32.totalorder %s55, %s58
    %p64 = scmp.eq.s32.totalorder %s19, 0
    %p65 = por %p63, %p64
    %p66 = scmp.ne.s32.totalorder %s55, %s58
    %p67 = scmp.eq.s32.totalorder %s24, 1
    %p68 = por %p66, %p67
    %p69 = scmp.ne.s32.totalorder %s58, %s59
    %p70 = scmp.eq.s32.totalorder %s24, 0
    %p71 = por %p69, %p70
    %p72 = scmp.ne.s32.totalorder %s58, %s59
    %p73 = scmp.eq.s32.totalorder %s25, 1
    %p74 = por %p72, %p73
    %p76 = scmp.ne.s32.totalorder %s59, %s75
    %p77 = scmp.eq.s32.totalorder %s25, 0
    %p78 = por %p76, %p77
    %s79 = ssub.s32 %s19, %s26
    %p80 = scmp.eq.s32.totalorder %s79, 0
    %s82 = sadd.s32 %s81, 1
    %s83 = scalar_select %p80, %s81, %s82
    %p86 = pneg %p80
    %p87 = scmp.eq.s32.totalorder %s19, 1
    %p88 = por %p86, %p87
    %p89 = scmp.ne.s32.totalorder %s81, %s84
    %p90 = scmp.eq.s32.totalorder %s19, 0
    %p91 = por %p89, %p90
    %p92 = scmp.ne.s32.totalorder %s81, %s84
    %p93 = scmp.eq.s32.totalorder %s24, 1
    %p94 = por %p92, %p93
    %p95 = scmp.ne.s32.totalorder %s84, %s85
    %p96 = scmp.eq.s32.totalorder %s24, 0
    %p97 = por %p95, %p96
    %p98 = scmp.ne.s32.totalorder %s84, %s85
    %p99 = scmp.eq.s32.totalorder %s25, 1
    %p100 = por %p98, %p99
    %p102 = scmp.ne.s32.totalorder %s85, %s101
    %p103 = scmp.eq.s32.totalorder %s25, 0
    %p104 = por %p102, %p103
    %s105 = ssub.s32 %s19, %s26
    %p106 = scmp.eq.s32.totalorder %s105, 0
    %s108 = sadd.s32 %s107, 1
    %s109 = scalar_select %p106, %s107, %s108
    %p112 = pneg %p106
    %p113 = scmp.eq.s32.totalorder %s19, 1
    %p114 = por %p112, %p113
    %p115 = scmp.ne.s32.totalorder %s107, %s110
    %p116 = scmp.eq.s32.totalorder %s19, 0
    %p117 = por %p115, %p116
    %p118 = scmp.ne.s32.totalorder %s107, %s110
    %p119 = scmp.eq.s32.totalorder %s24, 1
    %p120 = por %p118, %p119
    %p121 = scmp.ne.s32.totalorder %s110, %s111
    %p122 = scmp.eq.s32.totalorder %s24, 0
    %p123 = por %p121, %p122
    %p124 = scmp.ne.s32.totalorder %s110, %s111
    %p125 = scmp.eq.s32.totalorder %s25, 1
    %p126 = por %p124, %p125
    %p128 = scmp.ne.s32.totalorder %s111, %s127
    %p129 = scmp.eq.s32.totalorder %s25, 0
    %p130 = por %p128, %p129
    %s132 = sadd.s32 %s131, 1
    %p135 = scmp.eq.s32.totalorder %s19, 1
    %p136 = scmp.ne.s32.totalorder %s131, %s133
    %p137 = scmp.eq.s32.totalorder %s19, 0
    %p138 = por %p136, %p137
    %p139 = scmp.ne.s32.totalorder %s131, %s133
    %p140 = scmp.eq.s32.totalorder %s24, 1
    %p141 = por %p139, %p140
    %p142 = scmp.ne.s32.totalorder %s133, %s134
    %p143 = scmp.eq.s32.totalorder %s24, 0
    %p144 = por %p142, %p143
    %p145 = scmp.ne.s32.totalorder %s133, %s134
    %p146 = scmp.eq.s32.totalorder %s25, 1
    %p147 = por %p145, %p146
    %p149 = scmp.ne.s32.totalorder %s134, %s148
    %p150 = scmp.eq.s32.totalorder %s25, 0
    %p151 = por %p149, %p150
    %s153 = sadd.s32 %s152, 1
    %p156 = scmp.eq.s32.totalorder %s19, 1
    %p157 = scmp.ne.s32.totalorder %s152, %s154
    %p158 = scmp.eq.s32.totalorder %s19, 0
    %p159 = por %p157, %p158
    %p160 = scmp.ne.s32.totalorder %s152, %s154
    %p161 = scmp.eq.s32.totalorder %s24, 1
    %p162 = por %p160, %p161
    %p163 = scmp.ne.s32.totalorder %s154, %s155
    %p164 = scmp.eq.s32.totalorder %s24, 0
    %p165 = por %p163, %p164
    %p166 = scmp.ne.s32.totalorder %s154, %s155
    %p167 = scmp.eq.s32.totalorder %s25, 1
    %p168 = por %p166, %p167
    %p170 = scmp.ne.s32.totalorder %s155, %s169
    %p171 = scmp.eq.s32.totalorder %s25, 0
    %p172 = por %p170, %p171
    %s174 = sadd.s32 %s173, 1
    %p177 = scmp.eq.s32.totalorder %s19, 1
    %p178 = scmp.ne.s32.totalorder %s173, %s175
    %p179 = scmp.eq.s32.totalorder %s19, 0
    %p180 = por %p178, %p179
    %p181 = scmp.ne.s32.totalorder %s173, %s175
    %p182 = scmp.eq.s32.totalorder %s24, 1
    %p183 = por %p181, %p182
    %p184 = scmp.ne.s32.totalorder %s175, %s176
    %p185 = scmp.eq.s32.totalorder %s24, 0
    %p186 = por %p184, %p185
    %p187 = scmp.ne.s32.totalorder %s175, %s176
    %p188 = scmp.eq.s32.totalorder %s25, 1
    %p189 = por %p187, %p188
    %p191 = scmp.ne.s32.totalorder %s176, %s190
    %p192 = scmp.eq.s32.totalorder %s25, 0
    %p193 = por %p191, %p192
    %s195 = sadd.s32 %s194, 1
    %p198 = scmp.eq.s32.totalorder %s19, 1
    %p199 = scmp.ne.s32.totalorder %s194, %s196
    %p200 = scmp.eq.s32.totalorder %s19, 0
    %p201 = por %p199, %p200
    %p202 = scmp.ne.s32.totalorder %s194, %s196
    %p203 = scmp.eq.s32.totalorder %s24, 1
    %p204 = por %p202, %p203
    %p205 = scmp.ne.s32.totalorder %s196, %s197
    %p206 = scmp.eq.s32.totalorder %s24, 0
    %p207 = por %p205, %p206
    %p208 = scmp.ne.s32.totalorder %s196, %s197
    %p209 = scmp.eq.s32.totalorder %s25, 1
    %p210 = por %p208, %p209
    %p212 = scmp.ne.s32.totalorder %s197, %s211
    %p213 = scmp.eq.s32.totalorder %s25, 0
    %p214 = por %p212, %p213
    %s216 = sadd.s32 %s215, 1
    %p219 = scmp.eq.s32.totalorder %s19, 1
    %p220 = scmp.ne.s32.totalorder %s215, %s217
    %p221 = scmp.eq.s32.totalorder %s19, 0
    %p222 = por %p220, %p221
    %p223 = scmp.ne.s32.totalorder %s215, %s217
    %p224 = scmp.eq.s32.totalorder %s24, 1
    %p225 = por %p223, %p224
    %p226 = scmp.ne.s32.totalorder %s217, %s218
    %p227 = scmp.eq.s32.totalorder %s24, 0
    %p228 = por %p226, %p227
    %p229 = scmp.ne.s32.totalorder %s217, %s218
    %p230 = scmp.eq.s32.totalorder %s25, 1
    %p231 = por %p229, %p230
    %p233 = scmp.ne.s32.totalorder %s218, %s232
    %p234 = scmp.eq.s32.totalorder %s25, 0
    %p235 = por %p233, %p234
    %s236 = ssub.s32 %s19, %s26
    %p237 = scmp.eq.s32.totalorder %s236, 0
    %s239 = sadd.s32 %s238, 1
    %s240 = scalar_select %p237, %s238, %s239
    %p243 = pneg %p237
    %p244 = scmp.eq.s32.totalorder %s19, 1
    %p245 = por %p243, %p244
    %p246 = scmp.ne.s32.totalorder %s238, %s241
    %p247 = scmp.eq.s32.totalorder %s19, 0
    %p248 = por %p246, %p247
    %p249 = scmp.ne.s32.totalorder %s238, %s241
    %p250 = scmp.eq.s32.totalorder %s24, 1
    %p251 = por %p249, %p250
    %p252 = scmp.ne.s32.totalorder %s241, %s242
    %p253 = scmp.eq.s32.totalorder %s24, 0
    %p254 = por %p252, %p253
    %p255 = scmp.ne.s32.totalorder %s241, %s242
    %p256 = scmp.eq.s32.totalorder %s25, 1
    %p257 = por %p255, %p256
    %p259 = scmp.ne.s32.totalorder %s242, %s258
    %p260 = scmp.eq.s32.totalorder %s25, 0
    %p261 = por %p259, %p260
    %s262 = ssub.s32 %s19, %s26
    %p263 = scmp.eq.s32.totalorder %s262, 0
    %s265 = sadd.s32 %s264, 1
    %s266 = scalar_select %p263, %s264, %s265
    %p269 = pneg %p263
    %p270 = scmp.eq.s32.totalorder %s19, 1
    %p271 = por %p269, %p270
    %p272 = scmp.ne.s32.totalorder %s264, %s267
    %p273 = scmp.eq.s32.totalorder %s19, 0
    %p274 = por %p272, %p273
    %p275 = scmp.ne.s32.totalorder %s264, %s267
    %p276 = scmp.eq.s32.totalorder %s24, 1
    %p277 = por %p275, %p276
    %p278 = scmp.ne.s32.totalorder %s267, %s268
    %p279 = scmp.eq.s32.totalorder %s24, 0
    %p280 = por %p278, %p279
    %p281 = scmp.ne.s32.totalorder %s267, %s268
    %p282 = scmp.eq.s32.totalorder %s25, 1
    %p283 = por %p281, %p282
    %p285 = scmp.ne.s32.totalorder %s268, %s284
    %p286 = scmp.eq.s32.totalorder %s25, 0
    %p287 = por %p285, %p286
    %s288 = ssub.s32 %s19, %s26
    %p289 = scmp.eq.s32.totalorder %s288, 0
    %s291 = sadd.s32 %s290, 1
    %s292 = scalar_select %p289, %s290, %s291
    %p295 = pneg %p289
    %p296 = scmp.eq.s32.totalorder %s19, 1
    %p297 = por %p295, %p296
    %p298 = scmp.ne.s32.totalorder %s290, %s293
    %p299 = scmp.eq.s32.totalorder %s19, 0
    %p300 = por %p298, %p299
    %p301 = scmp.ne.s32.totalorder %s290, %s293
    %p302 = scmp.eq.s32.totalorder %s24, 1
    %p303 = por %p301, %p302
    %p304 = scmp.ne.s32.totalorder %s293, %s294
    %p305 = scmp.eq.s32.totalorder %s24, 0
    %p306 = por %p304, %p305
    %p307 = scmp.ne.s32.totalorder %s293, %s294
    %p308 = scmp.eq.s32.totalorder %s25, 1
    %p309 = por %p307, %p308
    %p311 = scmp.ne.s32.totalorder %s294, %s310
    %p312 = scmp.eq.s32.totalorder %s25, 0
    %p313 = por %p311, %p312
    %s314 = ssub.s32 %s19, %s26
    %p315 = scmp.eq.s32.totalorder %s314, 0
    %s317 = sadd.s32 %s316, 1
    %s318 = scalar_select %p315, %s316, %s317
    %p321 = pneg %p315
    %p322 = scmp.eq.s32.totalorder %s19, 1
    %p323 = por %p321, %p322
    %p324 = scmp.ne.s32.totalorder %s316, %s319
    %p325 = scmp.eq.s32.totalorder %s19, 0
    %p326 = por %p324, %p325
    %p327 = scmp.ne.s32.totalorder %s316, %s319
    %p328 = scmp.eq.s32.totalorder %s24, 1
    %p329 = por %p327, %p328
    %p330 = scmp.ne.s32.totalorder %s319, %s320
    %p331 = scmp.eq.s32.totalorder %s24, 0
    %p332 = por %p330, %p331
    %p333 = scmp.ne.s32.totalorder %s319, %s320
    %p334 = scmp.eq.s32.totalorder %s25, 1
    %p335 = por %p333, %p334
    %p337 = scmp.ne.s32.totalorder %s320, %s336
    %p338 = scmp.eq.s32.totalorder %s25, 0
    %p339 = por %p337, %p338
    %p340 = scmp.le.s32.totalorder 1, %s19
    %p341 = scmp.lt.s32.totalorder %s19, 3
    %p342 = pnand %p340, %p341
    %p343 = pneg %p342
    // Predicated region
    $region9: #{_lambda_.4} parent=5 // pred_check
      _
    $region10: #{_lambda_.4} parent=5 // pred_check_branch
      %345 = sbr.rel (%p342) target = $region12
    $region11: #{_lambda_.4} parent=5 // pred_region
      %s346 = ssub.s32 %s19, 1
      // Predicated region
      $region13: #{_lambda_.4} parent=11 // pred_check
        %p347 = pneg %p144
      $region14: #{_lambda_.4} parent=11 // pred_check_branch
        %349 = sbr.rel (%p347) target = $region16
      $region15: #{_lambda_.4} parent=11 // pred_region
        _
      $region16: #{_lambda_.4} parent=11 // pred_fallthru
        _
      // Predicated region
      $region17: #{_lambda_.4} parent=11 // pred_check
        %p350 = pneg %p165
      $region18: #{_lambda_.4} parent=11 // pred_check_branch
        %352 = sbr.rel (%p350) target = $region20
      $region19: #{_lambda_.4} parent=11 // pred_region
        _
      $region20: #{_lambda_.4} parent=11 // pred_fallthru
        _
      // Predicated region
      $region21: #{_lambda_.4} parent=11 // pred_check
        %p353 = pneg %p186
      $region22: #{_lambda_.4} parent=11 // pred_check_branch
        %355 = sbr.rel (%p353) target = $region24
      $region23: #{_lambda_.4} parent=11 // pred_region
        _
      $region24: #{_lambda_.4} parent=11 // pred_fallthru
        _
      // Predicated region
      $region25: #{_lambda_.4} parent=11 // pred_check
        %p356 = pneg %p207
      $region26: #{_lambda_.4} parent=11 // pred_check_branch
        %358 = sbr.rel (%p356) target = $region28
      $region27: #{_lambda_.4} parent=11 // pred_region
        _
      $region28: #{_lambda_.4} parent=11 // pred_fallthru
        _
      // Predicated region
      $region29: #{_lambda_.4} parent=11 // pred_check
        %p359 = pneg %p228
      $region30: #{_lambda_.4} parent=11 // pred_check_branch
        %361 = sbr.rel (%p359) target = $region32
      $region31: #{_lambda_.4} parent=11 // pred_region
        _
      $region32: #{_lambda_.4} parent=11 // pred_fallthru
        _
    $region12: #{_lambda_.4} parent=5 // pred_fallthru
      _
    %p362 = scmp.lt.s32.totalorder %s19, 2
    // Predicated region
    $region33: #{_lambda_.4} parent=5 // pred_check
      %p363 = pneg %p362
    $region34: #{_lambda_.4} parent=5 // pred_check_branch
      %365 = sbr.rel (%p363) target = $region36
    $region35: #{_lambda_.4} parent=5 // pred_region
      // Predicated region
      $region37: #{_lambda_.4} parent=35 // pred_check
        %p366 = pneg %p39
      $region38: #{_lambda_.4} parent=35 // pred_check_branch
        %368 = sbr.rel (%p366) target = $region40
      $region39: #{_lambda_.4} parent=35 // pred_region
        %p369 = scmp.lt.s32.totalorder %s19, 1
        %s370 = scalar_select %p369, %s19, 1
        %s371 = smul.addr %s370, 18
        %s372 = smul.addr %s371, 8
        %s373 = scalar_lea.vmem %s0, %s372
      $region40: #{_lambda_.4} parent=35 // pred_fallthru
        _
      // Predicated region
      $region41: #{_lambda_.4} parent=35 // pred_check
        %p374 = pneg %p65
      $region42: #{_lambda_.4} parent=35 // pred_check_branch
        %376 = sbr.rel (%p374) target = $region44
      $region43: #{_lambda_.4} parent=35 // pred_region
        %p377 = scmp.lt.s32.totalorder %s19, 1
        %s378 = scalar_select %p377, %s19, 1
        %s379 = smul.addr %s378, 18
        %s380 = smul.addr %s379, 8
        %s381 = scalar_lea.vmem %s1, %s380
      $region44: #{_lambda_.4} parent=35 // pred_fallthru
        _
      // Predicated region
      $region45: #{_lambda_.4} parent=35 // pred_check
        %p382 = pneg %p91
      $region46: #{_lambda_.4} parent=35 // pred_check_branch
        %384 = sbr.rel (%p382) target = $region48
      $region47: #{_lambda_.4} parent=35 // pred_region
        %p385 = scmp.lt.s32.totalorder %s19, 1
        %s386 = scalar_select %p385, %s19, 1
        %s387 = smul.addr %s386, 18
        %s388 = smul.addr %s387, 8
        %s389 = scalar_lea.vmem %s2, %s388
      $region48: #{_lambda_.4} parent=35 // pred_fallthru
        _
      // Predicated region
      $region49: #{_lambda_.4} parent=35 // pred_check
        %p390 = pneg %p117
      $region50: #{_lambda_.4} parent=35 // pred_check_branch
        %392 = sbr.rel (%p390) target = $region52
      $region51: #{_lambda_.4} parent=35 // pred_region
        %p393 = scmp.lt.s32.totalorder %s19, 1
        %s394 = scalar_select %p393, %s19, 1
        %s395 = smul.addr %s394, 18
        %s396 = smul.addr %s395, 8
        %s397 = scalar_lea.vmem %s3, %s396
      $region52: #{_lambda_.4} parent=35 // pred_fallthru
        _
    $region36: #{_lambda_.4} parent=5 // pred_fallthru
      _
    %p398 = scmp.le.s32.totalorder 1, %s19
    %p399 = scmp.lt.s32.totalorder %s19, 3
    %p400 = pnand %p398, %p399
    %p401 = pneg %p400
    // Predicated region
    $region53: #{_lambda_.4} parent=5 // pred_check
      _
    $region54: #{_lambda_.4} parent=5 // pred_check_branch
      %403 = sbr.rel (%p400) target = $region56
    $region55: #{_lambda_.4} parent=5 // pred_region
      %s404 = ssub.s32 %s19, 1
      %p405 = scmp.lt.s32.totalorder %s24, 1
      %s406 = scalar_select %p405, %s24, 1
      %s407 = smul.addr %s406, 18
      %s408 = smul.addr %s407, 8
      %s409 = scalar_lea.vmem %s0, %s408
      %p410 = pneg %p45
      %p411 = pneg %p42
      %p412 = scmp.lt.s32.totalorder %s24, 1
      %s413 = scalar_select %p412, %s24, 1
      %s414 = smul.addr %s413, 18
      %s415 = smul.addr %s414, 8
      %s416 = scalar_lea.vmem %s1, %s415
      %p417 = pneg %p71
      %p418 = pneg %p68
      %p419 = scmp.lt.s32.totalorder %s24, 1
      %s420 = scalar_select %p419, %s24, 1
      %s421 = smul.addr %s420, 18
      %s422 = smul.addr %s421, 8
      %s423 = scalar_lea.vmem %s2, %s422
      %p424 = pneg %p97
      %p425 = pneg %p94
      %p426 = scmp.lt.s32.totalorder %s24, 1
      %s427 = scalar_select %p426, %s24, 1
      %s428 = smul.addr %s427, 18
      %s429 = smul.addr %s428, 8
      %s430 = scalar_lea.vmem %s3, %s429
      %p431 = pneg %p123
      %p432 = pneg %p120
      %p433 = pneg %p144
      %p434 = pneg %p141
      %p435 = pneg %p165
      %p436 = pneg %p162
      %p437 = pneg %p186
      %p438 = pneg %p183
      %p439 = pneg %p207
      %p440 = pneg %p204
      %p441 = pneg %p228
      %p442 = pneg %p225
      %p443 = pneg %p254
      %p444 = pneg %p251
      %p445 = scmp.lt.s32.totalorder %s24, 1
      %s446 = scalar_select %p445, %s24, 1
      %s447 = smul.addr %s446, 8
      %s448 = smul.addr %s447, 8
      %s449 = scalar_lea.vmem %s9, %s448
      %p450 = pneg %p280
      %p451 = pneg %p277
      %p452 = scmp.lt.s32.totalorder %s24, 1
      %s453 = scalar_select %p452, %s24, 1
      %s454 = smul.addr %s453, 8
      %s455 = smul.addr %s454, 8
      %s456 = scalar_lea.vmem %s10, %s455
      %p457 = pneg %p306
      %p458 = pneg %p303
      %p459 = scmp.lt.s32.totalorder %s24, 1
      %s460 = scalar_select %p459, %s24, 1
      %s461 = scalar_lea.vmem %s11, %s460
      %p462 = pneg %p332
      %p463 = pneg %p329
      %p464 = scmp.lt.s32.totalorder %s24, 1
      %s465 = scalar_select %p464, %s24, 1
      %s466 = scalar_lea.vmem %s12, %s465
      %p467 = scmp.lt.s32.totalorder %s24, 1
      %s468 = scalar_select %p467, %s24, 1
      %s469 = smul.addr %s468, 18
      %s470 = smul.addr %s469, 8
      %s471 = scalar_lea.vmem %s0, %s470
      %p472 = scmp.lt.s32.totalorder %s24, 1
      %s473 = scalar_select %p472, %s24, 1
      %s474 = smul.addr %s473, 18
      %s475 = smul.addr %s474, 8
      %s476 = scalar_lea.vmem %s1, %s475
      %p477 = scmp.lt.s32.totalorder %s24, 1
      %s478 = scalar_select %p477, %s24, 1
      %s479 = smul.addr %s478, 18
      %s480 = smul.addr %s479, 8
      %s481 = scalar_lea.vmem %s2, %s480
      %p482 = scmp.lt.s32.totalorder %s24, 1
      %s483 = scalar_select %p482, %s24, 1
      %s484 = smul.addr %s483, 18
      %s485 = smul.addr %s484, 8
      %s486 = scalar_lea.vmem %s3, %s485
      %p487 = scmp.lt.s32.totalorder %s24, 1
      %s488 = scalar_select %p487, %s24, 1
      %s489 = smul.addr %s488, 8
      %s490 = smul.addr %s489, 8
      %s491 = scalar_lea.vmem %s9, %s490
      %p492 = scmp.lt.s32.totalorder %s24, 1
      %s493 = scalar_select %p492, %s24, 1
      %s494 = smul.addr %s493, 8
      %s495 = smul.addr %s494, 8
      %s496 = scalar_lea.vmem %s10, %s495
      %p497 = scmp.lt.s32.totalorder %s24, 1
      %s498 = scalar_select %p497, %s24, 1
      %s499 = scalar_lea.vmem %s11, %s498
      %p500 = scmp.lt.s32.totalorder %s24, 1
      %s501 = scalar_select %p500, %s24, 1
      %s502 = scalar_lea.vmem %s12, %s501
      %v504 = vld [vmem:[%s5] sm:$0x1]
      %v505 = vld [vmem:[%s6] sm:$0x1]
      %v506 = vld [vmem:[%s471] sm:$0xff]
      %v507 = vld [vmem:[%s471 + $0x8] sm:$0x1]
      %v508 = vld [vmem:[%s471 + $0x10] sm:$0xff]
      %v509 = vld [vmem:[%s471 + $0x18] sm:$0x1]
      %v510 = vld [vmem:[%s471 + $0x20] sm:$0xff]
      %v511 = vld [vmem:[%s471 + $0x28] sm:$0x1]
      %v512 = vld [vmem:[%s471 + $0x30] sm:$0xff]
      %v513 = vld [vmem:[%s471 + $0x38] sm:$0x1]
      %v514 = vld [vmem:[%s471 + $0x40] sm:$0xff]
      %v515 = vld [vmem:[%s471 + $0x48] sm:$0x1]
      %v516 = vld [vmem:[%s471 + $0x50] sm:$0xff]
      %v517 = vld [vmem:[%s471 + $0x58] sm:$0x1]
      %v518 = vld [vmem:[%s471 + $0x60] sm:$0xff]
      %v519 = vld [vmem:[%s471 + $0x68] sm:$0x1]
      %v520 = vld [vmem:[%s471 + $0x70] sm:$0xff]
      %v521 = vld [vmem:[%s471 + $0x78] sm:$0x1]
      %v522 = vld [vmem:[%s471 + $0x80] sm:$0xff]
      %v523 = vld [vmem:[%s471 + $0x88] sm:$0x1]
      %v525 = vlaneseq
      %v526 = vshrl.u32 %v525, 7
      %v527 = vsub.s32 0, %v526
      %v528 = vrot.slane %v504, %v527
      %v530 = vmul.f32 %v506, %v528
      %v531 = vmul.f32 %v507, %v528
      %v532 = vmul.f32 %v508, %v528
      %v533 = vmul.f32 %v509, %v528
      %v534 = vmul.f32 %v510, %v528
      %v535 = vmul.f32 %v511, %v528
      %v536 = vmul.f32 %v512, %v528
      %v537 = vmul.f32 %v513, %v528
      %v538 = vmul.f32 %v514, %v528
      %v539 = vmul.f32 %v515, %v528
      %v540 = vmul.f32 %v516, %v528
      %v541 = vmul.f32 %v517, %v528
      %v542 = vmul.f32 %v518, %v528
      %v543 = vmul.f32 %v519, %v528
      %v544 = vmul.f32 %v520, %v528
      %v545 = vmul.f32 %v521, %v528
      %v546 = vmul.f32 %v522, %v528
      %v547 = vmul.f32 %v523, %v528
      %v549 = vlaneseq
      %v550 = vshrl.u32 %v549, 7
      %v551 = vsub.s32 0, %v550
      %v552 = vrot.slane %v505, %v551
      %v554 = vadd.f32 %v530, %v552
      %v555 = vadd.f32 %v531, %v552
      %v556 = vadd.f32 %v532, %v552
      %v557 = vadd.f32 %v533, %v552
      %v558 = vadd.f32 %v534, %v552
      %v559 = vadd.f32 %v535, %v552
      %v560 = vadd.f32 %v536, %v552
      %v561 = vadd.f32 %v537, %v552
      %v562 = vadd.f32 %v538, %v552
      %v563 = vadd.f32 %v539, %v552
      %v564 = vadd.f32 %v540, %v552
      %v565 = vadd.f32 %v541, %v552
      %v566 = vadd.f32 %v542, %v552
      %v567 = vadd.f32 %v543, %v552
      %v568 = vadd.f32 %v544, %v552
      %v569 = vadd.f32 %v545, %v552
      %v570 = vadd.f32 %v546, %v552
      %v571 = vadd.f32 %v547, %v552
      %v572 = vmax.f32 %v554, 0.0
      %v573 = vmax.f32 %v555, 0.0
      %v574 = vmax.f32 %v556, 0.0
      %v575 = vmax.f32 %v557, 0.0
      %v576 = vmax.f32 %v558, 0.0
      %v577 = vmax.f32 %v559, 0.0
      %v578 = vmax.f32 %v560, 0.0
      %v579 = vmax.f32 %v561, 0.0
      %v580 = vmax.f32 %v562, 0.0
      %v581 = vmax.f32 %v563, 0.0
      %v582 = vmax.f32 %v564, 0.0
      %v583 = vmax.f32 %v565, 0.0
      %v584 = vmax.f32 %v566, 0.0
      %v585 = vmax.f32 %v567, 0.0
      %v586 = vmax.f32 %v568, 0.0
      %v587 = vmax.f32 %v569, 0.0
      %v588 = vmax.f32 %v570, 0.0
      %v589 = vmax.f32 %v571, 0.0
      %v590 = vld [vmem:[%s4] sm:$0xff]
      %v591 = vld [vmem:[%s4 + $0x8] sm:$0x1]
      %v592 = vld [vmem:[%s4 + $0x10] sm:$0xff]
      %v593 = vld [vmem:[%s4 + $0x18] sm:$0x1]
      %v594 = vld [vmem:[%s4 + $0x20] sm:$0xff]
      %v595 = vld [vmem:[%s4 + $0x28] sm:$0x1]
      %v596 = vld [vmem:[%s4 + $0x30] sm:$0xff]
      %v597 = vld [vmem:[%s4 + $0x38] sm:$0x1]
      %v598 = vld [vmem:[%s4 + $0x40] sm:$0xff]
      %v599 = vld [vmem:[%s4 + $0x48] sm:$0x1]
      %v600 = vld [vmem:[%s4 + $0x50] sm:$0xff]
      %v601 = vld [vmem:[%s4 + $0x58] sm:$0x1]
      %v602 = vld [vmem:[%s4 + $0x60] sm:$0xff]
      %v603 = vld [vmem:[%s4 + $0x68] sm:$0x1]
      %v604 = vld [vmem:[%s4 + $0x70] sm:$0xff]
      %v605 = vld [vmem:[%s4 + $0x78] sm:$0x1]
      %v606 = vld [vmem:[%s4 + $0x80] sm:$0xff]
      %v607 = vld [vmem:[%s4 + $0x88] sm:$0x1]
      %609 = vset.pattern.permute.xlu0 0
      %610 = vperm.xlu0 %609, %v590
      %v611 = vpop.permute.xlu0 %610
      %614 = vset.pattern.permute.xlu0 0
      %615 = vperm.xlu0 %614, %v591
      %v616 = vpop.permute.xlu0 %615
      %619 = vset.pattern.permute.xlu0 0
      %620 = vperm.xlu0 %619, %v592
      %v621 = vpop.permute.xlu0 %620
      %624 = vset.pattern.permute.xlu0 0
      %625 = vperm.xlu0 %624, %v593
      %v626 = vpop.permute.xlu0 %625
      %629 = vset.pattern.permute.xlu0 0
      %630 = vperm.xlu0 %629, %v594
      %v631 = vpop.permute.xlu0 %630
      %634 = vset.pattern.permute.xlu0 0
      %635 = vperm.xlu0 %634, %v595
      %v636 = vpop.permute.xlu0 %635
      %639 = vset.pattern.permute.xlu0 0
      %640 = vperm.xlu0 %639, %v596
      %v641 = vpop.permute.xlu0 %640
      %644 = vset.pattern.permute.xlu0 0
      %645 = vperm.xlu0 %644, %v597
      %v646 = vpop.permute.xlu0 %645
      %649 = vset.pattern.permute.xlu0 0
      %650 = vperm.xlu0 %649, %v598
      %v651 = vpop.permute.xlu0 %650
      %654 = vset.pattern.permute.xlu0 0
      %655 = vperm.xlu0 %654, %v599
      %v656 = vpop.permute.xlu0 %655
      %659 = vset.pattern.permute.xlu0 0
      %660 = vperm.xlu0 %659, %v600
      %v661 = vpop.permute.xlu0 %660
      %664 = vset.pattern.permute.xlu0 0
      %665 = vperm.xlu0 %664, %v601
      %v666 = vpop.permute.xlu0 %665
      %669 = vset.pattern.permute.xlu0 0
      %670 = vperm.xlu0 %669, %v602
      %v671 = vpop.permute.xlu0 %670
      %674 = vset.pattern.permute.xlu0 0
      %675 = vperm.xlu0 %674, %v603
      %v676 = vpop.permute.xlu0 %675
      %679 = vset.pattern.permute.xlu0 0
      %680 = vperm.xlu0 %679, %v604
      %v681 = vpop.permute.xlu0 %680
      %684 = vset.pattern.permute.xlu0 0
      %685 = vperm.xlu0 %684, %v605
      %v686 = vpop.permute.xlu0 %685
      %689 = vset.pattern.permute.xlu0 0
      %690 = vperm.xlu0 %689, %v606
      %v691 = vpop.permute.xlu0 %690
      %694 = vset.pattern.permute.xlu0 0
      %695 = vperm.xlu0 %694, %v607
      %v696 = vpop.permute.xlu0 %695
      %v698 = vmul.f32 %v572, %v611
      %v699 = vmul.f32 %v573, %v616
      %v700 = vmul.f32 %v574, %v621
      %v701 = vmul.f32 %v575, %v626
      %v702 = vmul.f32 %v576, %v631
      %v703 = vmul.f32 %v577, %v636
      %v704 = vmul.f32 %v578, %v641
      %v705 = vmul.f32 %v579, %v646
      %v706 = vmul.f32 %v580, %v651
      %v707 = vmul.f32 %v581, %v656
      %v708 = vmul.f32 %v582, %v661
      %v709 = vmul.f32 %v583, %v666
      %v710 = vmul.f32 %v584, %v671
      %v711 = vmul.f32 %v585, %v676
      %v712 = vmul.f32 %v586, %v681
      %v713 = vmul.f32 %v587, %v686
      %v714 = vmul.f32 %v588, %v691
      %v715 = vmul.f32 %v589, %v696
      %v716 = vpack.c.bf16 %v699, %v698
      %v717 = vpack.c.bf16 %v701, %v700
      %v718 = vpack.c.bf16 %v703, %v702
      %v719 = vpack.c.bf16 %v705, %v704
      %v720 = vpack.c.bf16 %v707, %v706
      %v721 = vpack.c.bf16 %v709, %v708
      %v722 = vpack.c.bf16 %v711, %v710
      %v723 = vpack.c.bf16 %v713, %v712
      %v724 = vpack.c.bf16 %v715, %v714
      %v725 = vld [vmem:[%s476] sm:$0xff]
      %v726 = vld [vmem:[%s476 + $0x8] sm:$0x1]
      %v727 = vld [vmem:[%s476 + $0x10] sm:$0xff]
      %v728 = vld [vmem:[%s476 + $0x18] sm:$0x1]
      %v729 = vld [vmem:[%s476 + $0x20] sm:$0xff]
      %v730 = vld [vmem:[%s476 + $0x28] sm:$0x1]
      %v731 = vld [vmem:[%s476 + $0x30] sm:$0xff]
      %v732 = vld [vmem:[%s476 + $0x38] sm:$0x1]
      %v733 = vld [vmem:[%s476 + $0x40] sm:$0xff]
      %v734 = vld [vmem:[%s476 + $0x48] sm:$0x1]
      %v735 = vld [vmem:[%s476 + $0x50] sm:$0xff]
      %v736 = vld [vmem:[%s476 + $0x58] sm:$0x1]
      %v737 = vld [vmem:[%s476 + $0x60] sm:$0xff]
      %v738 = vld [vmem:[%s476 + $0x68] sm:$0x1]
      %v739 = vld [vmem:[%s476 + $0x70] sm:$0xff]
      %v740 = vld [vmem:[%s476 + $0x78] sm:$0x1]
      %v741 = vld [vmem:[%s476 + $0x80] sm:$0xff]
      %v742 = vld [vmem:[%s476 + $0x88] sm:$0x1]
      %v743 = vmul.f32 %v725, %v528
      %v744 = vmul.f32 %v726, %v528
      %v745 = vmul.f32 %v727, %v528
      %v746 = vmul.f32 %v728, %v528
      %v747 = vmul.f32 %v729, %v528
      %v748 = vmul.f32 %v730, %v528
      %v749 = vmul.f32 %v731, %v528
      %v750 = vmul.f32 %v732, %v528
      %v751 = vmul.f32 %v733, %v528
      %v752 = vmul.f32 %v734, %v528
      %v753 = vmul.f32 %v735, %v528
      %v754 = vmul.f32 %v736, %v528
      %v755 = vmul.f32 %v737, %v528
      %v756 = vmul.f32 %v738, %v528
      %v757 = vmul.f32 %v739, %v528
      %v758 = vmul.f32 %v740, %v528
      %v759 = vmul.f32 %v741, %v528
      %v760 = vmul.f32 %v742, %v528
      %v761 = vadd.f32 %v743, %v552
      %v762 = vadd.f32 %v744, %v552
      %v763 = vadd.f32 %v745, %v552
      %v764 = vadd.f32 %v746, %v552
      %v765 = vadd.f32 %v747, %v552
      %v766 = vadd.f32 %v748, %v552
      %v767 = vadd.f32 %v749, %v552
      %v768 = vadd.f32 %v750, %v552
      %v769 = vadd.f32 %v751, %v552
      %v770 = vadd.f32 %v752, %v552
      %v771 = vadd.f32 %v753, %v552
      %v772 = vadd.f32 %v754, %v552
      %v773 = vadd.f32 %v755, %v552
      %v774 = vadd.f32 %v756, %v552
      %v775 = vadd.f32 %v757, %v552
      %v776 = vadd.f32 %v758, %v552
      %v777 = vadd.f32 %v759, %v552
      %v778 = vadd.f32 %v760, %v552
      %v779 = vmax.f32 %v761, 0.0
      %v780 = vmax.f32 %v762, 0.0
      %v781 = vmax.f32 %v763, 0.0
      %v782 = vmax.f32 %v764, 0.0
      %v783 = vmax.f32 %v765, 0.0
      %v784 = vmax.f32 %v766, 0.0
      %v785 = vmax.f32 %v767, 0.0
      %v786 = vmax.f32 %v768, 0.0
      %v787 = vmax.f32 %v769, 0.0
      %v788 = vmax.f32 %v770, 0.0
      %v789 = vmax.f32 %v771, 0.0
      %v790 = vmax.f32 %v772, 0.0
      %v791 = vmax.f32 %v773, 0.0
      %v792 = vmax.f32 %v774, 0.0
      %v793 = vmax.f32 %v775, 0.0
      %v794 = vmax.f32 %v776, 0.0
      %v795 = vmax.f32 %v777, 0.0
      %v796 = vmax.f32 %v778, 0.0
      %s797 = scalar_lea.vmem %s4, 144
      %v798 = vld [vmem:[%s797] sm:$0xff]
      %v799 = vld [vmem:[%s797 + $0x8] sm:$0x1]
      %v800 = vld [vmem:[%s797 + $0x10] sm:$0xff]
      %v801 = vld [vmem:[%s797 + $0x18] sm:$0x1]
      %v802 = vld [vmem:[%s797 + $0x20] sm:$0xff]
      %v803 = vld [vmem:[%s797 + $0x28] sm:$0x1]
      %v804 = vld [vmem:[%s797 + $0x30] sm:$0xff]
      %v805 = vld [vmem:[%s797 + $0x38] sm:$0x1]
      %v806 = vld [vmem:[%s797 + $0x40] sm:$0xff]
      %v807 = vld [vmem:[%s797 + $0x48] sm:$0x1]
      %v808 = vld [vmem:[%s797 + $0x50] sm:$0xff]
      %v809 = vld [vmem:[%s797 + $0x58] sm:$0x1]
      %v810 = vld [vmem:[%s797 + $0x60] sm:$0xff]
      %v811 = vld [vmem:[%s797 + $0x68] sm:$0x1]
      %v812 = vld [vmem:[%s797 + $0x70] sm:$0xff]
      %v813 = vld [vmem:[%s797 + $0x78] sm:$0x1]
      %v814 = vld [vmem:[%s797 + $0x80] sm:$0xff]
      %v815 = vld [vmem:[%s797 + $0x88] sm:$0x1]
      %817 = vset.pattern.permute.xlu0 0
      %818 = vperm.xlu0 %817, %v798
      %v819 = vpop.permute.xlu0 %818
      %822 = vset.pattern.permute.xlu0 0
      %823 = vperm.xlu0 %822, %v799
      %v824 = vpop.permute.xlu0 %823
      %827 = vset.pattern.permute.xlu0 0
      %828 = vperm.xlu0 %827, %v800
      %v829 = vpop.permute.xlu0 %828
      %832 = vset.pattern.permute.xlu0 0
      %833 = vperm.xlu0 %832, %v801
      %v834 = vpop.permute.xlu0 %833
      %837 = vset.pattern.permute.xlu0 0
      %838 = vperm.xlu0 %837, %v802
      %v839 = vpop.permute.xlu0 %838
      %842 = vset.pattern.permute.xlu0 0
      %843 = vperm.xlu0 %842, %v803
      %v844 = vpop.permute.xlu0 %843
      %847 = vset.pattern.permute.xlu0 0
      %848 = vperm.xlu0 %847, %v804
      %v849 = vpop.permute.xlu0 %848
      %852 = vset.pattern.permute.xlu0 0
      %853 = vperm.xlu0 %852, %v805
      %v854 = vpop.permute.xlu0 %853
      %857 = vset.pattern.permute.xlu0 0
      %858 = vperm.xlu0 %857, %v806
      %v859 = vpop.permute.xlu0 %858
      %862 = vset.pattern.permute.xlu0 0
      %863 = vperm.xlu0 %862, %v807
      %v864 = vpop.permute.xlu0 %863
      %867 = vset.pattern.permute.xlu0 0
      %868 = vperm.xlu0 %867, %v808
      %v869 = vpop.permute.xlu0 %868
      %872 = vset.pattern.permute.xlu0 0
      %873 = vperm.xlu0 %872, %v809
      %v874 = vpop.permute.xlu0 %873
      %877 = vset.pattern.permute.xlu0 0
      %878 = vperm.xlu0 %877, %v810
      %v879 = vpop.permute.xlu0 %878
      %882 = vset.pattern.permute.xlu0 0
      %883 = vperm.xlu0 %882, %v811
      %v884 = vpop.permute.xlu0 %883
      %887 = vset.pattern.permute.xlu0 0
      %888 = vperm.xlu0 %887, %v812
      %v889 = vpop.permute.xlu0 %888
      %892 = vset.pattern.permute.xlu0 0
      %893 = vperm.xlu0 %892, %v813
      %v894 = vpop.permute.xlu0 %893
      %897 = vset.pattern.permute.xlu0 0
      %898 = vperm.xlu0 %897, %v814
      %v899 = vpop.permute.xlu0 %898
      %902 = vset.pattern.permute.xlu0 0
      %903 = vperm.xlu0 %902, %v815
      %v904 = vpop.permute.xlu0 %903
      %v906 = vmul.f32 %v779, %v819
      %v907 = vmul.f32 %v780, %v824
      %v908 = vmul.f32 %v781, %v829
      %v909 = vmul.f32 %v782, %v834
      %v910 = vmul.f32 %v783, %v839
      %v911 = vmul.f32 %v784, %v844
      %v912 = vmul.f32 %v785, %v849
      %v913 = vmul.f32 %v786, %v854
      %v914 = vmul.f32 %v787, %v859
      %v915 = vmul.f32 %v788, %v864
      %v916 = vmul.f32 %v789, %v869
      %v917 = vmul.f32 %v790, %v874
      %v918 = vmul.f32 %v791, %v879
      %v919 = vmul.f32 %v792, %v884
      %v920 = vmul.f32 %v793, %v889
      %v921 = vmul.f32 %v794, %v894
      %v922 = vmul.f32 %v795, %v899
      %v923 = vmul.f32 %v796, %v904
      %v924 = vpack.c.bf16 %v907, %v906
      %v925 = vpack.c.bf16 %v909, %v908
      %v926 = vpack.c.bf16 %v911, %v910
      %v927 = vpack.c.bf16 %v913, %v912
      %v928 = vpack.c.bf16 %v915, %v914
      %v929 = vpack.c.bf16 %v917, %v916
      %v930 = vpack.c.bf16 %v919, %v918
      %v931 = vpack.c.bf16 %v921, %v920
      %v932 = vpack.c.bf16 %v923, %v922
      %v933 = vld [vmem:[%s481] sm:$0xff]
      %v934 = vld [vmem:[%s481 + $0x8] sm:$0x1]
      %v935 = vld [vmem:[%s481 + $0x10] sm:$0xff]
      %v936 = vld [vmem:[%s481 + $0x18] sm:$0x1]
      %v937 = vld [vmem:[%s481 + $0x20] sm:$0xff]
      %v938 = vld [vmem:[%s481 + $0x28] sm:$0x1]
      %v939 = vld [vmem:[%s481 + $0x30] sm:$0xff]
      %v940 = vld [vmem:[%s481 + $0x38] sm:$0x1]
      %v941 = vld [vmem:[%s481 + $0x40] sm:$0xff]
      %v942 = vld [vmem:[%s481 + $0x48] sm:$0x1]
      %v943 = vld [vmem:[%s481 + $0x50] sm:$0xff]
      %v944 = vld [vmem:[%s481 + $0x58] sm:$0x1]
      %v945 = vld [vmem:[%s481 + $0x60] sm:$0xff]
      %v946 = vld [vmem:[%s481 + $0x68] sm:$0x1]
      %v947 = vld [vmem:[%s481 + $0x70] sm:$0xff]
      %v948 = vld [vmem:[%s481 + $0x78] sm:$0x1]
      %v949 = vmul.f32 %v933, %v528
      %v950 = vmul.f32 %v934, %v528
      %v951 = vmul.f32 %v935, %v528
      %v952 = vmul.f32 %v936, %v528
      %v953 = vmul.f32 %v937, %v528
      %v954 = vmul.f32 %v938, %v528
      %v955 = vmul.f32 %v939, %v528
      %v956 = vmul.f32 %v940, %v528
      %v957 = vmul.f32 %v941, %v528
      %v958 = vmul.f32 %v942, %v528
      %v959 = vmul.f32 %v943, %v528
      %v960 = vmul.f32 %v944, %v528
      %v961 = vmul.f32 %v945, %v528
      %v962 = vmul.f32 %v946, %v528
      %v963 = vmul.f32 %v947, %v528
      %v964 = vmul.f32 %v948, %v528
      %v965 = vadd.f32 %v949, %v552
      %v966 = vadd.f32 %v950, %v552
      %v967 = vadd.f32 %v951, %v552
      %v968 = vadd.f32 %v952, %v552
      %v969 = vadd.f32 %v953, %v552
      %v970 = vadd.f32 %v954, %v552
      %v971 = vadd.f32 %v955, %v552
      %v972 = vadd.f32 %v956, %v552
      %v973 = vadd.f32 %v957, %v552
      %v974 = vadd.f32 %v958, %v552
      %v975 = vadd.f32 %v959, %v552
      %v976 = vadd.f32 %v960, %v552
      %v977 = vadd.f32 %v961, %v552
      %v978 = vadd.f32 %v962, %v552
      %v979 = vadd.f32 %v963, %v552
      %v980 = vadd.f32 %v964, %v552
      %v981 = vmax.f32 %v965, 0.0
      %v982 = vmax.f32 %v966, 0.0
      %v983 = vmax.f32 %v967, 0.0
      %v984 = vmax.f32 %v968, 0.0
      %v985 = vmax.f32 %v969, 0.0
      %v986 = vmax.f32 %v970, 0.0
      %v987 = vmax.f32 %v971, 0.0
      %v988 = vmax.f32 %v972, 0.0
      %v989 = vmax.f32 %v973, 0.0
      %v990 = vmax.f32 %v974, 0.0
      %v991 = vmax.f32 %v975, 0.0
      %v992 = vmax.f32 %v976, 0.0
      %v993 = vmax.f32 %v977, 0.0
      %v994 = vmax.f32 %v978, 0.0
      %v995 = vmax.f32 %v979, 0.0
      %v996 = vmax.f32 %v980, 0.0
      %s997 = scalar_lea.vmem %s4, 288
      %v998 = vld [vmem:[%s997] sm:$0xff]
      %v999 = vld [vmem:[%s997 + $0x8] sm:$0x1]
      %v1000 = vld [vmem:[%s997 + $0x10] sm:$0xff]
      %v1001 = vld [vmem:[%s997 + $0x18] sm:$0x1]
      %v1002 = vld [vmem:[%s997 + $0x20] sm:$0xff]
      %v1003 = vld [vmem:[%s997 + $0x28] sm:$0x1]
      %v1004 = vld [vmem:[%s997 + $0x30] sm:$0xff]
      %v1005 = vld [vmem:[%s997 + $0x38] sm:$0x1]
      %v1006 = vld [vmem:[%s997 + $0x40] sm:$0xff]
      %v1007 = vld [vmem:[%s997 + $0x48] sm:$0x1]
      %v1008 = vld [vmem:[%s997 + $0x50] sm:$0xff]
      %v1009 = vld [vmem:[%s997 + $0x58] sm:$0x1]
      %v1010 = vld [vmem:[%s997 + $0x60] sm:$0xff]
      %v1011 = vld [vmem:[%s997 + $0x68] sm:$0x1]
      %v1012 = vld [vmem:[%s997 + $0x70] sm:$0xff]
      %v1013 = vld [vmem:[%s997 + $0x78] sm:$0x1]
      %1015 = vset.pattern.permute.xlu0 0
      %1016 = vperm.xlu0 %1015, %v998
      %v1017 = vpop.permute.xlu0 %1016
      %1020 = vset.pattern.permute.xlu0 0
      %1021 = vperm.xlu0 %1020, %v999
      %v1022 = vpop.permute.xlu0 %1021
      %1025 = vset.pattern.permute.xlu0 0
      %1026 = vperm.xlu0 %1025, %v1000
      %v1027 = vpop.permute.xlu0 %1026
      %1030 = vset.pattern.permute.xlu0 0
      %1031 = vperm.xlu0 %1030, %v1001
      %v1032 = vpop.permute.xlu0 %1031
      %1035 = vset.pattern.permute.xlu0 0
      %1036 = vperm.xlu0 %1035, %v1002
      %v1037 = vpop.permute.xlu0 %1036
      %1040 = vset.pattern.permute.xlu0 0
      %1041 = vperm.xlu0 %1040, %v1003
      %v1042 = vpop.permute.xlu0 %1041
      %1045 = vset.pattern.permute.xlu0 0
      %1046 = vperm.xlu0 %1045, %v1004
      %v1047 = vpop.permute.xlu0 %1046
      %1050 = vset.pattern.permute.xlu0 0
      %1051 = vperm.xlu0 %1050, %v1005
      %v1052 = vpop.permute.xlu0 %1051
      %1055 = vset.pattern.permute.xlu0 0
      %1056 = vperm.xlu0 %1055, %v1006
      %v1057 = vpop.permute.xlu0 %1056
      %1060 = vset.pattern.permute.xlu0 0
      %1061 = vperm.xlu0 %1060, %v1007
      %v1062 = vpop.permute.xlu0 %1061
      %1065 = vset.pattern.permute.xlu0 0
      %1066 = vperm.xlu0 %1065, %v1008
      %v1067 = vpop.permute.xlu0 %1066
      %1070 = vset.pattern.permute.xlu0 0
      %1071 = vperm.xlu0 %1070, %v1009
      %v1072 = vpop.permute.xlu0 %1071
      %1075 = vset.pattern.permute.xlu0 0
      %1076 = vperm.xlu0 %1075, %v1010
      %v1077 = vpop.permute.xlu0 %1076
      %1080 = vset.pattern.permute.xlu0 0
      %1081 = vperm.xlu0 %1080, %v1011
      %v1082 = vpop.permute.xlu0 %1081
      %1085 = vset.pattern.permute.xlu0 0
      %1086 = vperm.xlu0 %1085, %v1012
      %v1087 = vpop.permute.xlu0 %1086
      %1090 = vset.pattern.permute.xlu0 0
      %1091 = vperm.xlu0 %1090, %v1013
      %v1092 = vpop.permute.xlu0 %1091
      %v1094 = vmul.f32 %v981, %v1017
      %v1095 = vmul.f32 %v982, %v1022
      %v1096 = vmul.f32 %v983, %v1027
      %v1097 = vmul.f32 %v984, %v1032
      %v1098 = vmul.f32 %v985, %v1037
      %v1099 = vmul.f32 %v986, %v1042
      %v1100 = vmul.f32 %v987, %v1047
      %v1101 = vmul.f32 %v988, %v1052
      %v1102 = vmul.f32 %v989, %v1057
      %v1103 = vmul.f32 %v990, %v1062
      %v1104 = vmul.f32 %v991, %v1067
      %v1105 = vmul.f32 %v992, %v1072
      %v1106 = vmul.f32 %v993, %v1077
      %v1107 = vmul.f32 %v994, %v1082
      %v1108 = vmul.f32 %v995, %v1087
      %v1109 = vmul.f32 %v996, %v1092
      %v1110 = vpack.c.bf16 %v1095, %v1094
      %v1111 = vpack.c.bf16 %v1097, %v1096
      %v1112 = vpack.c.bf16 %v1099, %v1098
      %v1113 = vpack.c.bf16 %v1101, %v1100
      %v1114 = vpack.c.bf16 %v1103, %v1102
      %v1115 = vpack.c.bf16 %v1105, %v1104
      %v1116 = vpack.c.bf16 %v1107, %v1106
      %v1117 = vpack.c.bf16 %v1109, %v1108
      %v1118 = vld [vmem:[%s486] sm:$0xff]
      %v1119 = vld [vmem:[%s486 + $0x8] sm:$0x1]
      %v1120 = vld [vmem:[%s486 + $0x10] sm:$0xff]
      %v1121 = vld [vmem:[%s486 + $0x18] sm:$0x1]
      %v1122 = vld [vmem:[%s486 + $0x20] sm:$0xff]
      %v1123 = vld [vmem:[%s486 + $0x28] sm:$0x1]
      %v1124 = vld [vmem:[%s486 + $0x30] sm:$0xff]
      %v1125 = vld [vmem:[%s486 + $0x38] sm:$0x1]
      %v1126 = vld [vmem:[%s486 + $0x40] sm:$0xff]
      %v1127 = vld [vmem:[%s486 + $0x48] sm:$0x1]
      %v1128 = vld [vmem:[%s486 + $0x50] sm:$0xff]
      %v1129 = vld [vmem:[%s486 + $0x58] sm:$0x1]
      %v1130 = vld [vmem:[%s486 + $0x60] sm:$0xff]
      %v1131 = vld [vmem:[%s486 + $0x68] sm:$0x1]
      %v1132 = vld [vmem:[%s486 + $0x70] sm:$0xff]
      %v1133 = vld [vmem:[%s486 + $0x78] sm:$0x1]
      %v1134 = vmul.f32 %v1118, %v528
      %v1135 = vmul.f32 %v1119, %v528
      %v1136 = vmul.f32 %v1120, %v528
      %v1137 = vmul.f32 %v1121, %v528
      %v1138 = vmul.f32 %v1122, %v528
      %v1139 = vmul.f32 %v1123, %v528
      %v1140 = vmul.f32 %v1124, %v528
      %v1141 = vmul.f32 %v1125, %v528
      %v1142 = vmul.f32 %v1126, %v528
      %v1143 = vmul.f32 %v1127, %v528
      %v1144 = vmul.f32 %v1128, %v528
      %v1145 = vmul.f32 %v1129, %v528
      %v1146 = vmul.f32 %v1130, %v528
      %v1147 = vmul.f32 %v1131, %v528
      %v1148 = vmul.f32 %v1132, %v528
      %v1149 = vmul.f32 %v1133, %v528
      %v1150 = vadd.f32 %v1134, %v552
      %v1151 = vadd.f32 %v1135, %v552
      %v1152 = vadd.f32 %v1136, %v552
      %v1153 = vadd.f32 %v1137, %v552
      %v1154 = vadd.f32 %v1138, %v552
      %v1155 = vadd.f32 %v1139, %v552
      %v1156 = vadd.f32 %v1140, %v552
      %v1157 = vadd.f32 %v1141, %v552
      %v1158 = vadd.f32 %v1142, %v552
      %v1159 = vadd.f32 %v1143, %v552
      %v1160 = vadd.f32 %v1144, %v552
      %v1161 = vadd.f32 %v1145, %v552
      %v1162 = vadd.f32 %v1146, %v552
      %v1163 = vadd.f32 %v1147, %v552
      %v1164 = vadd.f32 %v1148, %v552
      %v1165 = vadd.f32 %v1149, %v552
      %v1166 = vmax.f32 %v1150, 0.0
      %v1167 = vmax.f32 %v1151, 0.0
      %v1168 = vmax.f32 %v1152, 0.0
      %v1169 = vmax.f32 %v1153, 0.0
      %v1170 = vmax.f32 %v1154, 0.0
      %v1171 = vmax.f32 %v1155, 0.0
      %v1172 = vmax.f32 %v1156, 0.0
      %v1173 = vmax.f32 %v1157, 0.0
      %v1174 = vmax.f32 %v1158, 0.0
      %v1175 = vmax.f32 %v1159, 0.0
      %v1176 = vmax.f32 %v1160, 0.0
      %v1177 = vmax.f32 %v1161, 0.0
      %v1178 = vmax.f32 %v1162, 0.0
      %v1179 = vmax.f32 %v1163, 0.0
      %v1180 = vmax.f32 %v1164, 0.0
      %v1181 = vmax.f32 %v1165, 0.0
      %s1182 = scalar_lea.vmem %s4, 432
      %v1183 = vld [vmem:[%s1182] sm:$0xff]
      %v1184 = vld [vmem:[%s1182 + $0x8] sm:$0x1]
      %v1185 = vld [vmem:[%s1182 + $0x10] sm:$0xff]
      %v1186 = vld [vmem:[%s1182 + $0x18] sm:$0x1]
      %v1187 = vld [vmem:[%s1182 + $0x20] sm:$0xff]
      %v1188 = vld [vmem:[%s1182 + $0x28] sm:$0x1]
      %v1189 = vld [vmem:[%s1182 + $0x30] sm:$0xff]
      %v1190 = vld [vmem:[%s1182 + $0x38] sm:$0x1]
      %v1191 = vld [vmem:[%s1182 + $0x40] sm:$0xff]
      %v1192 = vld [vmem:[%s1182 + $0x48] sm:$0x1]
      %v1193 = vld [vmem:[%s1182 + $0x50] sm:$0xff]
      %v1194 = vld [vmem:[%s1182 + $0x58] sm:$0x1]
      %v1195 = vld [vmem:[%s1182 + $0x60] sm:$0xff]
      %v1196 = vld [vmem:[%s1182 + $0x68] sm:$0x1]
      %v1197 = vld [vmem:[%s1182 + $0x70] sm:$0xff]
      %v1198 = vld [vmem:[%s1182 + $0x78] sm:$0x1]
      %1200 = vset.pattern.permute.xlu0 0
      %1201 = vperm.xlu0 %1200, %v1183
      %v1202 = vpop.permute.xlu0 %1201
      %1205 = vset.pattern.permute.xlu0 0
      %1206 = vperm.xlu0 %1205, %v1184
      %v1207 = vpop.permute.xlu0 %1206
      %1210 = vset.pattern.permute.xlu0 0
      %1211 = vperm.xlu0 %1210, %v1185
      %v1212 = vpop.permute.xlu0 %1211
      %1215 = vset.pattern.permute.xlu0 0
      %1216 = vperm.xlu0 %1215, %v1186
      %v1217 = vpop.permute.xlu0 %1216
      %1220 = vset.pattern.permute.xlu0 0
      %1221 = vperm.xlu0 %1220, %v1187
      %v1222 = vpop.permute.xlu0 %1221
      %1225 = vset.pattern.permute.xlu0 0
      %1226 = vperm.xlu0 %1225, %v1188
      %v1227 = vpop.permute.xlu0 %1226
      %1230 = vset.pattern.permute.xlu0 0
      %1231 = vperm.xlu0 %1230, %v1189
      %v1232 = vpop.permute.xlu0 %1231
      %1235 = vset.pattern.permute.xlu0 0
      %1236 = vperm.xlu0 %1235, %v1190
      %v1237 = vpop.permute.xlu0 %1236
      %1240 = vset.pattern.permute.xlu0 0
      %1241 = vperm.xlu0 %1240, %v1191
      %v1242 = vpop.permute.xlu0 %1241
      %1245 = vset.pattern.permute.xlu0 0
      %1246 = vperm.xlu0 %1245, %v1192
      %v1247 = vpop.permute.xlu0 %1246
      %1250 = vset.pattern.permute.xlu0 0
      %1251 = vperm.xlu0 %1250, %v1193
      %v1252 = vpop.permute.xlu0 %1251
      %1255 = vset.pattern.permute.xlu0 0
      %1256 = vperm.xlu0 %1255, %v1194
      %v1257 = vpop.permute.xlu0 %1256
      %1260 = vset.pattern.permute.xlu0 0
      %1261 = vperm.xlu0 %1260, %v1195
      %v1262 = vpop.permute.xlu0 %1261
      %1265 = vset.pattern.permute.xlu0 0
      %1266 = vperm.xlu0 %1265, %v1196
      %v1267 = vpop.permute.xlu0 %1266
      %1270 = vset.pattern.permute.xlu0 0
      %1271 = vperm.xlu0 %1270, %v1197
      %v1272 = vpop.permute.xlu0 %1271
      %1275 = vset.pattern.permute.xlu0 0
      %1276 = vperm.xlu0 %1275, %v1198
      %v1277 = vpop.permute.xlu0 %1276
      %v1279 = vmul.f32 %v1166, %v1202
      %v1280 = vmul.f32 %v1167, %v1207
      %v1281 = vmul.f32 %v1168, %v1212
      %v1282 = vmul.f32 %v1169, %v1217
      %v1283 = vmul.f32 %v1170, %v1222
      %v1284 = vmul.f32 %v1171, %v1227
      %v1285 = vmul.f32 %v1172, %v1232
      %v1286 = vmul.f32 %v1173, %v1237
      %v1287 = vmul.f32 %v1174, %v1242
      %v1288 = vmul.f32 %v1175, %v1247
      %v1289 = vmul.f32 %v1176, %v1252
      %v1290 = vmul.f32 %v1177, %v1257
      %v1291 = vmul.f32 %v1178, %v1262
      %v1292 = vmul.f32 %v1179, %v1267
      %v1293 = vmul.f32 %v1180, %v1272
      %v1294 = vmul.f32 %v1181, %v1277
      %v1295 = vpack.c.bf16 %v1280, %v1279
      %v1296 = vpack.c.bf16 %v1282, %v1281
      %v1297 = vpack.c.bf16 %v1284, %v1283
      %v1298 = vpack.c.bf16 %v1286, %v1285
      %v1299 = vpack.c.bf16 %v1288, %v1287
      %v1300 = vpack.c.bf16 %v1290, %v1289
      %v1301 = vpack.c.bf16 %v1292, %v1291
      %v1302 = vpack.c.bf16 %v1294, %v1293
      %1311 = vrot.lane.b32.xlu0 %v924, 4
      %v1312 = vpop.permute.xlu0 %1311
      %1313 = vrot.lane.b32.xlu0 %v925, 4
      %v1314 = vpop.permute.xlu0 %1313
      %1315 = vrot.lane.b32.xlu0 %v926, 4
      %v1316 = vpop.permute.xlu0 %1315
      %1317 = vrot.lane.b32.xlu0 %v927, 4
      %v1318 = vpop.permute.xlu0 %1317
      %1319 = vrot.lane.b32.xlu0 %v928, 4
      %v1320 = vpop.permute.xlu0 %1319
      %1321 = vrot.lane.b32.xlu0 %v929, 4
      %v1322 = vpop.permute.xlu0 %1321
      %1323 = vrot.lane.b32.xlu0 %v930, 4
      %v1324 = vpop.permute.xlu0 %1323
      %1325 = vrot.lane.b32.xlu0 %v931, 4
      %v1326 = vpop.permute.xlu0 %1325
      %v1328 = vshrl.u32 %v716, 16
      %v1330 = vshll.u32 %v716, 16
      %v1332 = vrot.slane %v1330, 1
      %v1333 = vor.u32 %v1328, %v1332
      %v1335 = vshrl.u32 %v717, 16
      %v1337 = vshll.u32 %v717, 16
      %v1339 = vrot.slane %v1337, 1
      %v1340 = vor.u32 %v1335, %v1339
      %v1342 = vshrl.u32 %v718, 16
      %v1344 = vshll.u32 %v718, 16
      %v1346 = vrot.slane %v1344, 1
      %v1347 = vor.u32 %v1342, %v1346
      %v1349 = vshrl.u32 %v719, 16
      %v1351 = vshll.u32 %v719, 16
      %v1353 = vrot.slane %v1351, 1
      %v1354 = vor.u32 %v1349, %v1353
      %v1356 = vshrl.u32 %v720, 16
      %v1358 = vshll.u32 %v720, 16
      %v1360 = vrot.slane %v1358, 1
      %v1361 = vor.u32 %v1356, %v1360
      %v1363 = vshrl.u32 %v721, 16
      %v1365 = vshll.u32 %v721, 16
      %v1367 = vrot.slane %v1365, 1
      %v1368 = vor.u32 %v1363, %v1367
      %v1370 = vshrl.u32 %v722, 16
      %v1372 = vshll.u32 %v722, 16
      %v1374 = vrot.slane %v1372, 1
      %v1375 = vor.u32 %v1370, %v1374
      %v1377 = vshrl.u32 %v723, 16
      %v1379 = vshll.u32 %v723, 16
      %v1381 = vrot.slane %v1379, 1
      %v1382 = vor.u32 %v1377, %v1381
      %1383 = vrot.lane.b32.xlu0 %v1333, 8
      %v1384 = vpop.permute.xlu0 %1383
      %1385 = vrot.lane.b32.xlu0 %v1340, 8
      %v1386 = vpop.permute.xlu0 %1385
      %1387 = vrot.lane.b32.xlu0 %v1347, 8
      %v1388 = vpop.permute.xlu0 %1387
      %1389 = vrot.lane.b32.xlu0 %v1354, 8
      %v1390 = vpop.permute.xlu0 %1389
      %1391 = vrot.lane.b32.xlu0 %v1361, 8
      %v1392 = vpop.permute.xlu0 %1391
      %1393 = vrot.lane.b32.xlu0 %v1368, 8
      %v1394 = vpop.permute.xlu0 %1393
      %1395 = vrot.lane.b32.xlu0 %v1375, 8
      %v1396 = vpop.permute.xlu0 %1395
      %1397 = vrot.lane.b32.xlu0 %v1382, 8
      %v1398 = vpop.permute.xlu0 %1397
      %1407 = vrot.lane.b32.xlu0 %v1110, 12
      %v1408 = vpop.permute.xlu0 %1407
      %1409 = vrot.lane.b32.xlu0 %v1111, 12
      %v1410 = vpop.permute.xlu0 %1409
      %1411 = vrot.lane.b32.xlu0 %v1112, 12
      %v1412 = vpop.permute.xlu0 %1411
      %1413 = vrot.lane.b32.xlu0 %v1113, 12
      %v1414 = vpop.permute.xlu0 %1413
      %1415 = vrot.lane.b32.xlu0 %v1114, 12
      %v1416 = vpop.permute.xlu0 %1415
      %1417 = vrot.lane.b32.xlu0 %v1115, 12
      %v1418 = vpop.permute.xlu0 %1417
      %1419 = vrot.lane.b32.xlu0 %v1116, 12
      %v1420 = vpop.permute.xlu0 %1419
      %1421 = vrot.lane.b32.xlu0 %v1117, 12
      %v1422 = vpop.permute.xlu0 %1421
      %1431 = vrot.lane.b32.xlu0 %v1295, 16
      %v1432 = vpop.permute.xlu0 %1431
      %1433 = vrot.lane.b32.xlu0 %v1296, 16
      %v1434 = vpop.permute.xlu0 %1433
      %1435 = vrot.lane.b32.xlu0 %v1297, 16
      %v1436 = vpop.permute.xlu0 %1435
      %1437 = vrot.lane.b32.xlu0 %v1298, 16
      %v1438 = vpop.permute.xlu0 %1437
      %1439 = vrot.lane.b32.xlu0 %v1299, 16
      %v1440 = vpop.permute.xlu0 %1439
      %1441 = vrot.lane.b32.xlu0 %v1300, 16
      %v1442 = vpop.permute.xlu0 %1441
      %1443 = vrot.lane.b32.xlu0 %v1301, 16
      %v1444 = vpop.permute.xlu0 %1443
      %1445 = vrot.lane.b32.xlu0 %v1302, 16
      %v1446 = vpop.permute.xlu0 %1445
      %v1448 = vshrl.u32 %v1110, 16
      %v1450 = vshll.u32 %v1110, 16
      %v1452 = vrot.slane %v1450, 1
      %v1453 = vor.u32 %v1448, %v1452
      %v1455 = vshrl.u32 %v1111, 16
      %v1457 = vshll.u32 %v1111, 16
      %v1459 = vrot.slane %v1457, 1
      %v1460 = vor.u32 %v1455, %v1459
      %v1462 = vshrl.u32 %v1112, 16
      %v1464 = vshll.u32 %v1112, 16
      %v1466 = vrot.slane %v1464, 1
      %v1467 = vor.u32 %v1462, %v1466
      %v1469 = vshrl.u32 %v1113, 16
      %v1471 = vshll.u32 %v1113, 16
      %v1473 = vrot.slane %v1471, 1
      %v1474 = vor.u32 %v1469, %v1473
      %v1476 = vshrl.u32 %v1114, 16
      %v1478 = vshll.u32 %v1114, 16
      %v1480 = vrot.slane %v1478, 1
      %v1481 = vor.u32 %v1476, %v1480
      %v1483 = vshrl.u32 %v1115, 16
      %v1485 = vshll.u32 %v1115, 16
      %v1487 = vrot.slane %v1485, 1
      %v1488 = vor.u32 %v1483, %v1487
      %v1490 = vshrl.u32 %v1116, 16
      %v1492 = vshll.u32 %v1116, 16
      %v1494 = vrot.slane %v1492, 1
      %v1495 = vor.u32 %v1490, %v1494
      %v1497 = vshrl.u32 %v1117, 16
      %v1499 = vshll.u32 %v1117, 16
      %v1501 = vrot.slane %v1499, 1
      %v1502 = vor.u32 %v1497, %v1501
      %1503 = vrot.lane.b32.xlu0 %v1453, 20
      %v1504 = vpop.permute.xlu0 %1503
      %1505 = vrot.lane.b32.xlu0 %v1460, 20
      %v1506 = vpop.permute.xlu0 %1505
      %1507 = vrot.lane.b32.xlu0 %v1467, 20
      %v1508 = vpop.permute.xlu0 %1507
      %1509 = vrot.lane.b32.xlu0 %v1474, 20
      %v1510 = vpop.permute.xlu0 %1509
      %1511 = vrot.lane.b32.xlu0 %v1481, 20
      %v1512 = vpop.permute.xlu0 %1511
      %1513 = vrot.lane.b32.xlu0 %v1488, 20
      %v1514 = vpop.permute.xlu0 %1513
      %1515 = vrot.lane.b32.xlu0 %v1495, 20
      %v1516 = vpop.permute.xlu0 %1515
      %1517 = vrot.lane.b32.xlu0 %v1502, 20
      %v1518 = vpop.permute.xlu0 %1517
      %1527 = vrot.lane.b32.xlu0 %v717, 24
      %v1528 = vpop.permute.xlu0 %1527
      %1529 = vrot.lane.b32.xlu0 %v718, 24
      %v1530 = vpop.permute.xlu0 %1529
      %1531 = vrot.lane.b32.xlu0 %v719, 24
      %v1532 = vpop.permute.xlu0 %1531
      %1533 = vrot.lane.b32.xlu0 %v720, 24
      %v1534 = vpop.permute.xlu0 %1533
      %1535 = vrot.lane.b32.xlu0 %v721, 24
      %v1536 = vpop.permute.xlu0 %1535
      %1537 = vrot.lane.b32.xlu0 %v722, 24
      %v1538 = vpop.permute.xlu0 %1537
      %1539 = vrot.lane.b32.xlu0 %v723, 24
      %v1540 = vpop.permute.xlu0 %1539
      %1541 = vrot.lane.b32.xlu0 %v724, 24
      %v1542 = vpop.permute.xlu0 %1541
      %1544 = vrot.lane.b32.xlu0 %v925, 28
      %v1545 = vpop.permute.xlu0 %1544
      %1546 = vrot.lane.b32.xlu0 %v926, 28
      %v1547 = vpop.permute.xlu0 %1546
      %1548 = vrot.lane.b32.xlu0 %v927, 28
      %v1549 = vpop.permute.xlu0 %1548
      %1550 = vrot.lane.b32.xlu0 %v928, 28
      %v1551 = vpop.permute.xlu0 %1550
      %1552 = vrot.lane.b32.xlu0 %v929, 28
      %v1553 = vpop.permute.xlu0 %1552
      %1554 = vrot.lane.b32.xlu0 %v930, 28
      %v1555 = vpop.permute.xlu0 %1554
      %1556 = vrot.lane.b32.xlu0 %v931, 28
      %v1557 = vpop.permute.xlu0 %1556
      %1558 = vrot.lane.b32.xlu0 %v932, 28
      %v1559 = vpop.permute.xlu0 %1558
      %v1561 = vshrl.u32 %v724, 16
      %v1563 = vshll.u32 %v724, 16
      %v1565 = vrot.slane %v1563, 1
      %v1566 = vor.u32 %v1561, %v1565
      %1567 = vrot.lane.b32.xlu0 %v1340, 32
      %v1568 = vpop.permute.xlu0 %1567
      %1569 = vrot.lane.b32.xlu0 %v1347, 32
      %v1570 = vpop.permute.xlu0 %1569
      %1571 = vrot.lane.b32.xlu0 %v1354, 32
      %v1572 = vpop.permute.xlu0 %1571
      %1573 = vrot.lane.b32.xlu0 %v1361, 32
      %v1574 = vpop.permute.xlu0 %1573
      %1575 = vrot.lane.b32.xlu0 %v1368, 32
      %v1576 = vpop.permute.xlu0 %1575
      %1577 = vrot.lane.b32.xlu0 %v1375, 32
      %v1578 = vpop.permute.xlu0 %1577
      %1579 = vrot.lane.b32.xlu0 %v1382, 32
      %v1580 = vpop.permute.xlu0 %1579
      %1581 = vrot.lane.b32.xlu0 %v1566, 32
      %v1582 = vpop.permute.xlu0 %1581
      %vm1583 = vcmask 31744
      %v1585 = vsel %vm1583, %v716, %v1312
      %v1587 = vsel %vm1583, %v717, %v1314
      %v1589 = vsel %vm1583, %v718, %v1316
      %v1591 = vsel %vm1583, %v719, %v1318
      %v1593 = vsel %vm1583, %v720, %v1320
      %v1595 = vsel %vm1583, %v721, %v1322
      %v1597 = vsel %vm1583, %v722, %v1324
      %v1599 = vsel %vm1583, %v723, %v1326
      %vm1600 = vcmask 64512
      %v1602 = vsel %vm1600, %v1585, %v1384
      %v1604 = vsel %vm1600, %v1587, %v1386
      %v1606 = vsel %vm1600, %v1589, %v1388
      %v1608 = vsel %vm1600, %v1591, %v1390
      %v1610 = vsel %vm1600, %v1593, %v1392
      %v1612 = vsel %vm1600, %v1595, %v1394
      %v1614 = vsel %vm1600, %v1597, %v1396
      %v1616 = vsel %vm1600, %v1599, %v1398
      %vm1617 = vcmask 97280
      %v1619 = vsel %vm1617, %v1602, %v1408
      %v1621 = vsel %vm1617, %v1604, %v1410
      %v1623 = vsel %vm1617, %v1606, %v1412
      %v1625 = vsel %vm1617, %v1608, %v1414
      %v1627 = vsel %vm1617, %v1610, %v1416
      %v1629 = vsel %vm1617, %v1612, %v1418
      %v1631 = vsel %vm1617, %v1614, %v1420
      %v1633 = vsel %vm1617, %v1616, %v1422
      %vm1634 = vcmask 130048
      %v1636 = vsel %vm1634, %v1619, %v1432
      %v1638 = vsel %vm1634, %v1621, %v1434
      %v1640 = vsel %vm1634, %v1623, %v1436
      %v1642 = vsel %vm1634, %v1625, %v1438
      %v1644 = vsel %vm1634, %v1627, %v1440
      %v1646 = vsel %vm1634, %v1629, %v1442
      %v1648 = vsel %vm1634, %v1631, %v1444
      %v1650 = vsel %vm1634, %v1633, %v1446
      %vm1651 = vcmask 162816
      %v1653 = vsel %vm1651, %v1636, %v1504
      %v1655 = vsel %vm1651, %v1638, %v1506
      %v1657 = vsel %vm1651, %v1640, %v1508
      %v1659 = vsel %vm1651, %v1642, %v1510
      %v1661 = vsel %vm1651, %v1644, %v1512
      %v1663 = vsel %vm1651, %v1646, %v1514
      %v1665 = vsel %vm1651, %v1648, %v1516
      %v1667 = vsel %vm1651, %v1650, %v1518
      %vm1668 = vcmask 195584
      %v1670 = vsel %vm1668, %v1653, %v1528
      %v1672 = vsel %vm1668, %v1655, %v1530
      %v1674 = vsel %vm1668, %v1657, %v1532
      %v1676 = vsel %vm1668, %v1659, %v1534
      %v1678 = vsel %vm1668, %v1661, %v1536
      %v1680 = vsel %vm1668, %v1663, %v1538
      %v1682 = vsel %vm1668, %v1665, %v1540
      %v1684 = vsel %vm1668, %v1667, %v1542
      %vm1685 = vcmask 228352
      %v1687 = vsel %vm1685, %v1670, %v1545
      %v1689 = vsel %vm1685, %v1672, %v1547
      %v1691 = vsel %vm1685, %v1674, %v1549
      %v1693 = vsel %vm1685, %v1676, %v1551
      %v1695 = vsel %vm1685, %v1678, %v1553
      %v1697 = vsel %vm1685, %v1680, %v1555
      %v1699 = vsel %vm1685, %v1682, %v1557
      %v1701 = vsel %vm1685, %v1684, %v1559
      %vm1702 = vcmask 261120
      %v1704 = vsel %vm1702, %v1687, %v1568
      %v1706 = vsel %vm1702, %v1689, %v1570
      %v1708 = vsel %vm1702, %v1691, %v1572
      %v1710 = vsel %vm1702, %v1693, %v1574
      %v1712 = vsel %vm1702, %v1695, %v1576
      %v1714 = vsel %vm1702, %v1697, %v1578
      %v1716 = vsel %vm1702, %v1699, %v1580
      %v1718 = vsel %vm1702, %v1701, %v1582
      %v1719 = vld [vmem:[%s7] sm:$0xf]
      %v1720 = vld [vmem:[%s7 + $0x4] sm:$0xf]
      %v1721 = vld [vmem:[%s7 + $0x8] sm:$0xf]
      %v1722 = vld [vmem:[%s7 + $0xc] sm:$0xf]
      %v1723 = vld [vmem:[%s7 + $0x10] sm:$0x3]
      %v1732 = vunpack.c.l.b16 %v1704
      %v1733 = vunpack.c.l.b16 %v1706
      %v1734 = vunpack.c.l.b16 %v1708
      %v1735 = vunpack.c.l.b16 %v1710
      %v1736 = vunpack.c.l.b16 %v1712
      %v1737 = vunpack.c.l.b16 %v1714
      %v1738 = vunpack.c.l.b16 %v1716
      %v1739 = vunpack.c.l.b16 %v1718
      %v1740 = vpack.c.b16 %v1733, %v1732
      %v1741 = vpack.c.b16 %v1735, %v1734
      %v1742 = vpack.c.b16 %v1737, %v1736
      %v1743 = vpack.c.b16 %v1739, %v1738
      %v1749 = vunpack.c.l.b16 %v1719
      %v1750 = vunpack.c.l.b16 %v1720
      %v1751 = vunpack.c.l.b16 %v1721
      %v1752 = vunpack.c.l.b16 %v1722
      %v1753 = vunpack.c.l.b16 %v1723
      %v1754 = vpack.c.b16 %v1750, %v1749
      %v1755 = vpack.c.b16 %v1752, %v1751
      %v1756 = vpack.c.b16 %v1753, %v1753
      %vm1759 = vcmask 293888
      %v1761 = vsel %vm1759, %v1740, 0
      %v1764 = vsel %vm1759, %v1741, 0
      %v1767 = vsel %vm1759, %v1742, 0
      %v1770 = vsel %vm1759, %v1743, 0
      %vm1772 = vcmask 1041408
      %v1774 = vsel %vm1772, %v1756, 0
      %1776 = vmatprep.subr.bf16.mxu0 0
      %1777 = vmatpush1.bf16.msra.mxu0 %v1754
      %1778 = vmatprep.subr.bf16.mxu0 0
      %1779 = vmatpush1.bf16.msra.mxu0 %v1755
      %1780 = vmatprep.subr.bf16.mxu0 0
      %1781 = vmatpush1.bf16.msra.mxu0 %v1774
      %1782 = vmatprep.subr.bf16.mxu0 0
      %1783 = vmatpush1.bf16.msra.mxu0 0
      %1784 = vmatprep.subr.bf16.mxu0 0
      %1785 = vmatpush1.bf16.msra.mxu0 0
      %1786 = vmatprep.subr.bf16.mxu0 0
      %1787 = vmatpush1.bf16.msra.mxu0 0
      %1788 = vmatprep.subr.bf16.mxu0 0
      %1789 = vmatpush1.bf16.msra.mxu0 0
      %1790 = vmatprep.subr.bf16.mxu0 0
      %1791 = vmatpush1.bf16.msra.mxu0 0
      %1792 = vmatprep.subr.bf16.mxu0 0
      %1793 = vmatpush1.bf16.msra.mxu0 0
      %1794 = vmatprep.subr.bf16.mxu0 0
      %1795 = vmatpush1.bf16.msra.mxu0 0
      %1796 = vmatprep.subr.bf16.mxu0 0
      %1797 = vmatpush1.bf16.msra.mxu0 0
      %1798 = vmatprep.subr.bf16.mxu0 0
      %1799 = vmatpush1.bf16.msra.mxu0 0
      %1800 = vmatprep.subr.bf16.mxu0 0
      %1801 = vmatpush1.bf16.msra.mxu0 0
      %1802 = vmatprep.subr.bf16.mxu0 0
      %1803 = vmatpush1.bf16.msra.mxu0 0
      %1804 = vmatprep.subr.bf16.mxu0 0
      %1805 = vmatpush1.bf16.msra.mxu0 0
      %1806 = vmatprep.subr.bf16.mxu0 0
      %1807 = vmatpush1.bf16.msra.mxu0 0
      %1808 = vmatprep.mubr.bf16.mxu0 0
      %1809 = vmatmul.mubr.bf16.gmra.mrb[0].mxu0 %v1761
      %v1810 = vpop.f32.mrb[0].mxu0
      %v1811 = vadd.f32 0.0, %v1810
      %v1812 = vpop.f32.mrb[0].mxu0
      %v1813 = vpop.f32.mrb[0].mxu0
      %v1814 = vadd.f32 0.0, %v1813
      %v1815 = vpop.f32.mrb[0].mxu0
      %1816 = vmatprep.mubr.bf16.mxu0 0
      %1817 = vmatmul.mubr.bf16.gmra.mrb[0].mxu0 %v1764
      %v1818 = vpop.f32.mrb[0].mxu0
      %v1819 = vadd.f32 0.0, %v1818
      %v1820 = vpop.f32.mrb[0].mxu0
      %v1821 = vpop.f32.mrb[0].mxu0
      %v1822 = vadd.f32 0.0, %v1821
      %v1823 = vpop.f32.mrb[0].mxu0
      %1824 = vmatprep.mubr.bf16.mxu0 0
      %1825 = vmatmul.mubr.bf16.gmra.mrb[0].mxu0 %v1767
      %v1826 = vpop.f32.mrb[0].mxu0
      %v1827 = vadd.f32 0.0, %v1826
      %v1828 = vpop.f32.mrb[0].mxu0
      %v1829 = vpop.f32.mrb[0].mxu0
      %v1830 = vadd.f32 0.0, %v1829
      %v1831 = vpop.f32.mrb[0].mxu0
      %1832 = vmatprep.mubr.bf16.mxu0 0
      %1833 = vmatmul.mubr.bf16.gmra.mrb[0].mxu0 %v1770
      %v1834 = vpop.f32.mrb[0].mxu0
      %v1835 = vadd.f32 0.0, %v1834
      %v1836 = vpop.f32.mrb[0].mxu0
      %v1837 = vpop.f32.mrb[0].mxu0
      %v1838 = vadd.f32 0.0, %v1837
      %v1839 = vpop.f32.mrb[0].mxu0
      %1840 = vdwg.mxu0
      %v1841 = vsel %vm1600, %v1811, 0.0
      %v1842 = vsel %vm1600, %v1814, 0.0
      %v1843 = vadd.f32 %v1841, %v1842
      %v1844 = vsel %vm1600, %v1819, 0.0
      %v1845 = vadd.f32 %v1843, %v1844
      %v1846 = vsel %vm1600, %v1822, 0.0
      %v1847 = vadd.f32 %v1845, %v1846
      %v1848 = vsel %vm1600, %v1827, 0.0
      %v1849 = vadd.f32 %v1847, %v1848
      %v1850 = vsel %vm1600, %v1830, 0.0
      %v1851 = vadd.f32 %v1849, %v1850
      %v1852 = vsel %vm1600, %v1835, 0.0
      %v1853 = vadd.f32 %v1851, %v1852
      %v1854 = vsel %vm1600, %v1838, 0.0
      %v1855 = vadd.f32 %v1853, %v1854
      %v1856 = vrot.slane %v1855, 4
      %v1857 = vadd.f32 %v1855, %v1856
      %v1858 = vrot.slane %v1857, 2
      %v1859 = vadd.f32 %v1857, %v1858
      %v1860 = vrot.slane %v1859, 1
      %v1861 = vadd.f32 %v1859, %v1860
      %vm1862 = vcmask 57344
      %1863 = vst.msk [vmem:[%s499] sm:$0x1] %vm1862, %v1861
      %v1864 = vmul.f32 %v1811, %v1811
      %v1865 = vmul.f32 %v1814, %v1814
      %v1866 = vmul.f32 %v1819, %v1819
      %v1867 = vmul.f32 %v1822, %v1822
      %v1868 = vmul.f32 %v1827, %v1827
      %v1869 = vmul.f32 %v1830, %v1830
      %v1870 = vmul.f32 %v1835, %v1835
      %v1871 = vmul.f32 %v1838, %v1838
      %v1872 = vsel %vm1600, %v1864, 0.0
      %v1873 = vsel %vm1600, %v1865, 0.0
      %v1874 = vadd.f32 %v1872, %v1873
      %v1875 = vsel %vm1600, %v1866, 0.0
      %v1876 = vadd.f32 %v1874, %v1875
      %v1877 = vsel %vm1600, %v1867, 0.0
      %v1878 = vadd.f32 %v1876, %v1877
      %v1879 = vsel %vm1600, %v1868, 0.0
      %v1880 = vadd.f32 %v1878, %v1879
      %v1881 = vsel %vm1600, %v1869, 0.0
      %v1882 = vadd.f32 %v1880, %v1881
      %v1883 = vsel %vm1600, %v1870, 0.0
      %v1884 = vadd.f32 %v1882, %v1883
      %v1885 = vsel %vm1600, %v1871, 0.0
      %v1886 = vadd.f32 %v1884, %v1885
      %v1887 = vrot.slane %v1886, 4
      %v1888 = vadd.f32 %v1886, %v1887
      %v1889 = vrot.slane %v1888, 2
      %v1890 = vadd.f32 %v1888, %v1889
      %v1891 = vrot.slane %v1890, 1
      %v1892 = vadd.f32 %v1890, %v1891
      %1893 = vst.msk [vmem:[%s502] sm:$0x1] %vm1862, %v1892
      %v1894 = vld [vmem:[%s8] sm:$0x3]
      %v1895 = vunpack.c.l.b16 %v1295
      %v1896 = vunpack.c.l.b16 %v1296
      %v1897 = vunpack.c.l.b16 %v1297
      %v1898 = vunpack.c.l.b16 %v1298
      %v1899 = vunpack.c.l.b16 %v1299
      %v1900 = vunpack.c.l.b16 %v1300
      %v1901 = vunpack.c.l.b16 %v1301
      %v1902 = vunpack.c.l.b16 %v1302
      %v1903 = vpack.c.b16 %v1896, %v1895
      %v1904 = vpack.c.b16 %v1898, %v1897
      %v1905 = vpack.c.b16 %v1900, %v1899
      %v1906 = vpack.c.b16 %v1902, %v1901
      %v1908 = vsel %vm1583, %v1903, 0
      %v1911 = vsel %vm1583, %v1904, 0
      %v1914 = vsel %vm1583, %v1905, 0
      %v1917 = vsel %vm1583, %v1906, 0
      %v1920 = vsel %vm1772, %v1894, 0
      %1922 = vmatprep.subr.bf16.mxu0 0
      %1923 = vmatpush1.bf16.msra.mxu0 %v1920
      %1924 = vmatprep.subr.bf16.mxu0 0
      %1925 = vmatpush1.bf16.msra.mxu0 0
      %1926 = vmatprep.subr.bf16.mxu0 0
      %1927 = vmatpush1.bf16.msra.mxu0 0
      %1928 = vmatprep.subr.bf16.mxu0 0
      %1929 = vmatpush1.bf16.msra.mxu0 0
      %1930 = vmatprep.subr.bf16.mxu0 0
      %1931 = vmatpush1.bf16.msra.mxu0 0
      %1932 = vmatprep.subr.bf16.mxu0 0
      %1933 = vmatpush1.bf16.msra.mxu0 0
      %1934 = vmatprep.subr.bf16.mxu0 0
      %1935 = vmatpush1.bf16.msra.mxu0 0
      %1936 = vmatprep.subr.bf16.mxu0 0
      %1937 = vmatpush1.bf16.msra.mxu0 0
      %1938 = vmatprep.subr.bf16.mxu0 0
      %1939 = vmatpush1.bf16.msra.mxu0 0
      %1940 = vmatprep.subr.bf16.mxu0 0
      %1941 = vmatpush1.bf16.msra.mxu0 0
      %1942 = vmatprep.subr.bf16.mxu0 0
      %1943 = vmatpush1.bf16.msra.mxu0 0
      %1944 = vmatprep.subr.bf16.mxu0 0
      %1945 = vmatpush1.bf16.msra.mxu0 0
      %1946 = vmatprep.subr.bf16.mxu0 0
      %1947 = vmatpush1.bf16.msra.mxu0 0
      %1948 = vmatprep.subr.bf16.mxu0 0
      %1949 = vmatpush1.bf16.msra.mxu0 0
      %1950 = vmatprep.subr.bf16.mxu0 0
      %1951 = vmatpush1.bf16.msra.mxu0 0
      %1952 = vmatprep.subr.bf16.mxu0 0
      %1953 = vmatpush1.bf16.msra.mxu0 0
      %1954 = vmatprep.mubr.bf16.mxu0 0
      %1955 = vmatmul.mubr.bf16.gmra.mrb[0].mxu0 %v1908
      %v1956 = vpop.f32.mrb[0].mxu0
      %v1957 = vadd.f32 0.0, %v1956
      %v1958 = vpop.f32.mrb[0].mxu0
      %v1959 = vpop.f32.mrb[0].mxu0
      %v1960 = vadd.f32 0.0, %v1959
      %v1961 = vpop.f32.mrb[0].mxu0
      %1962 = vmatprep.mubr.bf16.mxu0 0
      %1963 = vmatmul.mubr.bf16.gmra.mrb[0].mxu0 %v1911
      %v1964 = vpop.f32.mrb[0].mxu0
      %v1965 = vadd.f32 0.0, %v1964
      %v1966 = vpop.f32.mrb[0].mxu0
      %v1967 = vpop.f32.mrb[0].mxu0
      %v1968 = vadd.f32 0.0, %v1967
      %v1969 = vpop.f32.mrb[0].mxu0
      %1970 = vmatprep.mubr.bf16.mxu0 0
      %1971 = vmatmul.mubr.bf16.gmra.mrb[0].mxu0 %v1914
      %v1972 = vpop.f32.mrb[0].mxu0
      %v1973 = vadd.f32 0.0, %v1972
      %v1974 = vpop.f32.mrb[0].mxu0
      %v1975 = vpop.f32.mrb[0].mxu0
      %v1976 = vadd.f32 0.0, %v1975
      %v1977 = vpop.f32.mrb[0].mxu0
      %1978 = vmatprep.mubr.bf16.mxu0 0
      %1979 = vmatmul.mubr.bf16.gmra.mrb[0].mxu0 %v1917
      %v1980 = vpop.f32.mrb[0].mxu0
      %v1981 = vadd.f32 0.0, %v1980
      %v1982 = vpop.f32.mrb[0].mxu0
      %v1983 = vpop.f32.mrb[0].mxu0
      %v1984 = vadd.f32 0.0, %v1983
      %v1985 = vpop.f32.mrb[0].mxu0
      %1986 = vdwg.mxu0
      %1987 = vst.msk [vmem:[%s496] sm:$0xff] %vm1600, %v1957
      %1988 = vst.msk [vmem:[%s496 + $0x8] sm:$0xff] %vm1600, %v1960
      %1989 = vst.msk [vmem:[%s496 + $0x10] sm:$0xff] %vm1600, %v1965
      %1990 = vst.msk [vmem:[%s496 + $0x18] sm:$0xff] %vm1600, %v1968
      %1991 = vst.msk [vmem:[%s496 + $0x20] sm:$0xff] %vm1600, %v1973
      %1992 = vst.msk [vmem:[%s496 + $0x28] sm:$0xff] %vm1600, %v1976
      %1993 = vst.msk [vmem:[%s496 + $0x30] sm:$0xff] %vm1600, %v1981
      %1994 = vst.msk [vmem:[%s496 + $0x38] sm:$0xff] %vm1600, %v1984
      %1995 = vst.msk [vmem:[%s491] sm:$0xff] %vm1600, %v1811
      %1996 = vst.msk [vmem:[%s491 + $0x8] sm:$0xff] %vm1600, %v1814
      %1997 = vst.msk [vmem:[%s491 + $0x10] sm:$0xff] %vm1600, %v1819
      %1998 = vst.msk [vmem:[%s491 + $0x18] sm:$0xff] %vm1600, %v1822
      %1999 = vst.msk [vmem:[%s491 + $0x20] sm:$0xff] %vm1600, %v1827
      %2000 = vst.msk [vmem:[%s491 + $0x28] sm:$0xff] %vm1600, %v1830
      %2001 = vst.msk [vmem:[%s491 + $0x30] sm:$0xff] %vm1600, %v1835
      %2002 = vst.msk [vmem:[%s491 + $0x38] sm:$0xff] %vm1600, %v1838
      %p2003 = scmp.lt.s32.totalorder %s24, 1
      %s2004 = scalar_select %p2003, %s24, 1
      %s2005 = smul.addr %s2004, 8
      %s2006 = smul.addr %s2005, 8
      %s2007 = scalar_lea.vmem %s9, %s2006
      %p2008 = scmp.lt.s32.totalorder %s24, 1
      %s2009 = scalar_select %p2008, %s24, 1
      %s2010 = smul.addr %s2009, 8
      %s2011 = smul.addr %s2010, 8
      %s2012 = scalar_lea.vmem %s10, %s2011
      %p2013 = scmp.lt.s32.totalorder %s24, 1
      %s2014 = scalar_select %p2013, %s24, 1
      %s2015 = scalar_lea.vmem %s11, %s2014
      %p2016 = scmp.lt.s32.totalorder %s24, 1
      %s2017 = scalar_select %p2016, %s24, 1
      %s2018 = scalar_lea.vmem %s12, %s2017
      // Predicated region
      $region57: #{_lambda_.4} parent=55 // pred_check
        %p2019 = pneg %p251
      $region58: #{_lambda_.4} parent=55 // pred_check_branch
        %2021 = sbr.rel (%p2019) target = $region60
      $region59: #{_lambda_.4} parent=55 // pred_region
        _
      $region60: #{_lambda_.4} parent=55 // pred_fallthru
        _
      // Predicated region
      $region61: #{_lambda_.4} parent=55 // pred_check
        %p2022 = pneg %p277
      $region62: #{_lambda_.4} parent=55 // pred_check_branch
        %2024 = sbr.rel (%p2022) target = $region64
      $region63: #{_lambda_.4} parent=55 // pred_region
        _
      $region64: #{_lambda_.4} parent=55 // pred_fallthru
        _
      // Predicated region
      $region65: #{_lambda_.4} parent=55 // pred_check
        %p2025 = pneg %p303
      $region66: #{_lambda_.4} parent=55 // pred_check_branch
        %2027 = sbr.rel (%p2025) target = $region68
      $region67: #{_lambda_.4} parent=55 // pred_region
        _
      $region68: #{_lambda_.4} parent=55 // pred_fallthru
        _
      // Predicated region
      $region69: #{_lambda_.4} parent=55 // pred_check
        %p2028 = pneg %p329
      $region70: #{_lambda_.4} parent=55 // pred_check_branch
        %2030 = sbr.rel (%p2028) target = $region72
      $region71: #{_lambda_.4} parent=55 // pred_region
        _
      $region72: #{_lambda_.4} parent=55 // pred_fallthru
        _
    $region56: #{_lambda_.4} parent=5 // pred_fallthru
      _
    %p2031 = scmp.le.s32.totalorder 2, %s19
    // Predicated region
    $region73: #{_lambda_.4} parent=5 // pred_check
      %p2032 = pneg %p2031
    $region74: #{_lambda_.4} parent=5 // pred_check_branch
      %2034 = sbr.rel (%p2032) target = $region76
    $region75: #{_lambda_.4} parent=5 // pred_region
      %s2035 = ssub.s32 %s19, 2
      // Predicated region
      $region77: #{_lambda_.4} parent=75 // pred_check
        %p2036 = pneg %p257
      $region78: #{_lambda_.4} parent=75 // pred_check_branch
        %2038 = sbr.rel (%p2036) target = $region80
      $region79: #{_lambda_.4} parent=75 // pred_region
        %p2039 = scmp.lt.s32.totalorder %s25, 1
        %s2040 = scalar_select %p2039, %s25, 1
        %s2041 = smul.addr %s2040, 8
        %s2042 = smul.addr %s2041, 8
        %s2043 = scalar_lea.vmem %s9, %s2042
      $region80: #{_lambda_.4} parent=75 // pred_fallthru
        _
      // Predicated region
      $region81: #{_lambda_.4} parent=75 // pred_check
        %p2044 = pneg %p283
      $region82: #{_lambda_.4} parent=75 // pred_check_branch
        %2046 = sbr.rel (%p2044) target = $region84
      $region83: #{_lambda_.4} parent=75 // pred_region
        %p2047 = scmp.lt.s32.totalorder %s25, 1
        %s2048 = scalar_select %p2047, %s25, 1
        %s2049 = smul.addr %s2048, 8
        %s2050 = smul.addr %s2049, 8
        %s2051 = scalar_lea.vmem %s10, %s2050
      $region84: #{_lambda_.4} parent=75 // pred_fallthru
        _
      // Predicated region
      $region85: #{_lambda_.4} parent=75 // pred_check
        %p2052 = pneg %p309
      $region86: #{_lambda_.4} parent=75 // pred_check_branch
        %2054 = sbr.rel (%p2052) target = $region88
      $region87: #{_lambda_.4} parent=75 // pred_region
        %p2055 = scmp.lt.s32.totalorder %s25, 1
        %s2056 = scalar_select %p2055, %s25, 1
        %s2057 = scalar_lea.vmem %s11, %s2056
      $region88: #{_lambda_.4} parent=75 // pred_fallthru
        _
      // Predicated region
      $region89: #{_lambda_.4} parent=75 // pred_check
        %p2058 = pneg %p335
      $region90: #{_lambda_.4} parent=75 // pred_check_branch
        %2060 = sbr.rel (%p2058) target = $region92
      $region91: #{_lambda_.4} parent=75 // pred_region
        %p2061 = scmp.lt.s32.totalorder %s25, 1
        %s2062 = scalar_select %p2061, %s25, 1
        %s2063 = scalar_lea.vmem %s12, %s2062
      $region92: #{_lambda_.4} parent=75 // pred_fallthru
        _
    $region76: #{_lambda_.4} parent=5 // pred_fallthru
      _
  $region6: #{_lambda_.4} parent=0 // loop_footer
    %s23 = sadd.s32 1, %s19
  $region7: #{_lambda_.4} parent=0 // loop_footer_branch
    %18 = sbr.rel target = $region3
  $region8: #{_lambda_.4} parent=0 // loop_exit
    _

// kernel: _lambda_.5
$region0: #{_lambda_.5}
  #allocation0 [shape = 'u32[]', space=smem, size = 0x4, offset = 0x4, fixed_abs, tag = 'smem constant byte address 0x4 - core index']
  #allocation1 [shape = 'u32[144,128]{1,0:T(1,128)}', space=vmem, size = 0x12000, scoped, tag = 'internal scratch']
  #allocation2 [shape = 'bf16[1,10,10,8]{3,2,1,0:T(8,128)(2,1)}', space=vmem, size = 0xa000, scoped, tag = 'scratch operand']
  %s0 = inlined_call_operand.vmem [shape: f32[2,8,8,8], index: 0, kind: input, shape index: {}]
  %s1 = inlined_call_operand.vmem [shape: f32[1,8], index: 1, kind: input, shape index: {}]
  %s2 = inlined_call_operand.vmem [shape: f32[1,8], index: 2, kind: input, shape index: {}]
  %s3 = inlined_call_operand.vmem [shape: bf16[72,8], index: 3, kind: input, shape index: {}]
  %s4 = inlined_call_operand.vmem [shape: f32[2,64,8], index: 4, kind: input, shape index: {}]
  %s5 = inlined_call_operand.vmem [shape: f32[2,64,8], index: 5, kind: output, shape index: {}]
  %s6 = sld [smem:[#allocation0]]
  $region53: #{_lambda_.5} parent=0
    _
  %s8 = ssub.s32 1, %s6
  %s9 = scalar_select 0, %s8, %s6
  loop: start=0, step=1, limit=4
  $region2: #{_lambda_.5} parent=0 // loop_pre_header
    _
  $region3: #{_lambda_.5} parent=0 // loop_header
    %s11 = sphi 0, %s15
    %p12 = scmp.ge.s32.totalorder %s11, 4
    %s21 = sphi 0, %s23
    %s24 = sphi 0, %s21
    %s25 = sphi 0, %s24
    %s41 = sphi 0, %s25
    %s45 = sphi 0, %s45
    %s47 = sphi 0, %s45
    %s48 = sphi 0, %s47
    %s62 = sphi 0, %s48
    %s66 = sphi 0, %s66
    %s68 = sphi 0, %s66
    %s69 = sphi 0, %s68
    %s83 = sphi 0, %s69
    %s87 = sphi 0, %s87
    %s89 = sphi 0, %s87
    %s90 = sphi 0, %s89
    %s104 = sphi 0, %s90
    %s110 = sphi 0, %s112
    %s113 = sphi 0, %s110
    %s114 = sphi 0, %s113
    %s130 = sphi 0, %s114
    %s136 = sphi 0, %s138
    %s139 = sphi 0, %s136
    %s140 = sphi 0, %s139
    %s156 = sphi 0, %s140
  $region4: #{_lambda_.5} parent=0 // loop_header_branch
    %14 = sbr.rel (%p12) target = $region8
  $region5: #{_lambda_.5} parent=0 // loop_body
    %s16 = ssub.s32 %s11, 1
    %s17 = ssub.s32 %s11, 2
    %s18 = sadd.s32 %s11, 1
    %s19 = ssub.s32 %s11, %s18
    %p20 = scmp.eq.s32.totalorder %s19, 0
    %s22 = sadd.s32 %s21, 1
    %s23 = scalar_select %p20, %s21, %s22
    %p26 = pneg %p20
    %p27 = scmp.eq.s32.totalorder %s11, 1
    %p28 = por %p26, %p27
    %p29 = scmp.ne.s32.totalorder %s21, %s24
    %p30 = scmp.eq.s32.totalorder %s11, 0
    %p31 = por %p29, %p30
    %p32 = scmp.ne.s32.totalorder %s21, %s24
    %p33 = scmp.eq.s32.totalorder %s16, 1
    %p34 = por %p32, %p33
    %p35 = scmp.ne.s32.totalorder %s24, %s25
    %p36 = scmp.eq.s32.totalorder %s16, 0
    %p37 = por %p35, %p36
    %p38 = scmp.ne.s32.totalorder %s24, %s25
    %p39 = scmp.eq.s32.totalorder %s17, 1
    %p40 = por %p38, %p39
    %p42 = scmp.ne.s32.totalorder %s25, %s41
    %p43 = scmp.eq.s32.totalorder %s17, 0
    %p44 = por %p42, %p43
    %s46 = sadd.s32 %s45, 1
    %p49 = scmp.eq.s32.totalorder %s11, 1
    %p50 = scmp.ne.s32.totalorder %s45, %s47
    %p51 = scmp.eq.s32.totalorder %s11, 0
    %p52 = por %p50, %p51
    %p53 = scmp.ne.s32.totalorder %s45, %s47
    %p54 = scmp.eq.s32.totalorder %s16, 1
    %p55 = por %p53, %p54
    %p56 = scmp.ne.s32.totalorder %s47, %s48
    %p57 = scmp.eq.s32.totalorder %s16, 0
    %p58 = por %p56, %p57
    %p59 = scmp.ne.s32.totalorder %s47, %s48
    %p60 = scmp.eq.s32.totalorder %s17, 1
    %p61 = por %p59, %p60
    %p63 = scmp.ne.s32.totalorder %s48, %s62
    %p64 = scmp.eq.s32.totalorder %s17, 0
    %p65 = por %p63, %p64
    %s67 = sadd.s32 %s66, 1
    %p70 = scmp.eq.s32.totalorder %s11, 1
    %p71 = scmp.ne.s32.totalorder %s66, %s68
    %p72 = scmp.eq.s32.totalorder %s11, 0
    %p73 = por %p71, %p72
    %p74 = scmp.ne.s32.totalorder %s66, %s68
    %p75 = scmp.eq.s32.totalorder %s16, 1
    %p76 = por %p74, %p75
    %p77 = scmp.ne.s32.totalorder %s68, %s69
    %p78 = scmp.eq.s32.totalorder %s16, 0
    %p79 = por %p77, %p78
    %p80 = scmp.ne.s32.totalorder %s68, %s69
    %p81 = scmp.eq.s32.totalorder %s17, 1
    %p82 = por %p80, %p81
    %p84 = scmp.ne.s32.totalorder %s69, %s83
    %p85 = scmp.eq.s32.totalorder %s17, 0
    %p86 = por %p84, %p85
    %s88 = sadd.s32 %s87, 1
    %p91 = scmp.eq.s32.totalorder %s11, 1
    %p92 = scmp.ne.s32.totalorder %s87, %s89
    %p93 = scmp.eq.s32.totalorder %s11, 0
    %p94 = por %p92, %p93
    %p95 = scmp.ne.s32.totalorder %s87, %s89
    %p96 = scmp.eq.s32.totalorder %s16, 1
    %p97 = por %p95, %p96
    %p98 = scmp.ne.s32.totalorder %s89, %s90
    %p99 = scmp.eq.s32.totalorder %s16, 0
    %p100 = por %p98, %p99
    %p101 = scmp.ne.s32.totalorder %s89, %s90
    %p102 = scmp.eq.s32.totalorder %s17, 1
    %p103 = por %p101, %p102
    %p105 = scmp.ne.s32.totalorder %s90, %s104
    %p106 = scmp.eq.s32.totalorder %s17, 0
    %p107 = por %p105, %p106
    %s108 = ssub.s32 %s11, %s18
    %p109 = scmp.eq.s32.totalorder %s108, 0
    %s111 = sadd.s32 %s110, 1
    %s112 = scalar_select %p109, %s110, %s111
    %p115 = pneg %p109
    %p116 = scmp.eq.s32.totalorder %s11, 1
    %p117 = por %p115, %p116
    %p118 = scmp.ne.s32.totalorder %s110, %s113
    %p119 = scmp.eq.s32.totalorder %s11, 0
    %p120 = por %p118, %p119
    %p121 = scmp.ne.s32.totalorder %s110, %s113
    %p122 = scmp.eq.s32.totalorder %s16, 1
    %p123 = por %p121, %p122
    %p124 = scmp.ne.s32.totalorder %s113, %s114
    %p125 = scmp.eq.s32.totalorder %s16, 0
    %p126 = por %p124, %p125
    %p127 = scmp.ne.s32.totalorder %s113, %s114
    %p128 = scmp.eq.s32.totalorder %s17, 1
    %p129 = por %p127, %p128
    %p131 = scmp.ne.s32.totalorder %s114, %s130
    %p132 = scmp.eq.s32.totalorder %s17, 0
    %p133 = por %p131, %p132
    %s134 = ssub.s32 %s11, %s18
    %p135 = scmp.eq.s32.totalorder %s134, 0
    %s137 = sadd.s32 %s136, 1
    %s138 = scalar_select %p135, %s136, %s137
    %p141 = pneg %p135
    %p142 = scmp.eq.s32.totalorder %s11, 1
    %p143 = por %p141, %p142
    %p144 = scmp.ne.s32.totalorder %s136, %s139
    %p145 = scmp.eq.s32.totalorder %s11, 0
    %p146 = por %p144, %p145
    %p147 = scmp.ne.s32.totalorder %s136, %s139
    %p148 = scmp.eq.s32.totalorder %s16, 1
    %p149 = por %p147, %p148
    %p150 = scmp.ne.s32.totalorder %s139, %s140
    %p151 = scmp.eq.s32.totalorder %s16, 0
    %p152 = por %p150, %p151
    %p153 = scmp.ne.s32.totalorder %s139, %s140
    %p154 = scmp.eq.s32.totalorder %s17, 1
    %p155 = por %p153, %p154
    %p157 = scmp.ne.s32.totalorder %s140, %s156
    %p158 = scmp.eq.s32.totalorder %s17, 0
    %p159 = por %p157, %p158
    %p160 = scmp.le.s32.totalorder 1, %s11
    %p161 = scmp.lt.s32.totalorder %s11, 3
    %p162 = pnand %p160, %p161
    %p163 = pneg %p162
    // Predicated region
    $region9: #{_lambda_.5} parent=5 // pred_check
      _
    $region10: #{_lambda_.5} parent=5 // pred_check_branch
      %165 = sbr.rel (%p162) target = $region12
    $region11: #{_lambda_.5} parent=5 // pred_region
      %s166 = ssub.s32 %s11, 1
      // Predicated region
      $region13: #{_lambda_.5} parent=11 // pred_check
        %p167 = pneg %p58
      $region14: #{_lambda_.5} parent=11 // pred_check_branch
        %169 = sbr.rel (%p167) target = $region16
      $region15: #{_lambda_.5} parent=11 // pred_region
        _
      $region16: #{_lambda_.5} parent=11 // pred_fallthru
        _
      // Predicated region
      $region17: #{_lambda_.5} parent=11 // pred_check
        %p170 = pneg %p79
      $region18: #{_lambda_.5} parent=11 // pred_check_branch
        %172 = sbr.rel (%p170) target = $region20
      $region19: #{_lambda_.5} parent=11 // pred_region
        _
      $region20: #{_lambda_.5} parent=11 // pred_fallthru
        _
      // Predicated region
      $region21: #{_lambda_.5} parent=11 // pred_check
        %p173 = pneg %p100
      $region22: #{_lambda_.5} parent=11 // pred_check_branch
        %175 = sbr.rel (%p173) target = $region24
      $region23: #{_lambda_.5} parent=11 // pred_region
        _
      $region24: #{_lambda_.5} parent=11 // pred_fallthru
        _
    $region12: #{_lambda_.5} parent=5 // pred_fallthru
      _
    %p176 = scmp.lt.s32.totalorder %s11, 2
    // Predicated region
    $region25: #{_lambda_.5} parent=5 // pred_check
      %p177 = pneg %p176
    $region26: #{_lambda_.5} parent=5 // pred_check_branch
      %179 = sbr.rel (%p177) target = $region28
    $region27: #{_lambda_.5} parent=5 // pred_region
      // Predicated region
      $region29: #{_lambda_.5} parent=27 // pred_check
        %p180 = pneg %p31
      $region30: #{_lambda_.5} parent=27 // pred_check_branch
        %182 = sbr.rel (%p180) target = $region32
      $region31: #{_lambda_.5} parent=27 // pred_region
        %p183 = scmp.lt.s32.totalorder %s11, 1
        %s184 = scalar_select %p183, %s11, 1
        %s185 = smul.addr %s184, 8
        %s186 = smul.addr %s185, 8
        %s187 = scalar_lea.vmem %s0, %s186
      $region32: #{_lambda_.5} parent=27 // pred_fallthru
        _
      // Predicated region
      $region33: #{_lambda_.5} parent=27 // pred_check
        %p188 = pneg %p120
      $region34: #{_lambda_.5} parent=27 // pred_check_branch
        %190 = sbr.rel (%p188) target = $region36
      $region35: #{_lambda_.5} parent=27 // pred_region
        %p191 = scmp.lt.s32.totalorder %s11, 1
        %s192 = scalar_select %p191, %s11, 1
        %s193 = smul.addr %s192, 8
        %s194 = smul.addr %s193, 8
        %s195 = scalar_lea.vmem %s4, %s194
      $region36: #{_lambda_.5} parent=27 // pred_fallthru
        _
    $region28: #{_lambda_.5} parent=5 // pred_fallthru
      _
    %p196 = scmp.le.s32.totalorder 1, %s11
    %p197 = scmp.lt.s32.totalorder %s11, 3
    %p198 = pnand %p196, %p197
    %p199 = pneg %p198
    // Predicated region
    $region37: #{_lambda_.5} parent=5 // pred_check
      _
    $region38: #{_lambda_.5} parent=5 // pred_check_branch
      %201 = sbr.rel (%p198) target = $region40
    $region39: #{_lambda_.5} parent=5 // pred_region
      %s202 = ssub.s32 %s11, 1
      %p203 = scmp.lt.s32.totalorder %s16, 1
      %s204 = scalar_select %p203, %s16, 1
      %s205 = smul.addr %s204, 8
      %s206 = smul.addr %s205, 8
      %s207 = scalar_lea.vmem %s0, %s206
      %p208 = pneg %p37
      %p209 = pneg %p34
      %p210 = pneg %p58
      %p211 = pneg %p55
      %p212 = pneg %p79
      %p213 = pneg %p76
      %p214 = pneg %p100
      %p215 = pneg %p97
      %p216 = scmp.lt.s32.totalorder %s16, 1
      %s217 = scalar_select %p216, %s16, 1
      %s218 = smul.addr %s217, 8
      %s219 = smul.addr %s218, 8
      %s220 = scalar_lea.vmem %s4, %s219
      %p221 = pneg %p126
      %p222 = pneg %p123
      %p223 = pneg %p152
      %p224 = pneg %p149
      %p225 = scmp.lt.s32.totalorder %s16, 1
      %s226 = scalar_select %p225, %s16, 1
      %s227 = smul.addr %s226, 8
      %s228 = smul.addr %s227, 8
      %s229 = scalar_lea.vmem %s5, %s228
      %p230 = scmp.lt.s32.totalorder %s16, 1
      %s231 = scalar_select %p230, %s16, 1
      %s232 = smul.addr %s231, 8
      %s233 = smul.addr %s232, 8
      %s234 = scalar_lea.vmem %s0, %s233
      %p235 = scmp.lt.s32.totalorder %s16, 1
      %s236 = scalar_select %p235, %s16, 1
      %s237 = smul.addr %s236, 8
      %s238 = smul.addr %s237, 8
      %s239 = scalar_lea.vmem %s4, %s238
      %p240 = scmp.lt.s32.totalorder %s16, 1
      %s241 = scalar_select %p240, %s16, 1
      %s242 = smul.addr %s241, 8
      %s243 = smul.addr %s242, 8
      %s244 = scalar_lea.vmem %s5, %s243
      %v246 = vld [vmem:[%s1] sm:$0x1]
      %v247 = vld [vmem:[%s2] sm:$0x1]
      %v248 = vld [vmem:[%s234] sm:$0xff]
      %v249 = vld [vmem:[%s234 + $0x8] sm:$0xff]
      %v250 = vld [vmem:[%s234 + $0x10] sm:$0xff]
      %v251 = vld [vmem:[%s234 + $0x18] sm:$0xff]
      %v252 = vld [vmem:[%s234 + $0x20] sm:$0xff]
      %v253 = vld [vmem:[%s234 + $0x28] sm:$0xff]
      %v254 = vld [vmem:[%s234 + $0x30] sm:$0xff]
      %v255 = vld [vmem:[%s234 + $0x38] sm:$0xff]
      %v257 = vlaneseq
      %v258 = vshrl.u32 %v257, 7
      %v259 = vsub.s32 0, %v258
      %v260 = vrot.slane %v246, %v259
      %v262 = vmul.f32 %v248, %v260
      %v263 = vmul.f32 %v249, %v260
      %v264 = vmul.f32 %v250, %v260
      %v265 = vmul.f32 %v251, %v260
      %v266 = vmul.f32 %v252, %v260
      %v267 = vmul.f32 %v253, %v260
      %v268 = vmul.f32 %v254, %v260
      %v269 = vmul.f32 %v255, %v260
      %v271 = vlaneseq
      %v272 = vshrl.u32 %v271, 7
      %v273 = vsub.s32 0, %v272
      %v274 = vrot.slane %v247, %v273
      %v276 = vadd.f32 %v262, %v274
      %v277 = vadd.f32 %v263, %v274
      %v278 = vadd.f32 %v264, %v274
      %v279 = vadd.f32 %v265, %v274
      %v280 = vadd.f32 %v266, %v274
      %v281 = vadd.f32 %v267, %v274
      %v282 = vadd.f32 %v268, %v274
      %v283 = vadd.f32 %v269, %v274
      %v284 = vmax.f32 %v276, 0.0
      %v285 = vmax.f32 %v277, 0.0
      %v286 = vmax.f32 %v278, 0.0
      %v287 = vmax.f32 %v279, 0.0
      %v288 = vmax.f32 %v280, 0.0
      %v289 = vmax.f32 %v281, 0.0
      %v290 = vmax.f32 %v282, 0.0
      %v291 = vmax.f32 %v283, 0.0
      %v292 = vpack.c.bf16 %v284, %v284
      %v293 = vpack.c.bf16 %v285, %v285
      %v294 = vpack.c.bf16 %v286, %v286
      %v295 = vpack.c.bf16 %v287, %v287
      %v296 = vpack.c.bf16 %v288, %v288
      %v297 = vpack.c.bf16 %v289, %v289
      %v298 = vpack.c.bf16 %v290, %v290
      %v299 = vpack.c.bf16 %v291, %v291
      %vm300 = vcmask 60416
      %301 = vst.msk [vmem:[#allocation2] sm:$0xf] %vm300, 0
      %vm302 = vcmask 57344
      %303 = vst.msk [vmem:[#allocation2 + $0x4] sm:$0x1] %vm302, 0
      %304 = vst.msk [vmem:[#allocation2 + $0x8] sm:$0xf] %vm300, 0
      %305 = vst.msk [vmem:[#allocation2 + $0xc] sm:$0x1] %vm302, 0
      %306 = vst.msk [vmem:[#allocation2 + $0x10] sm:$0xf] %vm300, 0
      %307 = vst.msk [vmem:[#allocation2 + $0x14] sm:$0x1] %vm302, 0
      %308 = vst.msk [vmem:[#allocation2 + $0x18] sm:$0xf] %vm300, 0
      %309 = vst.msk [vmem:[#allocation2 + $0x1c] sm:$0x1] %vm302, 0
      %310 = vst.msk [vmem:[#allocation2 + $0x20] sm:$0xf] %vm300, 0
      %311 = vst.msk [vmem:[#allocation2 + $0x24] sm:$0x1] %vm302, 0
      %312 = vst.msk [vmem:[#allocation2 + $0x28] sm:$0xf] %vm300, 0
      %313 = vst.msk [vmem:[#allocation2 + $0x2c] sm:$0x1] %vm302, 0
      %314 = vst.msk [vmem:[#allocation2 + $0x30] sm:$0xf] %vm300, 0
      %315 = vst.msk [vmem:[#allocation2 + $0x34] sm:$0x1] %vm302, 0
      %316 = vst.msk [vmem:[#allocation2 + $0x38] sm:$0xf] %vm300, 0
      %317 = vst.msk [vmem:[#allocation2 + $0x3c] sm:$0x1] %vm302, 0
      %318 = vst.msk [vmem:[#allocation2 + $0x40] sm:$0xf] %vm300, 0
      %319 = vst.msk [vmem:[#allocation2 + $0x44] sm:$0x1] %vm302, 0
      %320 = vst.msk [vmem:[#allocation2 + $0x48] sm:$0xf] %vm300, 0
      %321 = vst.msk [vmem:[#allocation2 + $0x4c] sm:$0x1] %vm302, 0
      %v330 = vunpack.c.l.b16 %v292
      %v331 = vunpack.c.l.b16 %v293
      %v332 = vunpack.c.l.b16 %v294
      %v333 = vunpack.c.l.b16 %v295
      %v334 = vunpack.c.l.b16 %v296
      %v335 = vunpack.c.l.b16 %v297
      %v336 = vunpack.c.l.b16 %v298
      %v337 = vunpack.c.l.b16 %v299
      %v338 = vpack.c.b16 %v330, %v330
      %v339 = vpack.c.b16 %v331, %v331
      %v340 = vpack.c.b16 %v332, %v332
      %v341 = vpack.c.b16 %v333, %v333
      %v342 = vpack.c.b16 %v334, %v334
      %v343 = vpack.c.b16 %v335, %v335
      %v344 = vpack.c.b16 %v336, %v336
      %v345 = vpack.c.b16 %v337, %v337
      %v347 = vshrl.u32 %v338, 16
      %v349 = vrot.slane %v347, 7
      %v350 = vshll.u32 %v338, 16
      %v352 = vor.u32 %v349, %v350
      %v353 = vrot.slane %v349, 4
      %v355 = vshrl.u32 %v339, 16
      %v357 = vrot.slane %v355, 7
      %v358 = vshll.u32 %v339, 16
      %v360 = vor.u32 %v357, %v358
      %v361 = vrot.slane %v357, 4
      %v363 = vshrl.u32 %v340, 16
      %v365 = vrot.slane %v363, 7
      %v366 = vshll.u32 %v340, 16
      %v368 = vor.u32 %v365, %v366
      %v369 = vrot.slane %v365, 4
      %v371 = vshrl.u32 %v341, 16
      %v373 = vrot.slane %v371, 7
      %v374 = vshll.u32 %v341, 16
      %v376 = vor.u32 %v373, %v374
      %v377 = vrot.slane %v373, 4
      %v379 = vshrl.u32 %v342, 16
      %v381 = vrot.slane %v379, 7
      %v382 = vshll.u32 %v342, 16
      %v384 = vor.u32 %v381, %v382
      %v385 = vrot.slane %v381, 4
      %v387 = vshrl.u32 %v343, 16
      %v389 = vrot.slane %v387, 7
      %v390 = vshll.u32 %v343, 16
      %v392 = vor.u32 %v389, %v390
      %v393 = vrot.slane %v389, 4
      %v395 = vshrl.u32 %v344, 16
      %v397 = vrot.slane %v395, 7
      %v398 = vshll.u32 %v344, 16
      %v400 = vor.u32 %v397, %v398
      %v401 = vrot.slane %v397, 4
      %v403 = vshrl.u32 %v345, 16
      %v405 = vrot.slane %v403, 7
      %v406 = vshll.u32 %v345, 16
      %v408 = vor.u32 %v405, %v406
      %v409 = vrot.slane %v405, 4
      %s426 = scalar_lea.vmem [#allocation2], 8
      %vm427 = vcmask 60416
      %vm428 = vsmask.f32 7938
      %vm429 = vmand %vm427, %vm428
      %v430 = vld [vmem:[%s426] sm:$0xf]
      %v431 = vsel %vm429, %v352, %v430
      %432 = vst [vmem:[%s426] sm:$0xf] %v431
      %vm433 = vcmask 57344
      %vm434 = vsmask.f32 256
      %vm435 = vmand %vm433, %vm434
      %v436 = vld [vmem:[%s426 + $0x4] sm:$0x1]
      %v437 = vsel %vm435, %v353, %v436
      %438 = vst [vmem:[%s426 + $0x4] sm:$0x1] %v437
      %v439 = vld [vmem:[%s426 + $0x8] sm:$0xf]
      %v440 = vsel %vm429, %v360, %v439
      %441 = vst [vmem:[%s426 + $0x8] sm:$0xf] %v440
      %v442 = vld [vmem:[%s426 + $0xc] sm:$0x1]
      %v443 = vsel %vm435, %v361, %v442
      %444 = vst [vmem:[%s426 + $0xc] sm:$0x1] %v443
      %v445 = vld [vmem:[%s426 + $0x10] sm:$0xf]
      %v446 = vsel %vm429, %v368, %v445
      %447 = vst [vmem:[%s426 + $0x10] sm:$0xf] %v446
      %v448 = vld [vmem:[%s426 + $0x14] sm:$0x1]
      %v449 = vsel %vm435, %v369, %v448
      %450 = vst [vmem:[%s426 + $0x14] sm:$0x1] %v449
      %v451 = vld [vmem:[%s426 + $0x18] sm:$0xf]
      %v452 = vsel %vm429, %v376, %v451
      %453 = vst [vmem:[%s426 + $0x18] sm:$0xf] %v452
      %v454 = vld [vmem:[%s426 + $0x1c] sm:$0x1]
      %v455 = vsel %vm435, %v377, %v454
      %456 = vst [vmem:[%s426 + $0x1c] sm:$0x1] %v455
      %v457 = vld [vmem:[%s426 + $0x20] sm:$0xf]
      %v458 = vsel %vm429, %v384, %v457
      %459 = vst [vmem:[%s426 + $0x20] sm:$0xf] %v458
      %v460 = vld [vmem:[%s426 + $0x24] sm:$0x1]
      %v461 = vsel %vm435, %v385, %v460
      %462 = vst [vmem:[%s426 + $0x24] sm:$0x1] %v461
      %v463 = vld [vmem:[%s426 + $0x28] sm:$0xf]
      %v464 = vsel %vm429, %v392, %v463
      %465 = vst [vmem:[%s426 + $0x28] sm:$0xf] %v464
      %v466 = vld [vmem:[%s426 + $0x2c] sm:$0x1]
      %v467 = vsel %vm435, %v393, %v466
      %468 = vst [vmem:[%s426 + $0x2c] sm:$0x1] %v467
      %v469 = vld [vmem:[%s426 + $0x30] sm:$0xf]
      %v470 = vsel %vm429, %v400, %v469
      %471 = vst [vmem:[%s426 + $0x30] sm:$0xf] %v470
      %v472 = vld [vmem:[%s426 + $0x34] sm:$0x1]
      %v473 = vsel %vm435, %v401, %v472
      %474 = vst [vmem:[%s426 + $0x34] sm:$0x1] %v473
      %v475 = vld [vmem:[%s426 + $0x38] sm:$0xf]
      %v476 = vsel %vm429, %v408, %v475
      %477 = vst [vmem:[%s426 + $0x38] sm:$0xf] %v476
      %v478 = vld [vmem:[%s426 + $0x3c] sm:$0x1]
      %v479 = vsel %vm435, %v409, %v478
      %480 = vst [vmem:[%s426 + $0x3c] sm:$0x1] %v479
      %v481 = vld [vmem:[#allocation2] sm:$0xf]
      %v482 = vld [vmem:[#allocation2 + $0x8] sm:$0xf]
      %v483 = vld [vmem:[#allocation2 + $0x10] sm:$0xf]
      %v484 = vld [vmem:[#allocation2 + $0x18] sm:$0xf]
      %v485 = vld [vmem:[#allocation2 + $0x20] sm:$0xf]
      %v486 = vld [vmem:[#allocation2 + $0x28] sm:$0xf]
      %v487 = vld [vmem:[#allocation2 + $0x30] sm:$0xf]
      %v488 = vld [vmem:[#allocation2 + $0x38] sm:$0xf]
      %v489 = vld [vmem:[#allocation2 + $0x4] sm:$0x1]
      %v490 = vld [vmem:[#allocation2 + $0xc] sm:$0x1]
      %v491 = vld [vmem:[#allocation2 + $0x14] sm:$0x1]
      %v492 = vld [vmem:[#allocation2 + $0x1c] sm:$0x1]
      %v493 = vld [vmem:[#allocation2 + $0x24] sm:$0x1]
      %v494 = vld [vmem:[#allocation2 + $0x2c] sm:$0x1]
      %v495 = vld [vmem:[#allocation2 + $0x34] sm:$0x1]
      %v496 = vld [vmem:[#allocation2 + $0x3c] sm:$0x1]
      %v497 = vld [vmem:[#allocation2] sm:$0xe]
      %v498 = vld [vmem:[#allocation2 + $0x8] sm:$0xe]
      %v499 = vld [vmem:[#allocation2 + $0x10] sm:$0xe]
      %v500 = vld [vmem:[#allocation2 + $0x18] sm:$0xe]
      %v501 = vld [vmem:[#allocation2 + $0x20] sm:$0xe]
      %v502 = vld [vmem:[#allocation2 + $0x28] sm:$0xe]
      %v503 = vld [vmem:[#allocation2 + $0x30] sm:$0xe]
      %v504 = vld [vmem:[#allocation2 + $0x38] sm:$0xe]
      %v505 = vld [vmem:[%s426] sm:$0xf]
      %v506 = vld [vmem:[%s426 + $0x8] sm:$0xf]
      %v507 = vld [vmem:[%s426 + $0x10] sm:$0xf]
      %v508 = vld [vmem:[%s426 + $0x18] sm:$0xf]
      %v509 = vld [vmem:[%s426 + $0x20] sm:$0xf]
      %v510 = vld [vmem:[%s426 + $0x28] sm:$0xf]
      %v511 = vld [vmem:[%s426 + $0x30] sm:$0xf]
      %v512 = vld [vmem:[%s426 + $0x38] sm:$0xf]
      %v513 = vld [vmem:[%s426 + $0x4] sm:$0x1]
      %v514 = vld [vmem:[%s426 + $0xc] sm:$0x1]
      %v515 = vld [vmem:[%s426 + $0x14] sm:$0x1]
      %v516 = vld [vmem:[%s426 + $0x1c] sm:$0x1]
      %v517 = vld [vmem:[%s426 + $0x24] sm:$0x1]
      %v518 = vld [vmem:[%s426 + $0x2c] sm:$0x1]
      %v519 = vld [vmem:[%s426 + $0x34] sm:$0x1]
      %v520 = vld [vmem:[%s426 + $0x3c] sm:$0x1]
      %v521 = vld [vmem:[%s426] sm:$0xe]
      %v522 = vld [vmem:[%s426 + $0x8] sm:$0xe]
      %v523 = vld [vmem:[%s426 + $0x10] sm:$0xe]
      %v524 = vld [vmem:[%s426 + $0x18] sm:$0xe]
      %v525 = vld [vmem:[%s426 + $0x20] sm:$0xe]
      %v526 = vld [vmem:[%s426 + $0x28] sm:$0xe]
      %v527 = vld [vmem:[%s426 + $0x30] sm:$0xe]
      %v528 = vld [vmem:[%s426 + $0x38] sm:$0xe]
      %s529 = scalar_lea.vmem [#allocation2], 16
      %v530 = vld [vmem:[%s529] sm:$0xf]
      %v531 = vld [vmem:[%s529 + $0x8] sm:$0xf]
      %v532 = vld [vmem:[%s529 + $0x10] sm:$0xf]
      %v533 = vld [vmem:[%s529 + $0x18] sm:$0xf]
      %v534 = vld [vmem:[%s529 + $0x20] sm:$0xf]
      %v535 = vld [vmem:[%s529 + $0x28] sm:$0xf]
      %v536 = vld [vmem:[%s529 + $0x30] sm:$0xf]
      %v537 = vld [vmem:[%s529 + $0x38] sm:$0xf]
      %v538 = vld [vmem:[%s529 + $0x4] sm:$0x1]
      %v539 = vld [vmem:[%s529 + $0xc] sm:$0x1]
      %v540 = vld [vmem:[%s529 + $0x14] sm:$0x1]
      %v541 = vld [vmem:[%s529 + $0x1c] sm:$0x1]
      %v542 = vld [vmem:[%s529 + $0x24] sm:$0x1]
      %v543 = vld [vmem:[%s529 + $0x2c] sm:$0x1]
      %v544 = vld [vmem:[%s529 + $0x34] sm:$0x1]
      %v545 = vld [vmem:[%s529 + $0x3c] sm:$0x1]
      %v546 = vld [vmem:[%s529] sm:$0xe]
      %v547 = vld [vmem:[%s529 + $0x8] sm:$0xe]
      %v548 = vld [vmem:[%s529 + $0x10] sm:$0xe]
      %v549 = vld [vmem:[%s529 + $0x18] sm:$0xe]
      %v550 = vld [vmem:[%s529 + $0x20] sm:$0xe]
      %v551 = vld [vmem:[%s529 + $0x28] sm:$0xe]
      %v552 = vld [vmem:[%s529 + $0x30] sm:$0xe]
      %v553 = vld [vmem:[%s529 + $0x38] sm:$0xe]
      %v570 = vunpack.c.l.b16 %v481
      %v571 = vunpack.c.l.b16 %v489
      %v572 = vunpack.c.l.b16 %v482
      %v573 = vunpack.c.l.b16 %v490
      %v574 = vunpack.c.l.b16 %v483
      %v575 = vunpack.c.l.b16 %v491
      %v576 = vunpack.c.l.b16 %v484
      %v577 = vunpack.c.l.b16 %v492
      %v578 = vunpack.c.l.b16 %v485
      %v579 = vunpack.c.l.b16 %v493
      %v580 = vunpack.c.l.b16 %v486
      %v581 = vunpack.c.l.b16 %v494
      %v582 = vunpack.c.l.b16 %v487
      %v583 = vunpack.c.l.b16 %v495
      %v584 = vunpack.c.l.b16 %v488
      %v585 = vunpack.c.l.b16 %v496
      %v586 = vpack.c.b16 %v571, %v570
      %v587 = vpack.c.b16 %v573, %v572
      %v588 = vpack.c.b16 %v575, %v574
      %v589 = vpack.c.b16 %v577, %v576
      %v590 = vpack.c.b16 %v579, %v578
      %v591 = vpack.c.b16 %v581, %v580
      %v592 = vpack.c.b16 %v583, %v582
      %v593 = vpack.c.b16 %v585, %v584
      %v595 = vshrl.u32 %v586, 16
      %v597 = vshll.u32 %v586, 16
      %v599 = vrot.slane %v597, 1
      %v600 = vor.u32 %v595, %v599
      %v602 = vshrl.u32 %v587, 16
      %v604 = vshll.u32 %v587, 16
      %v606 = vrot.slane %v604, 1
      %v607 = vor.u32 %v602, %v606
      %v609 = vshrl.u32 %v588, 16
      %v611 = vshll.u32 %v588, 16
      %v613 = vrot.slane %v611, 1
      %v614 = vor.u32 %v609, %v613
      %v616 = vshrl.u32 %v589, 16
      %v618 = vshll.u32 %v589, 16
      %v620 = vrot.slane %v618, 1
      %v621 = vor.u32 %v616, %v620
      %v623 = vshrl.u32 %v590, 16
      %v625 = vshll.u32 %v590, 16
      %v627 = vrot.slane %v625, 1
      %v628 = vor.u32 %v623, %v627
      %v630 = vshrl.u32 %v591, 16
      %v632 = vshll.u32 %v591, 16
      %v634 = vrot.slane %v632, 1
      %v635 = vor.u32 %v630, %v634
      %v637 = vshrl.u32 %v592, 16
      %v639 = vshll.u32 %v592, 16
      %v641 = vrot.slane %v639, 1
      %v642 = vor.u32 %v637, %v641
      %v644 = vshrl.u32 %v593, 16
      %v646 = vshll.u32 %v593, 16
      %v648 = vrot.slane %v646, 1
      %v649 = vor.u32 %v644, %v648
      %650 = vrot.lane.b32.xlu0 %v600, 8
      %v651 = vpop.permute.xlu0 %650
      %652 = vrot.lane.b32.xlu0 %v607, 8
      %v653 = vpop.permute.xlu0 %652
      %654 = vrot.lane.b32.xlu0 %v614, 8
      %v655 = vpop.permute.xlu0 %654
      %656 = vrot.lane.b32.xlu0 %v621, 8
      %v657 = vpop.permute.xlu0 %656
      %658 = vrot.lane.b32.xlu0 %v628, 8
      %v659 = vpop.permute.xlu0 %658
      %660 = vrot.lane.b32.xlu0 %v635, 8
      %v661 = vpop.permute.xlu0 %660
      %662 = vrot.lane.b32.xlu0 %v642, 8
      %v663 = vpop.permute.xlu0 %662
      %664 = vrot.lane.b32.xlu0 %v649, 8
      %v665 = vpop.permute.xlu0 %664
      %v674 = vunpack.c.l.b16 %v497
      %v675 = vunpack.c.l.b16 %v498
      %v676 = vunpack.c.l.b16 %v499
      %v677 = vunpack.c.l.b16 %v500
      %v678 = vunpack.c.l.b16 %v501
      %v679 = vunpack.c.l.b16 %v502
      %v680 = vunpack.c.l.b16 %v503
      %v681 = vunpack.c.l.b16 %v504
      %v682 = vpack.c.b16 %v571, %v674
      %v683 = vpack.c.b16 %v573, %v675
      %v684 = vpack.c.b16 %v575, %v676
      %v685 = vpack.c.b16 %v577, %v677
      %v686 = vpack.c.b16 %v579, %v678
      %v687 = vpack.c.b16 %v581, %v679
      %v688 = vpack.c.b16 %v583, %v680
      %v689 = vpack.c.b16 %v585, %v681
      %v690 = vrot.slane %v682, 1
      %v691 = vrot.slane %v683, 1
      %v692 = vrot.slane %v684, 1
      %v693 = vrot.slane %v685, 1
      %v694 = vrot.slane %v686, 1
      %v695 = vrot.slane %v687, 1
      %v696 = vrot.slane %v688, 1
      %v697 = vrot.slane %v689, 1
      %698 = vrot.lane.b32.xlu0 %v690, 16
      %v699 = vpop.permute.xlu0 %698
      %700 = vrot.lane.b32.xlu0 %v691, 16
      %v701 = vpop.permute.xlu0 %700
      %702 = vrot.lane.b32.xlu0 %v692, 16
      %v703 = vpop.permute.xlu0 %702
      %704 = vrot.lane.b32.xlu0 %v693, 16
      %v705 = vpop.permute.xlu0 %704
      %706 = vrot.lane.b32.xlu0 %v694, 16
      %v707 = vpop.permute.xlu0 %706
      %708 = vrot.lane.b32.xlu0 %v695, 16
      %v709 = vpop.permute.xlu0 %708
      %710 = vrot.lane.b32.xlu0 %v696, 16
      %v711 = vpop.permute.xlu0 %710
      %712 = vrot.lane.b32.xlu0 %v697, 16
      %v713 = vpop.permute.xlu0 %712
      %v722 = vunpack.c.l.b16 %v505
      %v723 = vunpack.c.l.b16 %v506
      %v724 = vunpack.c.l.b16 %v507
      %v725 = vunpack.c.l.b16 %v508
      %v726 = vunpack.c.l.b16 %v509
      %v727 = vunpack.c.l.b16 %v510
      %v728 = vunpack.c.l.b16 %v511
      %v729 = vunpack.c.l.b16 %v512
      %v730 = vpack.c.b16 %v722, %v722
      %v731 = vpack.c.b16 %v723, %v723
      %v732 = vpack.c.b16 %v724, %v724
      %v733 = vpack.c.b16 %v725, %v725
      %v734 = vpack.c.b16 %v726, %v726
      %v735 = vpack.c.b16 %v727, %v727
      %v736 = vpack.c.b16 %v728, %v728
      %v737 = vpack.c.b16 %v729, %v729
      %738 = vrot.lane.b32.xlu0 %v730, 24
      %v739 = vpop.permute.xlu0 %738
      %740 = vrot.lane.b32.xlu0 %v731, 24
      %v741 = vpop.permute.xlu0 %740
      %742 = vrot.lane.b32.xlu0 %v732, 24
      %v743 = vpop.permute.xlu0 %742
      %744 = vrot.lane.b32.xlu0 %v733, 24
      %v745 = vpop.permute.xlu0 %744
      %746 = vrot.lane.b32.xlu0 %v734, 24
      %v747 = vpop.permute.xlu0 %746
      %748 = vrot.lane.b32.xlu0 %v735, 24
      %v749 = vpop.permute.xlu0 %748
      %750 = vrot.lane.b32.xlu0 %v736, 24
      %v751 = vpop.permute.xlu0 %750
      %752 = vrot.lane.b32.xlu0 %v737, 24
      %v753 = vpop.permute.xlu0 %752
      %v762 = vunpack.c.l.b16 %v513
      %v763 = vunpack.c.l.b16 %v514
      %v764 = vunpack.c.l.b16 %v515
      %v765 = vunpack.c.l.b16 %v516
      %v766 = vunpack.c.l.b16 %v517
      %v767 = vunpack.c.l.b16 %v518
      %v768 = vunpack.c.l.b16 %v519
      %v769 = vunpack.c.l.b16 %v520
      %v770 = vpack.c.b16 %v762, %v722
      %v771 = vpack.c.b16 %v763, %v723
      %v772 = vpack.c.b16 %v764, %v724
      %v773 = vpack.c.b16 %v765, %v725
      %v774 = vpack.c.b16 %v766, %v726
      %v775 = vpack.c.b16 %v767, %v727
      %v776 = vpack.c.b16 %v768, %v728
      %v777 = vpack.c.b16 %v769, %v729
      %v779 = vshrl.u32 %v770, 16
      %v781 = vshll.u32 %v770, 16
      %v783 = vrot.slane %v781, 1
      %v784 = vor.u32 %v779, %v783
      %v786 = vshrl.u32 %v771, 16
      %v788 = vshll.u32 %v771, 16
      %v790 = vrot.slane %v788, 1
      %v791 = vor.u32 %v786, %v790
      %v793 = vshrl.u32 %v772, 16
      %v795 = vshll.u32 %v772, 16
      %v797 = vrot.slane %v795, 1
      %v798 = vor.u32 %v793, %v797
      %v800 = vshrl.u32 %v773, 16
      %v802 = vshll.u32 %v773, 16
      %v804 = vrot.slane %v802, 1
      %v805 = vor.u32 %v800, %v804
      %v807 = vshrl.u32 %v774, 16
      %v809 = vshll.u32 %v774, 16
      %v811 = vrot.slane %v809, 1
      %v812 = vor.u32 %v807, %v811
      %v814 = vshrl.u32 %v775, 16
      %v816 = vshll.u32 %v775, 16
      %v818 = vrot.slane %v816, 1
      %v819 = vor.u32 %v814, %v818
      %v821 = vshrl.u32 %v776, 16
      %v823 = vshll.u32 %v776, 16
      %v825 = vrot.slane %v823, 1
      %v826 = vor.u32 %v821, %v825
      %v828 = vshrl.u32 %v777, 16
      %v830 = vshll.u32 %v777, 16
      %v832 = vrot.slane %v830, 1
      %v833 = vor.u32 %v828, %v832
      %834 = vrot.lane.b32.xlu0 %v784, 32
      %v835 = vpop.permute.xlu0 %834
      %836 = vrot.lane.b32.xlu0 %v791, 32
      %v837 = vpop.permute.xlu0 %836
      %838 = vrot.lane.b32.xlu0 %v798, 32
      %v839 = vpop.permute.xlu0 %838
      %840 = vrot.lane.b32.xlu0 %v805, 32
      %v841 = vpop.permute.xlu0 %840
      %842 = vrot.lane.b32.xlu0 %v812, 32
      %v843 = vpop.permute.xlu0 %842
      %844 = vrot.lane.b32.xlu0 %v819, 32
      %v845 = vpop.permute.xlu0 %844
      %846 = vrot.lane.b32.xlu0 %v826, 32
      %v847 = vpop.permute.xlu0 %846
      %848 = vrot.lane.b32.xlu0 %v833, 32
      %v849 = vpop.permute.xlu0 %848
      %v858 = vunpack.c.l.b16 %v521
      %v859 = vunpack.c.l.b16 %v522
      %v860 = vunpack.c.l.b16 %v523
      %v861 = vunpack.c.l.b16 %v524
      %v862 = vunpack.c.l.b16 %v525
      %v863 = vunpack.c.l.b16 %v526
      %v864 = vunpack.c.l.b16 %v527
      %v865 = vunpack.c.l.b16 %v528
      %v866 = vpack.c.b16 %v762, %v858
      %v867 = vpack.c.b16 %v763, %v859
      %v868 = vpack.c.b16 %v764, %v860
      %v869 = vpack.c.b16 %v765, %v861
      %v870 = vpack.c.b16 %v766, %v862
      %v871 = vpack.c.b16 %v767, %v863
      %v872 = vpack.c.b16 %v768, %v864
      %v873 = vpack.c.b16 %v769, %v865
      %v874 = vrot.slane %v866, 1
      %v875 = vrot.slane %v867, 1
      %v876 = vrot.slane %v868, 1
      %v877 = vrot.slane %v869, 1
      %v878 = vrot.slane %v870, 1
      %v879 = vrot.slane %v871, 1
      %v880 = vrot.slane %v872, 1
      %v881 = vrot.slane %v873, 1
      %882 = vrot.lane.b32.xlu0 %v874, 40
      %v883 = vpop.permute.xlu0 %882
      %884 = vrot.lane.b32.xlu0 %v875, 40
      %v885 = vpop.permute.xlu0 %884
      %886 = vrot.lane.b32.xlu0 %v876, 40
      %v887 = vpop.permute.xlu0 %886
      %888 = vrot.lane.b32.xlu0 %v877, 40
      %v889 = vpop.permute.xlu0 %888
      %890 = vrot.lane.b32.xlu0 %v878, 40
      %v891 = vpop.permute.xlu0 %890
      %892 = vrot.lane.b32.xlu0 %v879, 40
      %v893 = vpop.permute.xlu0 %892
      %894 = vrot.lane.b32.xlu0 %v880, 40
      %v895 = vpop.permute.xlu0 %894
      %896 = vrot.lane.b32.xlu0 %v881, 40
      %v897 = vpop.permute.xlu0 %896
      %v906 = vunpack.c.l.b16 %v530
      %v907 = vunpack.c.l.b16 %v531
      %v908 = vunpack.c.l.b16 %v532
      %v909 = vunpack.c.l.b16 %v533
      %v910 = vunpack.c.l.b16 %v534
      %v911 = vunpack.c.l.b16 %v535
      %v912 = vunpack.c.l.b16 %v536
      %v913 = vunpack.c.l.b16 %v537
      %v914 = vpack.c.b16 %v906, %v906
      %v915 = vpack.c.b16 %v907, %v907
      %v916 = vpack.c.b16 %v908, %v908
      %v917 = vpack.c.b16 %v909, %v909
      %v918 = vpack.c.b16 %v910, %v910
      %v919 = vpack.c.b16 %v911, %v911
      %v920 = vpack.c.b16 %v912, %v912
      %v921 = vpack.c.b16 %v913, %v913
      %922 = vrot.lane.b32.xlu0 %v914, 48
      %v923 = vpop.permute.xlu0 %922
      %924 = vrot.lane.b32.xlu0 %v915, 48
      %v925 = vpop.permute.xlu0 %924
      %926 = vrot.lane.b32.xlu0 %v916, 48
      %v927 = vpop.permute.xlu0 %926
      %928 = vrot.lane.b32.xlu0 %v917, 48
      %v929 = vpop.permute.xlu0 %928
      %930 = vrot.lane.b32.xlu0 %v918, 48
      %v931 = vpop.permute.xlu0 %930
      %932 = vrot.lane.b32.xlu0 %v919, 48
      %v933 = vpop.permute.xlu0 %932
      %934 = vrot.lane.b32.xlu0 %v920, 48
      %v935 = vpop.permute.xlu0 %934
      %936 = vrot.lane.b32.xlu0 %v921, 48
      %v937 = vpop.permute.xlu0 %936
      %v946 = vunpack.c.l.b16 %v538
      %v947 = vunpack.c.l.b16 %v539
      %v948 = vunpack.c.l.b16 %v540
      %v949 = vunpack.c.l.b16 %v541
      %v950 = vunpack.c.l.b16 %v542
      %v951 = vunpack.c.l.b16 %v543
      %v952 = vunpack.c.l.b16 %v544
      %v953 = vunpack.c.l.b16 %v545
      %v954 = vpack.c.b16 %v946, %v906
      %v955 = vpack.c.b16 %v947, %v907
      %v956 = vpack.c.b16 %v948, %v908
      %v957 = vpack.c.b16 %v949, %v909
      %v958 = vpack.c.b16 %v950, %v910
      %v959 = vpack.c.b16 %v951, %v911
      %v960 = vpack.c.b16 %v952, %v912
      %v961 = vpack.c.b16 %v953, %v913
      %v963 = vshrl.u32 %v954, 16
      %v965 = vshll.u32 %v954, 16
      %v967 = vrot.slane %v965, 1
      %v968 = vor.u32 %v963, %v967
      %v970 = vshrl.u32 %v955, 16
      %v972 = vshll.u32 %v955, 16
      %v974 = vrot.slane %v972, 1
      %v975 = vor.u32 %v970, %v974
      %v977 = vshrl.u32 %v956, 16
      %v979 = vshll.u32 %v956, 16
      %v981 = vrot.slane %v979, 1
      %v982 = vor.u32 %v977, %v981
      %v984 = vshrl.u32 %v957, 16
      %v986 = vshll.u32 %v957, 16
      %v988 = vrot.slane %v986, 1
      %v989 = vor.u32 %v984, %v988
      %v991 = vshrl.u32 %v958, 16
      %v993 = vshll.u32 %v958, 16
      %v995 = vrot.slane %v993, 1
      %v996 = vor.u32 %v991, %v995
      %v998 = vshrl.u32 %v959, 16
      %v1000 = vshll.u32 %v959, 16
      %v1002 = vrot.slane %v1000, 1
      %v1003 = vor.u32 %v998, %v1002
      %v1005 = vshrl.u32 %v960, 16
      %v1007 = vshll.u32 %v960, 16
      %v1009 = vrot.slane %v1007, 1
      %v1010 = vor.u32 %v1005, %v1009
      %v1012 = vshrl.u32 %v961, 16
      %v1014 = vshll.u32 %v961, 16
      %v1016 = vrot.slane %v1014, 1
      %v1017 = vor.u32 %v1012, %v1016
      %1018 = vrot.lane.b32.xlu0 %v968, 56
      %v1019 = vpop.permute.xlu0 %1018
      %1020 = vrot.lane.b32.xlu0 %v975, 56
      %v1021 = vpop.permute.xlu0 %1020
      %1022 = vrot.lane.b32.xlu0 %v982, 56
      %v1023 = vpop.permute.xlu0 %1022
      %1024 = vrot.lane.b32.xlu0 %v989, 56
      %v1025 = vpop.permute.xlu0 %1024
      %1026 = vrot.lane.b32.xlu0 %v996, 56
      %v1027 = vpop.permute.xlu0 %1026
      %1028 = vrot.lane.b32.xlu0 %v1003, 56
      %v1029 = vpop.permute.xlu0 %1028
      %1030 = vrot.lane.b32.xlu0 %v1010, 56
      %v1031 = vpop.permute.xlu0 %1030
      %1032 = vrot.lane.b32.xlu0 %v1017, 56
      %v1033 = vpop.permute.xlu0 %1032
      %v1042 = vunpack.c.l.b16 %v546
      %v1043 = vunpack.c.l.b16 %v547
      %v1044 = vunpack.c.l.b16 %v548
      %v1045 = vunpack.c.l.b16 %v549
      %v1046 = vunpack.c.l.b16 %v550
      %v1047 = vunpack.c.l.b16 %v551
      %v1048 = vunpack.c.l.b16 %v552
      %v1049 = vunpack.c.l.b16 %v553
      %v1050 = vpack.c.b16 %v946, %v1042
      %v1051 = vpack.c.b16 %v947, %v1043
      %v1052 = vpack.c.b16 %v948, %v1044
      %v1053 = vpack.c.b16 %v949, %v1045
      %v1054 = vpack.c.b16 %v950, %v1046
      %v1055 = vpack.c.b16 %v951, %v1047
      %v1056 = vpack.c.b16 %v952, %v1048
      %v1057 = vpack.c.b16 %v953, %v1049
      %v1058 = vrot.slane %v1050, 1
      %v1059 = vrot.slane %v1051, 1
      %v1060 = vrot.slane %v1052, 1
      %v1061 = vrot.slane %v1053, 1
      %v1062 = vrot.slane %v1054, 1
      %v1063 = vrot.slane %v1055, 1
      %v1064 = vrot.slane %v1056, 1
      %v1065 = vrot.slane %v1057, 1
      %1066 = vrot.lane.b32.xlu0 %v1058, 64
      %v1067 = vpop.permute.xlu0 %1066
      %1068 = vrot.lane.b32.xlu0 %v1059, 64
      %v1069 = vpop.permute.xlu0 %1068
      %1070 = vrot.lane.b32.xlu0 %v1060, 64
      %v1071 = vpop.permute.xlu0 %1070
      %1072 = vrot.lane.b32.xlu0 %v1061, 64
      %v1073 = vpop.permute.xlu0 %1072
      %1074 = vrot.lane.b32.xlu0 %v1062, 64
      %v1075 = vpop.permute.xlu0 %1074
      %1076 = vrot.lane.b32.xlu0 %v1063, 64
      %v1077 = vpop.permute.xlu0 %1076
      %1078 = vrot.lane.b32.xlu0 %v1064, 64
      %v1079 = vpop.permute.xlu0 %1078
      %1080 = vrot.lane.b32.xlu0 %v1065, 64
      %v1081 = vpop.permute.xlu0 %1080
      %vm1082 = vcmask 64512
      %v1085 = vsel %vm1082, %v481, %v651
      %v1088 = vsel %vm1082, %v482, %v653
      %v1091 = vsel %vm1082, %v483, %v655
      %v1094 = vsel %vm1082, %v484, %v657
      %v1097 = vsel %vm1082, %v485, %v659
      %v1100 = vsel %vm1082, %v486, %v661
      %v1103 = vsel %vm1082, %v487, %v663
      %v1106 = vsel %vm1082, %v488, %v665
      %vm1107 = vcmask 130048
      %v1109 = vsel %vm1107, %v1085, %v699
      %v1111 = vsel %vm1107, %v1088, %v701
      %v1113 = vsel %vm1107, %v1091, %v703
      %v1115 = vsel %vm1107, %v1094, %v705
      %v1117 = vsel %vm1107, %v1097, %v707
      %v1119 = vsel %vm1107, %v1100, %v709
      %v1121 = vsel %vm1107, %v1103, %v711
      %v1123 = vsel %vm1107, %v1106, %v713
      %vm1124 = vcmask 195584
      %v1126 = vsel %vm1124, %v1109, %v739
      %v1128 = vsel %vm1124, %v1111, %v741
      %v1130 = vsel %vm1124, %v1113, %v743
      %v1132 = vsel %vm1124, %v1115, %v745
      %v1134 = vsel %vm1124, %v1117, %v747
      %v1136 = vsel %vm1124, %v1119, %v749
      %v1138 = vsel %vm1124, %v1121, %v751
      %v1140 = vsel %vm1124, %v1123, %v753
      %vm1141 = vcmask 261120
      %v1143 = vsel %vm1141, %v1126, %v835
      %v1145 = vsel %vm1141, %v1128, %v837
      %v1147 = vsel %vm1141, %v1130, %v839
      %v1149 = vsel %vm1141, %v1132, %v841
      %v1151 = vsel %vm1141, %v1134, %v843
      %v1153 = vsel %vm1141, %v1136, %v845
      %v1155 = vsel %vm1141, %v1138, %v847
      %v1157 = vsel %vm1141, %v1140, %v849
      %vm1158 = vcmask 326656
      %v1160 = vsel %vm1158, %v1143, %v883
      %v1162 = vsel %vm1158, %v1145, %v885
      %v1164 = vsel %vm1158, %v1147, %v887
      %v1166 = vsel %vm1158, %v1149, %v889
      %v1168 = vsel %vm1158, %v1151, %v891
      %v1170 = vsel %vm1158, %v1153, %v893
      %v1172 = vsel %vm1158, %v1155, %v895
      %v1174 = vsel %vm1158, %v1157, %v897
      %vm1175 = vcmask 392192
      %v1177 = vsel %vm1175, %v1160, %v923
      %v1179 = vsel %vm1175, %v1162, %v925
      %v1181 = vsel %vm1175, %v1164, %v927
      %v1183 = vsel %vm1175, %v1166, %v929
      %v1185 = vsel %vm1175, %v1168, %v931
      %v1187 = vsel %vm1175, %v1170, %v933
      %v1189 = vsel %vm1175, %v1172, %v935
      %v1191 = vsel %vm1175, %v1174, %v937
      %vm1192 = vcmask 457728
      %v1194 = vsel %vm1192, %v1177, %v1019
      %v1196 = vsel %vm1192, %v1179, %v1021
      %v1198 = vsel %vm1192, %v1181, %v1023
      %v1200 = vsel %vm1192, %v1183, %v1025
      %v1202 = vsel %vm1192, %v1185, %v1027
      %v1204 = vsel %vm1192, %v1187, %v1029
      %v1206 = vsel %vm1192, %v1189, %v1031
      %v1208 = vsel %vm1192, %v1191, %v1033
      %vm1209 = vcmask 523264
      %v1211 = vsel %vm1209, %v1194, %v1067
      %v1213 = vsel %vm1209, %v1196, %v1069
      %v1215 = vsel %vm1209, %v1198, %v1071
      %v1217 = vsel %vm1209, %v1200, %v1073
      %v1219 = vsel %vm1209, %v1202, %v1075
      %v1221 = vsel %vm1209, %v1204, %v1077
      %v1223 = vsel %vm1209, %v1206, %v1079
      %v1225 = vsel %vm1209, %v1208, %v1081
      %v1226 = vld [vmem:[%s3] sm:$0xf]
      %v1227 = vld [vmem:[%s3 + $0x4] sm:$0xf]
      %v1228 = vld [vmem:[%s3 + $0x8] sm:$0xf]
      %v1229 = vld [vmem:[%s3 + $0xc] sm:$0xf]
      %v1230 = vld [vmem:[%s3 + $0x10] sm:$0xf]
      %v1231 = vld [vmem:[%s3 + $0x14] sm:$0xf]
      %v1232 = vld [vmem:[%s3 + $0x18] sm:$0xf]
      %v1233 = vld [vmem:[%s3 + $0x1c] sm:$0xf]
      %v1234 = vld [vmem:[%s3 + $0x20] sm:$0xf]
      %v1235 = vld [vmem:[%s239] sm:$0xff]
      %v1236 = vld [vmem:[%s239 + $0x8] sm:$0xff]
      %v1237 = vld [vmem:[%s239 + $0x10] sm:$0xff]
      %v1238 = vld [vmem:[%s239 + $0x18] sm:$0xff]
      %v1239 = vld [vmem:[%s239 + $0x20] sm:$0xff]
      %v1240 = vld [vmem:[%s239 + $0x28] sm:$0xff]
      %v1241 = vld [vmem:[%s239 + $0x30] sm:$0xff]
      %v1242 = vld [vmem:[%s239 + $0x38] sm:$0xff]
      %v1251 = vunpack.c.l.b16 %v1211
      %v1252 = vunpack.c.l.b16 %v1213
      %v1253 = vunpack.c.l.b16 %v1215
      %v1254 = vunpack.c.l.b16 %v1217
      %v1255 = vunpack.c.l.b16 %v1219
      %v1256 = vunpack.c.l.b16 %v1221
      %v1257 = vunpack.c.l.b16 %v1223
      %v1258 = vunpack.c.l.b16 %v1225
      %v1259 = vpack.c.b16 %v1252, %v1251
      %v1260 = vpack.c.b16 %v1254, %v1253
      %v1261 = vpack.c.b16 %v1256, %v1255
      %v1262 = vpack.c.b16 %v1258, %v1257
      %v1272 = vunpack.c.l.b16 %v1226
      %v1273 = vunpack.c.l.b16 %v1227
      %v1274 = vunpack.c.l.b16 %v1228
      %v1275 = vunpack.c.l.b16 %v1229
      %v1276 = vunpack.c.l.b16 %v1230
      %v1277 = vunpack.c.l.b16 %v1231
      %v1278 = vunpack.c.l.b16 %v1232
      %v1279 = vunpack.c.l.b16 %v1233
      %v1280 = vunpack.c.l.b16 %v1234
      %v1281 = vpack.c.b16 %v1273, %v1272
      %v1282 = vpack.c.b16 %v1275, %v1274
      %v1283 = vpack.c.b16 %v1277, %v1276
      %v1284 = vpack.c.b16 %v1279, %v1278
      %v1285 = vpack.c.b16 %v1280, %v1280
      %vm1290 = vcmask 588800
      %v1292 = vsel %vm1290, %v1259, 0
      %v1295 = vsel %vm1290, %v1260, 0
      %v1298 = vsel %vm1290, %v1261, 0
      %v1301 = vsel %vm1290, %v1262, 0
      %vm1303 = vcmask 1043456
      %v1305 = vsel %vm1303, %v1285, 0
      %1307 = vmatprep.subr.bf16.mxu0 0
      %1308 = vmatpush1.bf16.msra.mxu0 %v1281
      %1309 = vmatprep.subr.bf16.mxu0 0
      %1310 = vmatpush1.bf16.msra.mxu0 %v1282
      %1311 = vmatprep.subr.bf16.mxu0 0
      %1312 = vmatpush1.bf16.msra.mxu0 %v1283
      %1313 = vmatprep.subr.bf16.mxu0 0
      %1314 = vmatpush1.bf16.msra.mxu0 %v1284
      %1315 = vmatprep.subr.bf16.mxu0 0
      %1316 = vmatpush1.bf16.msra.mxu0 %v1305
      %1317 = vmatprep.subr.bf16.mxu0 0
      %1318 = vmatpush1.bf16.msra.mxu0 0
      %1319 = vmatprep.subr.bf16.mxu0 0
      %1320 = vmatpush1.bf16.msra.mxu0 0
      %1321 = vmatprep.subr.bf16.mxu0 0
      %1322 = vmatpush1.bf16.msra.mxu0 0
      %1323 = vmatprep.subr.bf16.mxu0 0
      %1324 = vmatpush1.bf16.msra.mxu0 0
      %1325 = vmatprep.subr.bf16.mxu0 0
      %1326 = vmatpush1.bf16.msra.mxu0 0
      %1327 = vmatprep.subr.bf16.mxu0 0
      %1328 = vmatpush1.bf16.msra.mxu0 0
      %1329 = vmatprep.subr.bf16.mxu0 0
      %1330 = vmatpush1.bf16.msra.mxu0 0
      %1331 = vmatprep.subr.bf16.mxu0 0
      %1332 = vmatpush1.bf16.msra.mxu0 0
      %1333 = vmatprep.subr.bf16.mxu0 0
      %1334 = vmatpush1.bf16.msra.mxu0 0
      %1335 = vmatprep.subr.bf16.mxu0 0
      %1336 = vmatpush1.bf16.msra.mxu0 0
      %1337 = vmatprep.subr.bf16.mxu0 0
      %1338 = vmatpush1.bf16.msra.mxu0 0
      %1339 = vmatprep.mubr.bf16.mxu0 0
      %1340 = vmatmul.mubr.bf16.gmra.mrb[0].mxu0 %v1292
      %v1341 = vpop.f32.mrb[0].mxu0
      %v1342 = vadd.f32 %v1235, %v1341
      %v1343 = vpop.f32.mrb[0].mxu0
      %v1344 = vpop.f32.mrb[0].mxu0
      %v1345 = vadd.f32 %v1236, %v1344
      %v1346 = vpop.f32.mrb[0].mxu0
      %1347 = vmatprep.mubr.bf16.mxu0 0
      %1348 = vmatmul.mubr.bf16.gmra.mrb[0].mxu0 %v1295
      %v1349 = vpop.f32.mrb[0].mxu0
      %v1350 = vadd.f32 %v1237, %v1349
      %v1351 = vpop.f32.mrb[0].mxu0
      %v1352 = vpop.f32.mrb[0].mxu0
      %v1353 = vadd.f32 %v1238, %v1352
      %v1354 = vpop.f32.mrb[0].mxu0
      %1355 = vmatprep.mubr.bf16.mxu0 0
      %1356 = vmatmul.mubr.bf16.gmra.mrb[0].mxu0 %v1298
      %v1357 = vpop.f32.mrb[0].mxu0
      %v1358 = vadd.f32 %v1239, %v1357
      %v1359 = vpop.f32.mrb[0].mxu0
      %v1360 = vpop.f32.mrb[0].mxu0
      %v1361 = vadd.f32 %v1240, %v1360
      %v1362 = vpop.f32.mrb[0].mxu0
      %1363 = vmatprep.mubr.bf16.mxu0 0
      %1364 = vmatmul.mubr.bf16.gmra.mrb[0].mxu0 %v1301
      %v1365 = vpop.f32.mrb[0].mxu0
      %v1366 = vadd.f32 %v1241, %v1365
      %v1367 = vpop.f32.mrb[0].mxu0
      %v1368 = vpop.f32.mrb[0].mxu0
      %v1369 = vadd.f32 %v1242, %v1368
      %v1370 = vpop.f32.mrb[0].mxu0
      %1371 = vdwg.mxu0
      %1372 = vst.msk [vmem:[%s244] sm:$0xff] %vm1082, %v1342
      %1373 = vst.msk [vmem:[%s244 + $0x8] sm:$0xff] %vm1082, %v1345
      %1374 = vst.msk [vmem:[%s244 + $0x10] sm:$0xff] %vm1082, %v1350
      %1375 = vst.msk [vmem:[%s244 + $0x18] sm:$0xff] %vm1082, %v1353
      %1376 = vst.msk [vmem:[%s244 + $0x20] sm:$0xff] %vm1082, %v1358
      %1377 = vst.msk [vmem:[%s244 + $0x28] sm:$0xff] %vm1082, %v1361
      %1378 = vst.msk [vmem:[%s244 + $0x30] sm:$0xff] %vm1082, %v1366
      %1379 = vst.msk [vmem:[%s244 + $0x38] sm:$0xff] %vm1082, %v1369
      %p1380 = scmp.lt.s32.totalorder %s16, 1
      %s1381 = scalar_select %p1380, %s16, 1
      %s1382 = smul.addr %s1381, 8
      %s1383 = smul.addr %s1382, 8
      %s1384 = scalar_lea.vmem %s5, %s1383
      // Predicated region
      $region41: #{_lambda_.5} parent=39 // pred_check
        %p1385 = pneg %p149
      $region42: #{_lambda_.5} parent=39 // pred_check_branch
        %1387 = sbr.rel (%p1385) target = $region44
      $region43: #{_lambda_.5} parent=39 // pred_region
        _
      $region44: #{_lambda_.5} parent=39 // pred_fallthru
        _
    $region40: #{_lambda_.5} parent=5 // pred_fallthru
      _
    %p1388 = scmp.le.s32.totalorder 2, %s11
    // Predicated region
    $region45: #{_lambda_.5} parent=5 // pred_check
      %p1389 = pneg %p1388
    $region46: #{_lambda_.5} parent=5 // pred_check_branch
      %1391 = sbr.rel (%p1389) target = $region48
    $region47: #{_lambda_.5} parent=5 // pred_region
      %s1392 = ssub.s32 %s11, 2
      // Predicated region
      $region49: #{_lambda_.5} parent=47 // pred_check
        %p1393 = pneg %p155
      $region50: #{_lambda_.5} parent=47 // pred_check_branch
        %1395 = sbr.rel (%p1393) target = $region52
      $region51: #{_lambda_.5} parent=47 // pred_region
        %p1396 = scmp.lt.s32.totalorder %s17, 1
        %s1397 = scalar_select %p1396, %s17, 1
        %s1398 = smul.addr %s1397, 8
        %s1399 = smul.addr %s1398, 8
        %s1400 = scalar_lea.vmem %s5, %s1399
      $region52: #{_lambda_.5} parent=47 // pred_fallthru
        _
    $region48: #{_lambda_.5} parent=5 // pred_fallthru
      _
  $region6: #{_lambda_.5} parent=0 // loop_footer
    %s15 = sadd.s32 1, %s11
  $region7: #{_lambda_.5} parent=0 // loop_footer_branch
    %10 = sbr.rel target = $region3
  $region8: #{_lambda_.5} parent=0 // loop_exit
    _

</llo_original>
